<compile_context>
chip_gen: v7x
topology: tpu7x:2x2x1
jax: 0.10.0
libtpu: 0.0.40
codegen_flags: <defaults>
</compile_context>

<pallas_src>
import functools
import math

import jax
import jax.numpy as jnp
from jax.experimental import pallas as pl
from jax.experimental.pallas import tpu as pltpu


def _loop_decoder_kernel(emb_ref, idx_ref, mask_ref,
                         wqg_ref, wfl_ref, wk_ref, wv_ref, wc_ref, bc_ref,
                         probs_ref,
                         attn_scr,
                         *, n_heads, tanh_clipping, n_nodes):
    Bt, Np, H = emb_ref.shape
    Gp = mask_ref.shape[1]
    d = H // n_heads

    emb = emb_ref[...]                          # (Bt, Np, H)  padded rows are zero
    mask = mask_ref[...]                        # (Bt, Gp, Np) padded cols are -inf
    emb2 = emb.reshape(Bt * Np, H)              # Np % 8 == 0 -> cheap reshape

    # graph embedding = mean over the *real* nodes (padded rows are zero)
    graph_emb = jnp.sum(emb, axis=1) * (1.0 / n_nodes)               # (Bt, H)
    q_graph = jnp.dot(graph_emb, wqg_ref[...],
                      preferred_element_type=jnp.float32)            # (Bt, H)

    # in-kernel gather of last-node embeddings via exact one-hot matmul
    node_iota = jax.lax.broadcasted_iota(jnp.int32, (Bt, Gp, Np), 2)
    onehot = (node_iota == idx_ref[...]).astype(jnp.float32)         # (Bt, Gp, Np)
    last_emb = jnp.einsum('bgn,bnh->bgh', onehot, emb,
                          preferred_element_type=jnp.float32)        # (Bt, Gp, H)

    # fused q_first + q_last projection (weights pre-summed in the wrapper)
    q_fl = jnp.dot(last_emb.reshape(Bt * Gp, H), wfl_ref[...],
                   preferred_element_type=jnp.float32).reshape(Bt, Gp, H)
    glimpse_q = q_fl + q_graph[:, None, :]                           # (Bt, Gp, H)

    k = jnp.dot(emb2, wk_ref[...],
                preferred_element_type=jnp.float32).reshape(Bt, Np, H)
    v = jnp.dot(emb2, wv_ref[...],
                preferred_element_type=jnp.float32).reshape(Bt, Np, H)

    # multi-head attention: static head loop, batched (over Bt) einsums, no
    # transposes; head outputs land in a preallocated VMEM scratch buffer.
    inv_sqrt_d = 1.0 / math.sqrt(d)
    for h in range(n_heads):
        lo, hi = h * d, (h + 1) * d
        s = jnp.einsum('bgd,bnd->bgn', glimpse_q[:, :, lo:hi], k[:, :, lo:hi],
                       preferred_element_type=jnp.float32) * inv_sqrt_d
        s = s + mask                                                 # (Bt, Gp, Np)
        m = jnp.max(s, axis=-1, keepdims=True)
        e = jnp.exp(s - m)
        a = e / jnp.sum(e, axis=-1, keepdims=True)                   # exact divide
        attn_scr[:, :, lo:hi] = jnp.einsum('bgn,bnd->bgd', a, v[:, :, lo:hi],
                                           preferred_element_type=jnp.float32)

    # multi_head_combine (with bias)
    final_q = (jnp.dot(attn_scr[...].reshape(Bt * Gp, H), wc_ref[...],
                       preferred_element_type=jnp.float32)
               + bc_ref[...]).reshape(Bt, Gp, H)

    # score against logit_k = embeddings (contraction over H, no transpose)
    score = jnp.einsum('bgh,bnh->bgn', final_q, emb,
                       preferred_element_type=jnp.float32) * (1.0 / math.sqrt(H))
    score = tanh_clipping * jnp.tanh(score) + mask

    m2 = jnp.max(score, axis=-1, keepdims=True)
    e2 = jnp.exp(score - m2)
    probs_ref[...] = e2 / jnp.sum(e2, axis=-1, keepdims=True)        # (Bt, Gp, Np)


def _pick_batch_tile(B, Np, Gp, H, budget_bytes=10 * 1024 * 1024):
    """Largest divisor of B that (a) keeps >= 2 grid steps when B >= 2 so both
    v7x TensorCores get work, and (b) keeps the per-step VMEM footprint small
    enough for every generation (v7x has only 64 MiB per core)."""
    w_bytes = 2 * (5 * H * H + H) * 4
    best = 1
    for bt in range(1, B + 1):
        if B % bt:
            continue
        if B >= 2 and B // bt < 2:
            continue
        blocks = 2 * bt * (Np * H + 2 * Gp * Np + Gp) * 4   # dbl-buffered in/out
        scratch = bt * Gp * H * 4
        live = 4 * bt * (Gp * Np + Np * H) * 4              # rough intermediates
        if w_bytes + blocks + scratch + live <= budget_bytes:
            best = bt
    return best


def loop_decoder_forward(embeddings, last_node, group_ninf_mask, params,
                         *, n_heads=8, tanh_clipping=10.0, batch_tile=None):
    """Semantics of LoopDecoder.reset(...) + first LoopDecoder.forward(last_node)
    with n_decoding_neighbors=None (q_first and q_last both come from last_node)."""
    # TODO(synk): n_decoding_neighbors branch (cdist + topk neighbor mask) not
    #             implemented; module default (None) is reproduced here.
    B, N, H = embeddings.shape
    G = group_ninf_mask.shape[1]
    assert H % n_heads == 0

    # pad node axis to a lane-dense multiple of 128, group axis to sublane (8)
    Np = ((N + 127) // 128) * 128
    Gp = ((G + 7) // 8) * 8

    emb_p = jnp.pad(embeddings.astype(jnp.float32),
                    ((0, 0), (0, Np - N), (0, 0)))
    mask_p = jnp.pad(group_ninf_mask.astype(jnp.float32),
                     ((0, 0), (0, 0), (0, Np - N)), constant_values=-jnp.inf)
    mask_p = jnp.pad(mask_p, ((0, 0), (0, Gp - G), (0, 0)))   # padded rows: 0.0
    idx_p = jnp.pad(last_node.astype(jnp.int32), ((0, 0), (0, Gp - G)))[:, :, None]

    # pre-transpose Linear weights to (in, out); fuse Wq_first + Wq_last
    wqg_t = params["Wq_graph"].T
    wfl_t = (params["Wq_first"] + params["Wq_last"]).T
    wk_t = params["Wk"].T
    wv_t = params["Wv"].T
    wc_t = params["mhc_w"].T
    bc = params["mhc_b"].reshape(1, H)

    Bt = batch_tile if batch_tile is not None else _pick_batch_tile(B, Np, Gp, H)
    assert B % Bt == 0

    kernel = functools.partial(_loop_decoder_kernel, n_heads=n_heads,
                               tanh_clipping=tanh_clipping, n_nodes=N)
    w_spec = pl.BlockSpec((H, H), lambda b: (0, 0))

    probs_p = pl.pallas_call(
        kernel,
        out_shape=jax.ShapeDtypeStruct((B, Gp, Np), jnp.float32),
        grid=(B // Bt,),
        in_specs=[
            pl.BlockSpec((Bt, Np, H), lambda b: (b, 0, 0)),   # embeddings (padded)
            pl.BlockSpec((Bt, Gp, 1), lambda b: (b, 0, 0)),   # last-node indices
            pl.BlockSpec((Bt, Gp, Np), lambda b: (b, 0, 0)),  # group_ninf_mask
            w_spec, w_spec, w_spec, w_spec, w_spec,           # Wq_graph, Wfl, Wk, Wv, Wc
            pl.BlockSpec((1, H), lambda b: (0, 0)),           # combine bias
        ],
        out_specs=pl.BlockSpec((Bt, Gp, Np), lambda b: (b, 0, 0)),
        scratch_shapes=[pltpu.VMEM((Bt, Gp, H), jnp.float32)],
        compiler_params=pltpu.CompilerParams(
            dimension_semantics=("parallel",),
            vmem_limit_bytes=32 * 1024 * 1024),
    )(emb_p, idx_p, mask_p, wqg_t, wfl_t, wk_t, wv_t, wc_t, bc)

    return probs_p[:, :G, :N]


def loop_decoder_reference(embeddings, last_node, group_ninf_mask, params,
                           *, n_heads=8, tanh_clipping=10.0):
    """Pure-JAX reference mirroring the PyTorch module."""
    B, N, H = embeddings.shape
    G = group_ninf_mask.shape[1]
    d = H // n_heads

    def lin(x, w):  # PyTorch Linear (no bias): x @ W.T
        return jnp.einsum("...i,oi->...o", x, w)

    def make_heads(x):  # (B, n, H) -> (B, nH, n, d)
        return x.reshape(B, x.shape[1], n_heads, d).transpose(0, 2, 1, 3)

    idx = jnp.broadcast_to(last_node[:, :, None].astype(jnp.int32), (B, G, H))
    last_emb = jnp.take_along_axis(embeddings, idx, axis=1)

    graph_emb = embeddings.mean(axis=1, keepdims=True)
    q_graph = make_heads(lin(graph_emb, params["Wq_graph"]))
    q_first = make_heads(lin(last_emb, params["Wq_first"]))
    q_last = make_heads(lin(last_emb, params["Wq_last"]))
    glimpse_q = q_graph + q_first + q_last
    kh = make_heads(lin(embeddings, params["Wk"]))
    vh = make_heads(lin(embeddings, params["Wv"]))

    s = jnp.einsum("bhgd,bhnd->bhgn", glimpse_q, kh) / math.sqrt(d)
    s = s + group_ninf_mask[:, None, :, :]
    a = jax.nn.softmax(s, axis=-1)
    out = jnp.einsum("bhgn,bhnd->bhgd", a, vh).transpose(0, 2, 1, 3).reshape(B, G, H)

    final_q = jnp.einsum("bgi,oi->bgo", out, params["mhc_w"]) + params["mhc_b"]
    score = jnp.einsum("bgh,bnh->bgn", final_q, embeddings) / math.sqrt(H)
    score_masked = tanh_clipping * jnp.tanh(score) + group_ninf_mask
    return jax.nn.softmax(score_masked, axis=-1)


if __name__ == "__main__":
    B, N, H, G, n_heads = 2, 16, 32, 4, 8

    key = jax.random.PRNGKey(0)
    keys = jax.random.split(key, 10)

    def linear_w(k, out_f, in_f):
        bound = 1.0 / math.sqrt(in_f)
        return jax.random.uniform(k, (out_f, in_f), jnp.float32, -bound, bound)

    params = {
        "Wq_graph": linear_w(keys[0], H, H),
        "Wq_first": linear_w(keys[1], H, H),
        "Wq_last": linear_w(keys[2], H, H),
        "Wk": linear_w(keys[3], H, H),
        "Wv": linear_w(keys[4], H, H),
        "mhc_w": linear_w(keys[5], H, H),
        "mhc_b": jax.random.uniform(keys[6], (H,), jnp.float32,
                                    -1.0 / math.sqrt(H), 1.0 / math.sqrt(H)),
    }

    embeddings = jax.random.normal(keys[7], (B, N, H), jnp.float32)
    last_node = jax.random.randint(keys[8], (B, G), 0, N, jnp.int32)

    # mask out the current node for each group member (typical routing mask)
    mask = jnp.zeros((B, G, N), jnp.float32)
    mask = mask.at[jnp.arange(B)[:, None], jnp.arange(G)[None, :], last_node].set(-jnp.inf)

    probs = loop_decoder_forward(embeddings, last_node, mask, params,
                                 n_heads=n_heads, tanh_clipping=10.0)
    probs = jax.block_until_ready(probs)

    ref = loop_decoder_reference(embeddings, last_node, mask, params,
                                 n_heads=n_heads, tanh_clipping=10.0)

    assert not bool(jnp.isnan(probs).any()), "Probs should not contain any nans!"
    assert probs.shape == (B, G, N)
    assert bool(jnp.allclose(probs, ref, rtol=1e-4, atol=1e-4)), "mismatch vs reference"

    print("KERNEL_OK")
</pallas_src>

<mosaic_0001>
module attributes {stable_mosaic.version = 11 : i64} {
  func.func @_loop_decoder_kernel(%arg0: i32, %arg1: memref<1x128x32xf32, #tpu.memory_space<vmem>>, %arg2: memref<1x8x1xi32, #tpu.memory_space<vmem>>, %arg3: memref<1x8x128xf32, #tpu.memory_space<vmem>>, %arg4: memref<32x32xf32, #tpu.memory_space<vmem>>, %arg5: memref<32x32xf32, #tpu.memory_space<vmem>>, %arg6: memref<32x32xf32, #tpu.memory_space<vmem>>, %arg7: memref<32x32xf32, #tpu.memory_space<vmem>>, %arg8: memref<32x32xf32, #tpu.memory_space<vmem>>, %arg9: memref<1x32xf32, #tpu.memory_space<vmem>>, %arg10: memref<1x8x128xf32, #tpu.memory_space<vmem>>, %arg11: memref<1x8x32xf32, #tpu.memory_space<vmem>>) attributes {dimension_semantics = [#tpu.dimension_semantics<parallel>], iteration_bounds = array<i64: 2>, scalar_prefetch = 0 : i64, scratch_operands = 1 : i64, tpu.core_type = #tpu.core_type<tc>, window_params = [{transform_indices = @transform_0, window_bounds = array<i64: 1, 128, 32>}, {transform_indices = @transform_1, window_bounds = array<i64: 1, 8, 1>}, {transform_indices = @transform_2, window_bounds = array<i64: 1, 8, 128>}, {pipeline_mode = #tpu.pipeline_mode<synchronous>, transform_indices = @transform_3, window_bounds = array<i64: 32, 32>}, {pipeline_mode = #tpu.pipeline_mode<synchronous>, transform_indices = @transform_4, window_bounds = array<i64: 32, 32>}, {pipeline_mode = #tpu.pipeline_mode<synchronous>, transform_indices = @transform_5, window_bounds = array<i64: 32, 32>}, {pipeline_mode = #tpu.pipeline_mode<synchronous>, transform_indices = @transform_6, window_bounds = array<i64: 32, 32>}, {pipeline_mode = #tpu.pipeline_mode<synchronous>, transform_indices = @transform_7, window_bounds = array<i64: 32, 32>}, {pipeline_mode = #tpu.pipeline_mode<synchronous>, transform_indices = @transform_8, window_bounds = array<i64: 1, 32>}, {transform_indices = @transform_9, window_bounds = array<i64: 1, 8, 128>}]} {
    %c0 = arith.constant 0 : index
    %c0_0 = arith.constant 0 : index
    %c0_1 = arith.constant 0 : index
    %0 = vector.load %arg1[%c0, %c0_0, %c0_1] : memref<1x128x32xf32, #tpu.memory_space<vmem>>, vector<1x128x32xf32>
    %c0_2 = arith.constant 0 : index
    %c0_3 = arith.constant 0 : index
    %c0_4 = arith.constant 0 : index
    %1 = vector.load %arg3[%c0_2, %c0_3, %c0_4] : memref<1x8x128xf32, #tpu.memory_space<vmem>>, vector<1x8x128xf32>
    %2 = vector.shape_cast %0 : vector<1x128x32xf32> to vector<128x32xf32>
    %cst = arith.constant dense<0.000000e+00> : vector<1x32xf32>
    %3 = vector.multi_reduction <add>, %0, %cst [1] : vector<1x128x32xf32> to vector<1x32xf32>
    %cst_5 = arith.constant 6.250000e-02 : f32
    %4 = vector.broadcast %cst_5 : f32 to vector<1x32xf32>
    %5 = arith.mulf %3, %4 : vector<1x32xf32>
    %c0_6 = arith.constant 0 : index
    %c0_7 = arith.constant 0 : index
    %6 = vector.load %arg4[%c0_6, %c0_7] : memref<32x32xf32, #tpu.memory_space<vmem>>, vector<32x32xf32>
    %cst_8 = arith.constant dense<0.000000e+00> : vector<1x32xf32>
    %7 = tpu.matmul %5, %6, %cst_8 {dimension_numbers = #tpu.dot_dimension_numbers<[1], [0], [0], [1], [0, 0, 1, 1], [], []>} : vector<1x32xf32>, vector<32x32xf32>, vector<1x32xf32> -> vector<1x32xf32>
    %8 = tpu.iota {dimensions = array<i32: 2>} : vector<1x8x128xi32>
    %c0_9 = arith.constant 0 : index
    %c0_10 = arith.constant 0 : index
    %c0_11 = arith.constant 0 : index
    %9 = vector.load %arg2[%c0_9, %c0_10, %c0_11] : memref<1x8x1xi32, #tpu.memory_space<vmem>>, vector<1x8x1xi32>
    %10 = vector.broadcast %9 : vector<1x8x1xi32> to vector<1x8x128xi32>
    %11 = arith.cmpi eq, %8, %10 : vector<1x8x128xi32>
    %12 = arith.extui %11 : vector<1x8x128xi1> to vector<1x8x128xi32>
    %13 = arith.sitofp %12 : vector<1x8x128xi32> to vector<1x8x128xf32>
    "tpu.trace_start"() <{level = 10 : i32, message = "bgn,bnh->bgh"}> : () -> ()
    %cst_12 = arith.constant dense<0.000000e+00> : vector<1x8x32xf32>
    %14 = tpu.matmul %13, %0, %cst_12 {dimension_numbers = #tpu.dot_dimension_numbers<[2], [1], [1], [2], [0, 0, 0, 1, 1, 2], [0], [0]>} : vector<1x8x128xf32>, vector<1x128x32xf32>, vector<1x8x32xf32> -> vector<1x8x32xf32>
    "tpu.trace_stop"() : () -> ()
    %15 = vector.shape_cast %14 : vector<1x8x32xf32> to vector<8x32xf32>
    %c0_13 = arith.constant 0 : index
    %c0_14 = arith.constant 0 : index
    %16 = vector.load %arg5[%c0_13, %c0_14] : memref<32x32xf32, #tpu.memory_space<vmem>>, vector<32x32xf32>
    %cst_15 = arith.constant dense<0.000000e+00> : vector<8x32xf32>
    %17 = tpu.matmul %15, %16, %cst_15 {dimension_numbers = #tpu.dot_dimension_numbers<[1], [0], [0], [1], [0, 0, 1, 1], [], []>} : vector<8x32xf32>, vector<32x32xf32>, vector<8x32xf32> -> vector<8x32xf32>
    %18 = vector.shape_cast %17 : vector<8x32xf32> to vector<1x8x32xf32>
    %19 = vector.shape_cast %7 : vector<1x32xf32> to vector<1x1x32xf32>
    %20 = vector.broadcast %19 : vector<1x1x32xf32> to vector<1x8x32xf32>
    %21 = arith.addf %18, %20 : vector<1x8x32xf32>
    %c0_16 = arith.constant 0 : index
    %c0_17 = arith.constant 0 : index
    %22 = vector.load %arg6[%c0_16, %c0_17] : memref<32x32xf32, #tpu.memory_space<vmem>>, vector<32x32xf32>
    %cst_18 = arith.constant dense<0.000000e+00> : vector<128x32xf32>
    %23 = tpu.matmul %2, %22, %cst_18 {dimension_numbers = #tpu.dot_dimension_numbers<[1], [0], [0], [1], [0, 0, 1, 1], [], []>} : vector<128x32xf32>, vector<32x32xf32>, vector<128x32xf32> -> vector<128x32xf32>
    %24 = vector.shape_cast %23 : vector<128x32xf32> to vector<1x128x32xf32>
    %c0_19 = arith.constant 0 : index
    %c0_20 = arith.constant 0 : index
    %25 = vector.load %arg7[%c0_19, %c0_20] : memref<32x32xf32, #tpu.memory_space<vmem>>, vector<32x32xf32>
    %cst_21 = arith.constant dense<0.000000e+00> : vector<128x32xf32>
    %26 = tpu.matmul %2, %25, %cst_21 {dimension_numbers = #tpu.dot_dimension_numbers<[1], [0], [0], [1], [0, 0, 1, 1], [], []>} : vector<128x32xf32>, vector<32x32xf32>, vector<128x32xf32> -> vector<128x32xf32>
    %27 = vector.shape_cast %26 : vector<128x32xf32> to vector<1x128x32xf32>
    %28 = vector.extract_strided_slice %21 {offsets = [0, 0, 0], sizes = [1, 8, 4], strides = [1, 1, 1]} : vector<1x8x32xf32> to vector<1x8x4xf32>
    %29 = vector.extract_strided_slice %24 {offsets = [0, 0, 0], sizes = [1, 128, 4], strides = [1, 1, 1]} : vector<1x128x32xf32> to vector<1x128x4xf32>
    "tpu.trace_start"() <{level = 10 : i32, message = "bgd,bnd->bgn"}> : () -> ()
    %cst_22 = arith.constant dense<0.000000e+00> : vector<1x8x128xf32>
    %30 = tpu.matmul %28, %29, %cst_22 {dimension_numbers = #tpu.dot_dimension_numbers<[2], [2], [1], [1], [0, 0, 0, 1, 1, 1], [0], [0]>} : vector<1x8x4xf32>, vector<1x128x4xf32>, vector<1x8x128xf32> -> vector<1x8x128xf32>
    "tpu.trace_stop"() : () -> ()
    %cst_23 = arith.constant 5.000000e-01 : f32
    %31 = vector.broadcast %cst_23 : f32 to vector<1x8x128xf32>
    %32 = arith.mulf %30, %31 : vector<1x8x128xf32>
    %33 = arith.addf %32, %1 : vector<1x8x128xf32>
    %cst_24 = arith.constant dense<0xFF800000> : vector<1x8xf32>
    %34 = vector.multi_reduction <maximumf>, %33, %cst_24 [2] : vector<1x8x128xf32> to vector<1x8xf32>
    %35 = vector.shape_cast %34 : vector<1x8xf32> to vector<1x8x1xf32>
    %36 = vector.broadcast %35 : vector<1x8x1xf32> to vector<1x8x128xf32>
    %37 = arith.subf %33, %36 : vector<1x8x128xf32>
    %38 = math.exp %37 : vector<1x8x128xf32>
    %cst_25 = arith.constant dense<0.000000e+00> : vector<1x8xf32>
    %39 = vector.multi_reduction <add>, %38, %cst_25 [2] : vector<1x8x128xf32> to vector<1x8xf32>
    %40 = vector.shape_cast %39 : vector<1x8xf32> to vector<1x8x1xf32>
    %41 = vector.broadcast %40 : vector<1x8x1xf32> to vector<1x8x128xf32>
    %42 = arith.divf %38, %41 : vector<1x8x128xf32>
    %43 = vector.extract_strided_slice %27 {offsets = [0, 0, 0], sizes = [1, 128, 4], strides = [1, 1, 1]} : vector<1x128x32xf32> to vector<1x128x4xf32>
    "tpu.trace_start"() <{level = 10 : i32, message = "bgn,bnd->bgd"}> : () -> ()
    %cst_26 = arith.constant dense<0.000000e+00> : vector<1x8x4xf32>
    %44 = tpu.matmul %42, %43, %cst_26 {dimension_numbers = #tpu.dot_dimension_numbers<[2], [1], [1], [2], [0, 0, 0, 1, 1, 2], [0], [0]>} : vector<1x8x128xf32>, vector<1x128x4xf32>, vector<1x8x4xf32> -> vector<1x8x4xf32>
    "tpu.trace_stop"() : () -> ()
    %c0_27 = arith.constant 0 : index
    %c0_28 = arith.constant 0 : index
    %c0_29 = arith.constant 0 : index
    %45 = vector.load %arg11[%c0_27, %c0_28, %c0_29] : memref<1x8x32xf32, #tpu.memory_space<vmem>>, vector<1x8x4xf32>
    tpu.vector_store %arg11[%c0_27, %c0_28, %c0_29], %44 {strides = array<i32>} : memref<1x8x32xf32, #tpu.memory_space<vmem>>, vector<1x8x4xf32>,
    %46 = vector.extract_strided_slice %21 {offsets = [0, 0, 4], sizes = [1, 8, 4], strides = [1, 1, 1]} : vector<1x8x32xf32> to vector<1x8x4xf32>
    %47 = vector.extract_strided_slice %24 {offsets = [0, 0, 4], sizes = [1, 128, 4], strides = [1, 1, 1]} : vector<1x128x32xf32> to vector<1x128x4xf32>
    "tpu.trace_start"() <{level = 10 : i32, message = "bgd,bnd->bgn"}> : () -> ()
    %cst_30 = arith.constant dense<0.000000e+00> : vector<1x8x128xf32>
    %48 = tpu.matmul %46, %47, %cst_30 {dimension_numbers = #tpu.dot_dimension_numbers<[2], [2], [1], [1], [0, 0, 0, 1, 1, 1], [0], [0]>} : vector<1x8x4xf32>, vector<1x128x4xf32>, vector<1x8x128xf32> -> vector<1x8x128xf32>
    "tpu.trace_stop"() : () -> ()
    %cst_31 = arith.constant 5.000000e-01 : f32
    %49 = vector.broadcast %cst_31 : f32 to vector<1x8x128xf32>
    %50 = arith.mulf %48, %49 : vector<1x8x128xf32>
    %51 = arith.addf %50, %1 : vector<1x8x128xf32>
    %cst_32 = arith.constant dense<0xFF800000> : vector<1x8xf32>
    %52 = vector.multi_reduction <maximumf>, %51, %cst_32 [2] : vector<1x8x128xf32> to vector<1x8xf32>
    %53 = vector.shape_cast %52 : vector<1x8xf32> to vector<1x8x1xf32>
    %54 = vector.broadcast %53 : vector<1x8x1xf32> to vector<1x8x128xf32>
    %55 = arith.subf %51, %54 : vector<1x8x128xf32>
    %56 = math.exp %55 : vector<1x8x128xf32>
    %cst_33 = arith.constant dense<0.000000e+00> : vector<1x8xf32>
    %57 = vector.multi_reduction <add>, %56, %cst_33 [2] : vector<1x8x128xf32> to vector<1x8xf32>
    %58 = vector.shape_cast %57 : vector<1x8xf32> to vector<1x8x1xf32>
    %59 = vector.broadcast %58 : vector<1x8x1xf32> to vector<1x8x128xf32>
    %60 = arith.divf %56, %59 : vector<1x8x128xf32>
    %61 = vector.extract_strided_slice %27 {offsets = [0, 0, 4], sizes = [1, 128, 4], strides = [1, 1, 1]} : vector<1x128x32xf32> to vector<1x128x4xf32>
    "tpu.trace_start"() <{level = 10 : i32, message = "bgn,bnd->bgd"}> : () -> ()
    %cst_34 = arith.constant dense<0.000000e+00> : vector<1x8x4xf32>
    %62 = tpu.matmul %60, %61, %cst_34 {dimension_numbers = #tpu.dot_dimension_numbers<[2], [1], [1], [2], [0, 0, 0, 1, 1, 2], [0], [0]>} : vector<1x8x128xf32>, vector<1x128x4xf32>, vector<1x8x4xf32> -> vector<1x8x4xf32>
    "tpu.trace_stop"() : () -> ()
    %c0_35 = arith.constant 0 : index
    %c0_36 = arith.constant 0 : index
    %c4 = arith.constant 4 : index
    %63 = vector.load %arg11[%c0_35, %c0_36, %c4] : memref<1x8x32xf32, #tpu.memory_space<vmem>>, vector<1x8x4xf32>
    tpu.vector_store %arg11[%c0_35, %c0_36, %c4], %62 {strides = array<i32>} : memref<1x8x32xf32, #tpu.memory_space<vmem>>, vector<1x8x4xf32>,
    %64 = vector.extract_strided_slice %21 {offsets = [0, 0, 8], sizes = [1, 8, 4], strides = [1, 1, 1]} : vector<1x8x32xf32> to vector<1x8x4xf32>
    %65 = vector.extract_strided_slice %24 {offsets = [0, 0, 8], sizes = [1, 128, 4], strides = [1, 1, 1]} : vector<1x128x32xf32> to vector<1x128x4xf32>
    "tpu.trace_start"() <{level = 10 : i32, message = "bgd,bnd->bgn"}> : () -> ()
    %cst_37 = arith.constant dense<0.000000e+00> : vector<1x8x128xf32>
    %66 = tpu.matmul %64, %65, %cst_37 {dimension_numbers = #tpu.dot_dimension_numbers<[2], [2], [1], [1], [0, 0, 0, 1, 1, 1], [0], [0]>} : vector<1x8x4xf32>, vector<1x128x4xf32>, vector<1x8x128xf32> -> vector<1x8x128xf32>
    "tpu.trace_stop"() : () -> ()
    %cst_38 = arith.constant 5.000000e-01 : f32
    %67 = vector.broadcast %cst_38 : f32 to vector<1x8x128xf32>
    %68 = arith.mulf %66, %67 : vector<1x8x128xf32>
    %69 = arith.addf %68, %1 : vector<1x8x128xf32>
    %cst_39 = arith.constant dense<0xFF800000> : vector<1x8xf32>
    %70 = vector.multi_reduction <maximumf>, %69, %cst_39 [2] : vector<1x8x128xf32> to vector<1x8xf32>
    %71 = vector.shape_cast %70 : vector<1x8xf32> to vector<1x8x1xf32>
    %72 = vector.broadcast %71 : vector<1x8x1xf32> to vector<1x8x128xf32>
    %73 = arith.subf %69, %72 : vector<1x8x128xf32>
    %74 = math.exp %73 : vector<1x8x128xf32>
    %cst_40 = arith.constant dense<0.000000e+00> : vector<1x8xf32>
    %75 = vector.multi_reduction <add>, %74, %cst_40 [2] : vector<1x8x128xf32> to vector<1x8xf32>
    %76 = vector.shape_cast %75 : vector<1x8xf32> to vector<1x8x1xf32>
    %77 = vector.broadcast %76 : vector<1x8x1xf32> to vector<1x8x128xf32>
    %78 = arith.divf %74, %77 : vector<1x8x128xf32>
    %79 = vector.extract_strided_slice %27 {offsets = [0, 0, 8], sizes = [1, 128, 4], strides = [1, 1, 1]} : vector<1x128x32xf32> to vector<1x128x4xf32>
    "tpu.trace_start"() <{level = 10 : i32, message = "bgn,bnd->bgd"}> : () -> ()
    %cst_41 = arith.constant dense<0.000000e+00> : vector<1x8x4xf32>
    %80 = tpu.matmul %78, %79, %cst_41 {dimension_numbers = #tpu.dot_dimension_numbers<[2], [1], [1], [2], [0, 0, 0, 1, 1, 2], [0], [0]>} : vector<1x8x128xf32>, vector<1x128x4xf32>, vector<1x8x4xf32> -> vector<1x8x4xf32>
    "tpu.trace_stop"() : () -> ()
    %c0_42 = arith.constant 0 : index
    %c0_43 = arith.constant 0 : index
    %c8 = arith.constant 8 : index
    %81 = vector.load %arg11[%c0_42, %c0_43, %c8] : memref<1x8x32xf32, #tpu.memory_space<vmem>>, vector<1x8x4xf32>
    tpu.vector_store %arg11[%c0_42, %c0_43, %c8], %80 {strides = array<i32>} : memref<1x8x32xf32, #tpu.memory_space<vmem>>, vector<1x8x4xf32>,
    %82 = vector.extract_strided_slice %21 {offsets = [0, 0, 12], sizes = [1, 8, 4], strides = [1, 1, 1]} : vector<1x8x32xf32> to vector<1x8x4xf32>
    %83 = vector.extract_strided_slice %24 {offsets = [0, 0, 12], sizes = [1, 128, 4], strides = [1, 1, 1]} : vector<1x128x32xf32> to vector<1x128x4xf32>
    "tpu.trace_start"() <{level = 10 : i32, message = "bgd,bnd->bgn"}> : () -> ()
    %cst_44 = arith.constant dense<0.000000e+00> : vector<1x8x128xf32>
    %84 = tpu.matmul %82, %83, %cst_44 {dimension_numbers = #tpu.dot_dimension_numbers<[2], [2], [1], [1], [0, 0, 0, 1, 1, 1], [0], [0]>} : vector<1x8x4xf32>, vector<1x128x4xf32>, vector<1x8x128xf32> -> vector<1x8x128xf32>
    "tpu.trace_stop"() : () -> ()
    %cst_45 = arith.constant 5.000000e-01 : f32
    %85 = vector.broadcast %cst_45 : f32 to vector<1x8x128xf32>
    %86 = arith.mulf %84, %85 : vector<1x8x128xf32>
    %87 = arith.addf %86, %1 : vector<1x8x128xf32>
    %cst_46 = arith.constant dense<0xFF800000> : vector<1x8xf32>
    %88 = vector.multi_reduction <maximumf>, %87, %cst_46 [2] : vector<1x8x128xf32> to vector<1x8xf32>
    %89 = vector.shape_cast %88 : vector<1x8xf32> to vector<1x8x1xf32>
    %90 = vector.broadcast %89 : vector<1x8x1xf32> to vector<1x8x128xf32>
    %91 = arith.subf %87, %90 : vector<1x8x128xf32>
    %92 = math.exp %91 : vector<1x8x128xf32>
    %cst_47 = arith.constant dense<0.000000e+00> : vector<1x8xf32>
    %93 = vector.multi_reduction <add>, %92, %cst_47 [2] : vector<1x8x128xf32> to vector<1x8xf32>
    %94 = vector.shape_cast %93 : vector<1x8xf32> to vector<1x8x1xf32>
    %95 = vector.broadcast %94 : vector<1x8x1xf32> to vector<1x8x128xf32>
    %96 = arith.divf %92, %95 : vector<1x8x128xf32>
    %97 = vector.extract_strided_slice %27 {offsets = [0, 0, 12], sizes = [1, 128, 4], strides = [1, 1, 1]} : vector<1x128x32xf32> to vector<1x128x4xf32>
    "tpu.trace_start"() <{level = 10 : i32, message = "bgn,bnd->bgd"}> : () -> ()
    %cst_48 = arith.constant dense<0.000000e+00> : vector<1x8x4xf32>
    %98 = tpu.matmul %96, %97, %cst_48 {dimension_numbers = #tpu.dot_dimension_numbers<[2], [1], [1], [2], [0, 0, 0, 1, 1, 2], [0], [0]>} : vector<1x8x128xf32>, vector<1x128x4xf32>, vector<1x8x4xf32> -> vector<1x8x4xf32>
    "tpu.trace_stop"() : () -> ()
    %c0_49 = arith.constant 0 : index
    %c0_50 = arith.constant 0 : index
    %c12 = arith.constant 12 : index
    %99 = vector.load %arg11[%c0_49, %c0_50, %c12] : memref<1x8x32xf32, #tpu.memory_space<vmem>>, vector<1x8x4xf32>
    tpu.vector_store %arg11[%c0_49, %c0_50, %c12], %98 {strides = array<i32>} : memref<1x8x32xf32, #tpu.memory_space<vmem>>, vector<1x8x4xf32>,
    %100 = vector.extract_strided_slice %21 {offsets = [0, 0, 16], sizes = [1, 8, 4], strides = [1, 1, 1]} : vector<1x8x32xf32> to vector<1x8x4xf32>
    %101 = vector.extract_strided_slice %24 {offsets = [0, 0, 16], sizes = [1, 128, 4], strides = [1, 1, 1]} : vector<1x128x32xf32> to vector<1x128x4xf32>
    "tpu.trace_start"() <{level = 10 : i32, message = "bgd,bnd->bgn"}> : () -> ()
    %cst_51 = arith.constant dense<0.000000e+00> : vector<1x8x128xf32>
    %102 = tpu.matmul %100, %101, %cst_51 {dimension_numbers = #tpu.dot_dimension_numbers<[2], [2], [1], [1], [0, 0, 0, 1, 1, 1], [0], [0]>} : vector<1x8x4xf32>, vector<1x128x4xf32>, vector<1x8x128xf32> -> vector<1x8x128xf32>
    "tpu.trace_stop"() : () -> ()
    %cst_52 = arith.constant 5.000000e-01 : f32
    %103 = vector.broadcast %cst_52 : f32 to vector<1x8x128xf32>
    %104 = arith.mulf %102, %103 : vector<1x8x128xf32>
    %105 = arith.addf %104, %1 : vector<1x8x128xf32>
    %cst_53 = arith.constant dense<0xFF800000> : vector<1x8xf32>
    %106 = vector.multi_reduction <maximumf>, %105, %cst_53 [2] : vector<1x8x128xf32> to vector<1x8xf32>
    %107 = vector.shape_cast %106 : vector<1x8xf32> to vector<1x8x1xf32>
    %108 = vector.broadcast %107 : vector<1x8x1xf32> to vector<1x8x128xf32>
    %109 = arith.subf %105, %108 : vector<1x8x128xf32>
    %110 = math.exp %109 : vector<1x8x128xf32>
    %cst_54 = arith.constant dense<0.000000e+00> : vector<1x8xf32>
    %111 = vector.multi_reduction <add>, %110, %cst_54 [2] : vector<1x8x128xf32> to vector<1x8xf32>
    %112 = vector.shape_cast %111 : vector<1x8xf32> to vector<1x8x1xf32>
    %113 = vector.broadcast %112 : vector<1x8x1xf32> to vector<1x8x128xf32>
    %114 = arith.divf %110, %113 : vector<1x8x128xf32>
    %115 = vector.extract_strided_slice %27 {offsets = [0, 0, 16], sizes = [1, 128, 4], strides = [1, 1, 1]} : vector<1x128x32xf32> to vector<1x128x4xf32>
    "tpu.trace_start"() <{level = 10 : i32, message = "bgn,bnd->bgd"}> : () -> ()
    %cst_55 = arith.constant dense<0.000000e+00> : vector<1x8x4xf32>
    %116 = tpu.matmul %114, %115, %cst_55 {dimension_numbers = #tpu.dot_dimension_numbers<[2], [1], [1], [2], [0, 0, 0, 1, 1, 2], [0], [0]>} : vector<1x8x128xf32>, vector<1x128x4xf32>, vector<1x8x4xf32> -> vector<1x8x4xf32>
    "tpu.trace_stop"() : () -> ()
    %c0_56 = arith.constant 0 : index
    %c0_57 = arith.constant 0 : index
    %c16 = arith.constant 16 : index
    %117 = vector.load %arg11[%c0_56, %c0_57, %c16] : memref<1x8x32xf32, #tpu.memory_space<vmem>>, vector<1x8x4xf32>
    tpu.vector_store %arg11[%c0_56, %c0_57, %c16], %116 {strides = array<i32>} : memref<1x8x32xf32, #tpu.memory_space<vmem>>, vector<1x8x4xf32>,
    %118 = vector.extract_strided_slice %21 {offsets = [0, 0, 20], sizes = [1, 8, 4], strides = [1, 1, 1]} : vector<1x8x32xf32> to vector<1x8x4xf32>
    %119 = vector.extract_strided_slice %24 {offsets = [0, 0, 20], sizes = [1, 128, 4], strides = [1, 1, 1]} : vector<1x128x32xf32> to vector<1x128x4xf32>
    "tpu.trace_start"() <{level = 10 : i32, message = "bgd,bnd->bgn"}> : () -> ()
    %cst_58 = arith.constant dense<0.000000e+00> : vector<1x8x128xf32>
    %120 = tpu.matmul %118, %119, %cst_58 {dimension_numbers = #tpu.dot_dimension_numbers<[2], [2], [1], [1], [0, 0, 0, 1, 1, 1], [0], [0]>} : vector<1x8x4xf32>, vector<1x128x4xf32>, vector<1x8x128xf32> -> vector<1x8x128xf32>
    "tpu.trace_stop"() : () -> ()
    %cst_59 = arith.constant 5.000000e-01 : f32
    %121 = vector.broadcast %cst_59 : f32 to vector<1x8x128xf32>
    %122 = arith.mulf %120, %121 : vector<1x8x128xf32>
    %123 = arith.addf %122, %1 : vector<1x8x128xf32>
    %cst_60 = arith.constant dense<0xFF800000> : vector<1x8xf32>
    %124 = vector.multi_reduction <maximumf>, %123, %cst_60 [2] : vector<1x8x128xf32> to vector<1x8xf32>
    %125 = vector.shape_cast %124 : vector<1x8xf32> to vector<1x8x1xf32>
    %126 = vector.broadcast %125 : vector<1x8x1xf32> to vector<1x8x128xf32>
    %127 = arith.subf %123, %126 : vector<1x8x128xf32>
    %128 = math.exp %127 : vector<1x8x128xf32>
    %cst_61 = arith.constant dense<0.000000e+00> : vector<1x8xf32>
    %129 = vector.multi_reduction <add>, %128, %cst_61 [2] : vector<1x8x128xf32> to vector<1x8xf32>
    %130 = vector.shape_cast %129 : vector<1x8xf32> to vector<1x8x1xf32>
    %131 = vector.broadcast %130 : vector<1x8x1xf32> to vector<1x8x128xf32>
    %132 = arith.divf %128, %131 : vector<1x8x128xf32>
    %133 = vector.extract_strided_slice %27 {offsets = [0, 0, 20], sizes = [1, 128, 4], strides = [1, 1, 1]} : vector<1x128x32xf32> to vector<1x128x4xf32>
    "tpu.trace_start"() <{level = 10 : i32, message = "bgn,bnd->bgd"}> : () -> ()
    %cst_62 = arith.constant dense<0.000000e+00> : vector<1x8x4xf32>
    %134 = tpu.matmul %132, %133, %cst_62 {dimension_numbers = #tpu.dot_dimension_numbers<[2], [1], [1], [2], [0, 0, 0, 1, 1, 2], [0], [0]>} : vector<1x8x128xf32>, vector<1x128x4xf32>, vector<1x8x4xf32> -> vector<1x8x4xf32>
    "tpu.trace_stop"() : () -> ()
    %c0_63 = arith.constant 0 : index
    %c0_64 = arith.constant 0 : index
    %c20 = arith.constant 20 : index
    %135 = vector.load %arg11[%c0_63, %c0_64, %c20] : memref<1x8x32xf32, #tpu.memory_space<vmem>>, vector<1x8x4xf32>
    tpu.vector_store %arg11[%c0_63, %c0_64, %c20], %134 {strides = array<i32>} : memref<1x8x32xf32, #tpu.memory_space<vmem>>, vector<1x8x4xf32>,
    %136 = vector.extract_strided_slice %21 {offsets = [0, 0, 24], sizes = [1, 8, 4], strides = [1, 1, 1]} : vector<1x8x32xf32> to vector<1x8x4xf32>
    %137 = vector.extract_strided_slice %24 {offsets = [0, 0, 24], sizes = [1, 128, 4], strides = [1, 1, 1]} : vector<1x128x32xf32> to vector<1x128x4xf32>
    "tpu.trace_start"() <{level = 10 : i32, message = "bgd,bnd->bgn"}> : () -> ()
    %cst_65 = arith.constant dense<0.000000e+00> : vector<1x8x128xf32>
    %138 = tpu.matmul %136, %137, %cst_65 {dimension_numbers = #tpu.dot_dimension_numbers<[2], [2], [1], [1], [0, 0, 0, 1, 1, 1], [0], [0]>} : vector<1x8x4xf32>, vector<1x128x4xf32>, vector<1x8x128xf32> -> vector<1x8x128xf32>
    "tpu.trace_stop"() : () -> ()
    %cst_66 = arith.constant 5.000000e-01 : f32
    %139 = vector.broadcast %cst_66 : f32 to vector<1x8x128xf32>
    %140 = arith.mulf %138, %139 : vector<1x8x128xf32>
    %141 = arith.addf %140, %1 : vector<1x8x128xf32>
    %cst_67 = arith.constant dense<0xFF800000> : vector<1x8xf32>
    %142 = vector.multi_reduction <maximumf>, %141, %cst_67 [2] : vector<1x8x128xf32> to vector<1x8xf32>
    %143 = vector.shape_cast %142 : vector<1x8xf32> to vector<1x8x1xf32>
    %144 = vector.broadcast %143 : vector<1x8x1xf32> to vector<1x8x128xf32>
    %145 = arith.subf %141, %144 : vector<1x8x128xf32>
    %146 = math.exp %145 : vector<1x8x128xf32>
    %cst_68 = arith.constant dense<0.000000e+00> : vector<1x8xf32>
    %147 = vector.multi_reduction <add>, %146, %cst_68 [2] : vector<1x8x128xf32> to vector<1x8xf32>
    %148 = vector.shape_cast %147 : vector<1x8xf32> to vector<1x8x1xf32>
    %149 = vector.broadcast %148 : vector<1x8x1xf32> to vector<1x8x128xf32>
    %150 = arith.divf %146, %149 : vector<1x8x128xf32>
    %151 = vector.extract_strided_slice %27 {offsets = [0, 0, 24], sizes = [1, 128, 4], strides = [1, 1, 1]} : vector<1x128x32xf32> to vector<1x128x4xf32>
    "tpu.trace_start"() <{level = 10 : i32, message = "bgn,bnd->bgd"}> : () -> ()
    %cst_69 = arith.constant dense<0.000000e+00> : vector<1x8x4xf32>
    %152 = tpu.matmul %150, %151, %cst_69 {dimension_numbers = #tpu.dot_dimension_numbers<[2], [1], [1], [2], [0, 0, 0, 1, 1, 2], [0], [0]>} : vector<1x8x128xf32>, vector<1x128x4xf32>, vector<1x8x4xf32> -> vector<1x8x4xf32>
    "tpu.trace_stop"() : () -> ()
    %c0_70 = arith.constant 0 : index
    %c0_71 = arith.constant 0 : index
    %c24 = arith.constant 24 : index
    %153 = vector.load %arg11[%c0_70, %c0_71, %c24] : memref<1x8x32xf32, #tpu.memory_space<vmem>>, vector<1x8x4xf32>
    tpu.vector_store %arg11[%c0_70, %c0_71, %c24], %152 {strides = array<i32>} : memref<1x8x32xf32, #tpu.memory_space<vmem>>, vector<1x8x4xf32>,
    %154 = vector.extract_strided_slice %21 {offsets = [0, 0, 28], sizes = [1, 8, 4], strides = [1, 1, 1]} : vector<1x8x32xf32> to vector<1x8x4xf32>
    %155 = vector.extract_strided_slice %24 {offsets = [0, 0, 28], sizes = [1, 128, 4], strides = [1, 1, 1]} : vector<1x128x32xf32> to vector<1x128x4xf32>
    "tpu.trace_start"() <{level = 10 : i32, message = "bgd,bnd->bgn"}> : () -> ()
    %cst_72 = arith.constant dense<0.000000e+00> : vector<1x8x128xf32>
    %156 = tpu.matmul %154, %155, %cst_72 {dimension_numbers = #tpu.dot_dimension_numbers<[2], [2], [1], [1], [0, 0, 0, 1, 1, 1], [0], [0]>} : vector<1x8x4xf32>, vector<1x128x4xf32>, vector<1x8x128xf32> -> vector<1x8x128xf32>
    "tpu.trace_stop"() : () -> ()
    %cst_73 = arith.constant 5.000000e-01 : f32
    %157 = vector.broadcast %cst_73 : f32 to vector<1x8x128xf32>
    %158 = arith.mulf %156, %157 : vector<1x8x128xf32>
    %159 = arith.addf %158, %1 : vector<1x8x128xf32>
    %cst_74 = arith.constant dense<0xFF800000> : vector<1x8xf32>
    %160 = vector.multi_reduction <maximumf>, %159, %cst_74 [2] : vector<1x8x128xf32> to vector<1x8xf32>
    %161 = vector.shape_cast %160 : vector<1x8xf32> to vector<1x8x1xf32>
    %162 = vector.broadcast %161 : vector<1x8x1xf32> to vector<1x8x128xf32>
    %163 = arith.subf %159, %162 : vector<1x8x128xf32>
    %164 = math.exp %163 : vector<1x8x128xf32>
    %cst_75 = arith.constant dense<0.000000e+00> : vector<1x8xf32>
    %165 = vector.multi_reduction <add>, %164, %cst_75 [2] : vector<1x8x128xf32> to vector<1x8xf32>
    %166 = vector.shape_cast %165 : vector<1x8xf32> to vector<1x8x1xf32>
    %167 = vector.broadcast %166 : vector<1x8x1xf32> to vector<1x8x128xf32>
    %168 = arith.divf %164, %167 : vector<1x8x128xf32>
    %169 = vector.extract_strided_slice %27 {offsets = [0, 0, 28], sizes = [1, 128, 4], strides = [1, 1, 1]} : vector<1x128x32xf32> to vector<1x128x4xf32>
    "tpu.trace_start"() <{level = 10 : i32, message = "bgn,bnd->bgd"}> : () -> ()
    %cst_76 = arith.constant dense<0.000000e+00> : vector<1x8x4xf32>
    %170 = tpu.matmul %168, %169, %cst_76 {dimension_numbers = #tpu.dot_dimension_numbers<[2], [1], [1], [2], [0, 0, 0, 1, 1, 2], [0], [0]>} : vector<1x8x128xf32>, vector<1x128x4xf32>, vector<1x8x4xf32> -> vector<1x8x4xf32>
    "tpu.trace_stop"() : () -> ()
    %c0_77 = arith.constant 0 : index
    %c0_78 = arith.constant 0 : index
    %c28 = arith.constant 28 : index
    %171 = vector.load %arg11[%c0_77, %c0_78, %c28] : memref<1x8x32xf32, #tpu.memory_space<vmem>>, vector<1x8x4xf32>
    tpu.vector_store %arg11[%c0_77, %c0_78, %c28], %170 {strides = array<i32>} : memref<1x8x32xf32, #tpu.memory_space<vmem>>, vector<1x8x4xf32>,
    %c0_79 = arith.constant 0 : index
    %c0_80 = arith.constant 0 : index
    %c0_81 = arith.constant 0 : index
    %172 = vector.load %arg11[%c0_79, %c0_80, %c0_81] : memref<1x8x32xf32, #tpu.memory_space<vmem>>, vector<1x8x32xf32>
    %173 = vector.shape_cast %172 : vector<1x8x32xf32> to vector<8x32xf32>
    %c0_82 = arith.constant 0 : index
    %c0_83 = arith.constant 0 : index
    %174 = vector.load %arg8[%c0_82, %c0_83] : memref<32x32xf32, #tpu.memory_space<vmem>>, vector<32x32xf32>
    %cst_84 = arith.constant dense<0.000000e+00> : vector<8x32xf32>
    %175 = tpu.matmul %173, %174, %cst_84 {dimension_numbers = #tpu.dot_dimension_numbers<[1], [0], [0], [1], [0, 0, 1, 1], [], []>} : vector<8x32xf32>, vector<32x32xf32>, vector<8x32xf32> -> vector<8x32xf32>
    %c0_85 = arith.constant 0 : index
    %c0_86 = arith.constant 0 : index
    %176 = vector.load %arg9[%c0_85, %c0_86] : memref<1x32xf32, #tpu.memory_space<vmem>>, vector<1x32xf32>
    %177 = vector.broadcast %176 : vector<1x32xf32> to vector<8x32xf32>
    %178 = arith.addf %175, %177 : vector<8x32xf32>
    %179 = vector.shape_cast %178 : vector<8x32xf32> to vector<1x8x32xf32>
    "tpu.trace_start"() <{level = 10 : i32, message = "bgh,bnh->bgn"}> : () -> ()
    %cst_87 = arith.constant dense<0.000000e+00> : vector<1x8x128xf32>
    %180 = tpu.matmul %179, %0, %cst_87 {dimension_numbers = #tpu.dot_dimension_numbers<[2], [2], [1], [1], [0, 0, 0, 1, 1, 1], [0], [0]>} : vector<1x8x32xf32>, vector<1x128x32xf32>, vector<1x8x128xf32> -> vector<1x8x128xf32>
    "tpu.trace_stop"() : () -> ()
    %cst_88 = arith.constant 0.176776692 : f32
    %181 = vector.broadcast %cst_88 : f32 to vector<1x8x128xf32>
    %182 = arith.mulf %180, %181 : vector<1x8x128xf32>
    %183 = math.tanh %182 : vector<1x8x128xf32>
    %cst_89 = arith.constant 1.000000e+01 : f32
    %184 = vector.broadcast %cst_89 : f32 to vector<1x8x128xf32>
    %185 = arith.mulf %184, %183 : vector<1x8x128xf32>
    %186 = arith.addf %185, %1 : vector<1x8x128xf32>
    %cst_90 = arith.constant dense<0xFF800000> : vector<1x8xf32>
    %187 = vector.multi_reduction <maximumf>, %186, %cst_90 [2] : vector<1x8x128xf32> to vector<1x8xf32>
    %188 = vector.shape_cast %187 : vector<1x8xf32> to vector<1x8x1xf32>
    %189 = vector.broadcast %188 : vector<1x8x1xf32> to vector<1x8x128xf32>
    %190 = arith.subf %186, %189 : vector<1x8x128xf32>
    %191 = math.exp %190 : vector<1x8x128xf32>
    %cst_91 = arith.constant dense<0.000000e+00> : vector<1x8xf32>
    %192 = vector.multi_reduction <add>, %191, %cst_91 [2] : vector<1x8x128xf32> to vector<1x8xf32>
    %193 = vector.shape_cast %192 : vector<1x8xf32> to vector<1x8x1xf32>
    %194 = vector.broadcast %193 : vector<1x8x1xf32> to vector<1x8x128xf32>
    %195 = arith.divf %191, %194 : vector<1x8x128xf32>
    %c0_92 = arith.constant 0 : index
    %c0_93 = arith.constant 0 : index
    %c0_94 = arith.constant 0 : index
    %196 = vector.load %arg10[%c0_92, %c0_93, %c0_94] : memref<1x8x128xf32, #tpu.memory_space<vmem>>, vector<1x8x128xf32>
    tpu.vector_store %arg10[%c0_92, %c0_93, %c0_94], %195 {strides = array<i32>} : memref<1x8x128xf32, #tpu.memory_space<vmem>>, vector<1x8x128xf32>,
    return
  }
  func.func @transform_0(%arg0: i32) -> (i32, i32, i32) {
    %c0_i32 = arith.constant 0 : i32
    %c0_i32_0 = arith.constant 0 : i32
    %c0_i32_1 = arith.constant 0 : i32
    return %arg0, %c0_i32, %c0_i32_0 : i32, i32, i32
  }
  func.func @transform_1(%arg0: i32) -> (i32, i32, i32) {
    %c0_i32 = arith.constant 0 : i32
    %c0_i32_0 = arith.constant 0 : i32
    %c0_i32_1 = arith.constant 0 : i32
    return %arg0, %c0_i32, %c0_i32_0 : i32, i32, i32
  }
  func.func @transform_2(%arg0: i32) -> (i32, i32, i32) {
    %c0_i32 = arith.constant 0 : i32
    %c0_i32_0 = arith.constant 0 : i32
    %c0_i32_1 = arith.constant 0 : i32
    return %arg0, %c0_i32, %c0_i32_0 : i32, i32, i32
  }
  func.func @transform_3(%arg0: i32) -> (i32, i32) {
    %c0_i32 = arith.constant 0 : i32
    %c0_i32_0 = arith.constant 0 : i32
    %c0_i32_1 = arith.constant 0 : i32
    return %c0_i32, %c0_i32_0 : i32, i32
  }
  func.func @transform_4(%arg0: i32) -> (i32, i32) {
    %c0_i32 = arith.constant 0 : i32
    %c0_i32_0 = arith.constant 0 : i32
    %c0_i32_1 = arith.constant 0 : i32
    return %c0_i32, %c0_i32_0 : i32, i32
  }
  func.func @transform_5(%arg0: i32) -> (i32, i32) {
    %c0_i32 = arith.constant 0 : i32
    %c0_i32_0 = arith.constant 0 : i32
    %c0_i32_1 = arith.constant 0 : i32
    return %c0_i32, %c0_i32_0 : i32, i32
  }
  func.func @transform_6(%arg0: i32) -> (i32, i32) {
    %c0_i32 = arith.constant 0 : i32
    %c0_i32_0 = arith.constant 0 : i32
    %c0_i32_1 = arith.constant 0 : i32
    return %c0_i32, %c0_i32_0 : i32, i32
  }
  func.func @transform_7(%arg0: i32) -> (i32, i32) {
    %c0_i32 = arith.constant 0 : i32
    %c0_i32_0 = arith.constant 0 : i32
    %c0_i32_1 = arith.constant 0 : i32
    return %c0_i32, %c0_i32_0 : i32, i32
  }
  func.func @transform_8(%arg0: i32) -> (i32, i32) {
    %c0_i32 = arith.constant 0 : i32
    %c0_i32_0 = arith.constant 0 : i32
    %c0_i32_1 = arith.constant 0 : i32
    return %c0_i32, %c0_i32_0 : i32, i32
  }
  func.func @transform_9(%arg0: i32) -> (i32, i32, i32) {
    %c0_i32 = arith.constant 0 : i32
    %c0_i32_0 = arith.constant 0 : i32
    %c0_i32_1 = arith.constant 0 : i32
    return %arg0, %c0_i32, %c0_i32_0 : i32, i32, i32
  }
}

</mosaic_0001>

<llo_original>
// kernel: tpu_custom_call.1
$region0: #{tpu_custom_call.1}
  #allocation0 [shape = 'u32[]', space=smem, size = 0x4, offset = 0x4, fixed_abs, tag = 'smem constant byte address 0x4 - core index']
  #allocation1 [shape = 'u32[144,128]{1,0:T(1,128)}', space=vmem, size = 0x12000, scoped, tag = 'internal scratch']
  #allocation2 [shape = 'f32[1,8,32]{2,1,0:T(8,128)}', space=vmem, size = 0x1000, scoped, tag = 'scratch operand']
  %s0 = inlined_call_operand.vmem [shape: f32[2,128,32], index: 0, kind: input, shape index: {}]
  %s1 = inlined_call_operand.vmem [shape: s32[2,8,1], index: 1, kind: input, shape index: {}]
  %s2 = inlined_call_operand.vmem [shape: f32[2,8,128], index: 2, kind: input, shape index: {}]
  %s3 = inlined_call_operand.vmem [shape: f32[32,32], index: 3, kind: input, shape index: {}]
  %s4 = inlined_call_operand.vmem [shape: f32[32,32], index: 4, kind: input, shape index: {}]
  %s5 = inlined_call_operand.vmem [shape: f32[32,32], index: 5, kind: input, shape index: {}]
  %s6 = inlined_call_operand.vmem [shape: f32[32,32], index: 6, kind: input, shape index: {}]
  %s7 = inlined_call_operand.vmem [shape: f32[32,32], index: 7, kind: input, shape index: {}]
  %s8 = inlined_call_operand.vmem [shape: f32[1,32], index: 8, kind: input, shape index: {}]
  %s9 = inlined_call_operand.hbm [shape: f32[2,8,128], index: 9, kind: output, shape index: {}]
  %s10 = sld [smem:[#allocation0]]
  $region69: #{tpu_custom_call.1} parent=0
    _
  %s12 = ssub.s32 1, %s10
  %s13 = scalar_select 0, %s12, %s10
  $region1: #{tpu_custom_call.1} parent=0
    #allocation3 [shape = 'u8[8192]{0}', space=vmem, size = 0x2000, scoped, tag = 'output window, operand 0']
    #allocation4 [shape = 's32[2]{0}', space=sflag, size = 0x8, scoped, tag = 'scoped memory for tpu_custom_call.1']
    %14 = vsyncpa [#allocation4], 0
    %s15 = scalar_lea.sflag [#allocation4], 1
    %16 = vsyncpa %s15, 0
    loop: start=0, step=1, limit=4
    $region2: #{tpu_custom_call.1} parent=1 // loop_pre_header
      _
    $region3: #{tpu_custom_call.1} parent=1 // loop_header
      %s18 = sphi 0, %s22
      %p19 = scmp.ge.s32.totalorder %s18, 4
      %s28 = sphi 0, %s30
      %s31 = sphi 0, %s28
      %s32 = sphi 0, %s31
      %s48 = sphi 0, %s32
      %s54 = sphi 0, %s56
      %s57 = sphi 0, %s54
      %s58 = sphi 0, %s57
      %s74 = sphi 0, %s58
      %s80 = sphi 0, %s82
      %s83 = sphi 0, %s80
      %s84 = sphi 0, %s83
      %s100 = sphi 0, %s84
      %s104 = sphi 0, %s104
      %s106 = sphi 0, %s104
      %s107 = sphi 0, %s106
      %s121 = sphi 0, %s107
      %s125 = sphi 0, %s125
      %s127 = sphi 0, %s125
      %s128 = sphi 0, %s127
      %s142 = sphi 0, %s128
      %s146 = sphi 0, %s146
      %s148 = sphi 0, %s146
      %s149 = sphi 0, %s148
      %s163 = sphi 0, %s149
      %s167 = sphi 0, %s167
      %s169 = sphi 0, %s167
      %s170 = sphi 0, %s169
      %s184 = sphi 0, %s170
      %s188 = sphi 0, %s188
      %s190 = sphi 0, %s188
      %s191 = sphi 0, %s190
      %s205 = sphi 0, %s191
      %s209 = sphi 0, %s209
      %s211 = sphi 0, %s209
      %s212 = sphi 0, %s211
      %s226 = sphi 0, %s212
      %s232 = sphi 0, %s234
      %s235 = sphi 0, %s232
      %s236 = sphi 0, %s235
      %s252 = sphi 0, %s236
    $region4: #{tpu_custom_call.1} parent=1 // loop_header_branch
      %21 = sbr.rel (%p19) target = $region8
    $region5: #{tpu_custom_call.1} parent=1 // loop_body
      %s23 = ssub.s32 %s18, 1
      %s24 = ssub.s32 %s18, 2
      %s25 = sadd.s32 %s18, 1
      %s26 = ssub.s32 %s18, %s25
      %p27 = scmp.eq.s32.totalorder %s26, 0
      %s29 = sadd.s32 %s28, 1
      %s30 = scalar_select %p27, %s28, %s29
      %p33 = pneg %p27
      %p34 = scmp.eq.s32.totalorder %s18, 1
      %p35 = por %p33, %p34
      %p36 = scmp.ne.s32.totalorder %s28, %s31
      %p37 = scmp.eq.s32.totalorder %s18, 0
      %p38 = por %p36, %p37
      %p39 = scmp.ne.s32.totalorder %s28, %s31
      %p40 = scmp.eq.s32.totalorder %s23, 1
      %p41 = por %p39, %p40
      %p42 = scmp.ne.s32.totalorder %s31, %s32
      %p43 = scmp.eq.s32.totalorder %s23, 0
      %p44 = por %p42, %p43
      %p45 = scmp.ne.s32.totalorder %s31, %s32
      %p46 = scmp.eq.s32.totalorder %s24, 1
      %p47 = por %p45, %p46
      %p49 = scmp.ne.s32.totalorder %s32, %s48
      %p50 = scmp.eq.s32.totalorder %s24, 0
      %p51 = por %p49, %p50
      %s52 = ssub.s32 %s18, %s25
      %p53 = scmp.eq.s32.totalorder %s52, 0
      %s55 = sadd.s32 %s54, 1
      %s56 = scalar_select %p53, %s54, %s55
      %p59 = pneg %p53
      %p60 = scmp.eq.s32.totalorder %s18, 1
      %p61 = por %p59, %p60
      %p62 = scmp.ne.s32.totalorder %s54, %s57
      %p63 = scmp.eq.s32.totalorder %s18, 0
      %p64 = por %p62, %p63
      %p65 = scmp.ne.s32.totalorder %s54, %s57
      %p66 = scmp.eq.s32.totalorder %s23, 1
      %p67 = por %p65, %p66
      %p68 = scmp.ne.s32.totalorder %s57, %s58
      %p69 = scmp.eq.s32.totalorder %s23, 0
      %p70 = por %p68, %p69
      %p71 = scmp.ne.s32.totalorder %s57, %s58
      %p72 = scmp.eq.s32.totalorder %s24, 1
      %p73 = por %p71, %p72
      %p75 = scmp.ne.s32.totalorder %s58, %s74
      %p76 = scmp.eq.s32.totalorder %s24, 0
      %p77 = por %p75, %p76
      %s78 = ssub.s32 %s18, %s25
      %p79 = scmp.eq.s32.totalorder %s78, 0
      %s81 = sadd.s32 %s80, 1
      %s82 = scalar_select %p79, %s80, %s81
      %p85 = pneg %p79
      %p86 = scmp.eq.s32.totalorder %s18, 1
      %p87 = por %p85, %p86
      %p88 = scmp.ne.s32.totalorder %s80, %s83
      %p89 = scmp.eq.s32.totalorder %s18, 0
      %p90 = por %p88, %p89
      %p91 = scmp.ne.s32.totalorder %s80, %s83
      %p92 = scmp.eq.s32.totalorder %s23, 1
      %p93 = por %p91, %p92
      %p94 = scmp.ne.s32.totalorder %s83, %s84
      %p95 = scmp.eq.s32.totalorder %s23, 0
      %p96 = por %p94, %p95
      %p97 = scmp.ne.s32.totalorder %s83, %s84
      %p98 = scmp.eq.s32.totalorder %s24, 1
      %p99 = por %p97, %p98
      %p101 = scmp.ne.s32.totalorder %s84, %s100
      %p102 = scmp.eq.s32.totalorder %s24, 0
      %p103 = por %p101, %p102
      %s105 = sadd.s32 %s104, 1
      %p108 = scmp.eq.s32.totalorder %s18, 1
      %p109 = scmp.ne.s32.totalorder %s104, %s106
      %p110 = scmp.eq.s32.totalorder %s18, 0
      %p111 = por %p109, %p110
      %p112 = scmp.ne.s32.totalorder %s104, %s106
      %p113 = scmp.eq.s32.totalorder %s23, 1
      %p114 = por %p112, %p113
      %p115 = scmp.ne.s32.totalorder %s106, %s107
      %p116 = scmp.eq.s32.totalorder %s23, 0
      %p117 = por %p115, %p116
      %p118 = scmp.ne.s32.totalorder %s106, %s107
      %p119 = scmp.eq.s32.totalorder %s24, 1
      %p120 = por %p118, %p119
      %p122 = scmp.ne.s32.totalorder %s107, %s121
      %p123 = scmp.eq.s32.totalorder %s24, 0
      %p124 = por %p122, %p123
      %s126 = sadd.s32 %s125, 1
      %p129 = scmp.eq.s32.totalorder %s18, 1
      %p130 = scmp.ne.s32.totalorder %s125, %s127
      %p131 = scmp.eq.s32.totalorder %s18, 0
      %p132 = por %p130, %p131
      %p133 = scmp.ne.s32.totalorder %s125, %s127
      %p134 = scmp.eq.s32.totalorder %s23, 1
      %p135 = por %p133, %p134
      %p136 = scmp.ne.s32.totalorder %s127, %s128
      %p137 = scmp.eq.s32.totalorder %s23, 0
      %p138 = por %p136, %p137
      %p139 = scmp.ne.s32.totalorder %s127, %s128
      %p140 = scmp.eq.s32.totalorder %s24, 1
      %p141 = por %p139, %p140
      %p143 = scmp.ne.s32.totalorder %s128, %s142
      %p144 = scmp.eq.s32.totalorder %s24, 0
      %p145 = por %p143, %p144
      %s147 = sadd.s32 %s146, 1
      %p150 = scmp.eq.s32.totalorder %s18, 1
      %p151 = scmp.ne.s32.totalorder %s146, %s148
      %p152 = scmp.eq.s32.totalorder %s18, 0
      %p153 = por %p151, %p152
      %p154 = scmp.ne.s32.totalorder %s146, %s148
      %p155 = scmp.eq.s32.totalorder %s23, 1
      %p156 = por %p154, %p155
      %p157 = scmp.ne.s32.totalorder %s148, %s149
      %p158 = scmp.eq.s32.totalorder %s23, 0
      %p159 = por %p157, %p158
      %p160 = scmp.ne.s32.totalorder %s148, %s149
      %p161 = scmp.eq.s32.totalorder %s24, 1
      %p162 = por %p160, %p161
      %p164 = scmp.ne.s32.totalorder %s149, %s163
      %p165 = scmp.eq.s32.totalorder %s24, 0
      %p166 = por %p164, %p165
      %s168 = sadd.s32 %s167, 1
      %p171 = scmp.eq.s32.totalorder %s18, 1
      %p172 = scmp.ne.s32.totalorder %s167, %s169
      %p173 = scmp.eq.s32.totalorder %s18, 0
      %p174 = por %p172, %p173
      %p175 = scmp.ne.s32.totalorder %s167, %s169
      %p176 = scmp.eq.s32.totalorder %s23, 1
      %p177 = por %p175, %p176
      %p178 = scmp.ne.s32.totalorder %s169, %s170
      %p179 = scmp.eq.s32.totalorder %s23, 0
      %p180 = por %p178, %p179
      %p181 = scmp.ne.s32.totalorder %s169, %s170
      %p182 = scmp.eq.s32.totalorder %s24, 1
      %p183 = por %p181, %p182
      %p185 = scmp.ne.s32.totalorder %s170, %s184
      %p186 = scmp.eq.s32.totalorder %s24, 0
      %p187 = por %p185, %p186
      %s189 = sadd.s32 %s188, 1
      %p192 = scmp.eq.s32.totalorder %s18, 1
      %p193 = scmp.ne.s32.totalorder %s188, %s190
      %p194 = scmp.eq.s32.totalorder %s18, 0
      %p195 = por %p193, %p194
      %p196 = scmp.ne.s32.totalorder %s188, %s190
      %p197 = scmp.eq.s32.totalorder %s23, 1
      %p198 = por %p196, %p197
      %p199 = scmp.ne.s32.totalorder %s190, %s191
      %p200 = scmp.eq.s32.totalorder %s23, 0
      %p201 = por %p199, %p200
      %p202 = scmp.ne.s32.totalorder %s190, %s191
      %p203 = scmp.eq.s32.totalorder %s24, 1
      %p204 = por %p202, %p203
      %p206 = scmp.ne.s32.totalorder %s191, %s205
      %p207 = scmp.eq.s32.totalorder %s24, 0
      %p208 = por %p206, %p207
      %s210 = sadd.s32 %s209, 1
      %p213 = scmp.eq.s32.totalorder %s18, 1
      %p214 = scmp.ne.s32.totalorder %s209, %s211
      %p215 = scmp.eq.s32.totalorder %s18, 0
      %p216 = por %p214, %p215
      %p217 = scmp.ne.s32.totalorder %s209, %s211
      %p218 = scmp.eq.s32.totalorder %s23, 1
      %p219 = por %p217, %p218
      %p220 = scmp.ne.s32.totalorder %s211, %s212
      %p221 = scmp.eq.s32.totalorder %s23, 0
      %p222 = por %p220, %p221
      %p223 = scmp.ne.s32.totalorder %s211, %s212
      %p224 = scmp.eq.s32.totalorder %s24, 1
      %p225 = por %p223, %p224
      %p227 = scmp.ne.s32.totalorder %s212, %s226
      %p228 = scmp.eq.s32.totalorder %s24, 0
      %p229 = por %p227, %p228
      %s230 = ssub.s32 %s18, %s25
      %p231 = scmp.eq.s32.totalorder %s230, 0
      %s233 = sadd.s32 %s232, 1
      %s234 = scalar_select %p231, %s232, %s233
      %p237 = pneg %p231
      %p238 = scmp.eq.s32.totalorder %s18, 1
      %p239 = por %p237, %p238
      %p240 = scmp.ne.s32.totalorder %s232, %s235
      %p241 = scmp.eq.s32.totalorder %s18, 0
      %p242 = por %p240, %p241
      %p243 = scmp.ne.s32.totalorder %s232, %s235
      %p244 = scmp.eq.s32.totalorder %s23, 1
      %p245 = por %p243, %p244
      %p246 = scmp.ne.s32.totalorder %s235, %s236
      %p247 = scmp.eq.s32.totalorder %s23, 0
      %p248 = por %p246, %p247
      %p249 = scmp.ne.s32.totalorder %s235, %s236
      %p250 = scmp.eq.s32.totalorder %s24, 1
      %p251 = por %p249, %p250
      %p253 = scmp.ne.s32.totalorder %s236, %s252
      %p254 = scmp.eq.s32.totalorder %s24, 0
      %p255 = por %p253, %p254
      %p256 = scmp.le.s32.totalorder 1, %s18
      %p257 = scmp.lt.s32.totalorder %s18, 3
      %p258 = pnand %p256, %p257
      %p259 = pneg %p258
      // Predicated region
      $region9: #{tpu_custom_call.1} parent=5 // pred_check
        _
      $region10: #{tpu_custom_call.1} parent=5 // pred_check_branch
        %261 = sbr.rel (%p258) target = $region12
      $region11: #{tpu_custom_call.1} parent=5 // pred_region
        %s262 = ssub.s32 %s18, 1
        // Predicated region
        $region13: #{tpu_custom_call.1} parent=11 // pred_check
          %p263 = pneg %p117
        $region14: #{tpu_custom_call.1} parent=11 // pred_check_branch
          %265 = sbr.rel (%p263) target = $region16
        $region15: #{tpu_custom_call.1} parent=11 // pred_region
          _
        $region16: #{tpu_custom_call.1} parent=11 // pred_fallthru
          _
        // Predicated region
        $region17: #{tpu_custom_call.1} parent=11 // pred_check
          %p266 = pneg %p138
        $region18: #{tpu_custom_call.1} parent=11 // pred_check_branch
          %268 = sbr.rel (%p266) target = $region20
        $region19: #{tpu_custom_call.1} parent=11 // pred_region
          _
        $region20: #{tpu_custom_call.1} parent=11 // pred_fallthru
          _
        // Predicated region
        $region21: #{tpu_custom_call.1} parent=11 // pred_check
          %p269 = pneg %p159
        $region22: #{tpu_custom_call.1} parent=11 // pred_check_branch
          %271 = sbr.rel (%p269) target = $region24
        $region23: #{tpu_custom_call.1} parent=11 // pred_region
          _
        $region24: #{tpu_custom_call.1} parent=11 // pred_fallthru
          _
        // Predicated region
        $region25: #{tpu_custom_call.1} parent=11 // pred_check
          %p272 = pneg %p180
        $region26: #{tpu_custom_call.1} parent=11 // pred_check_branch
          %274 = sbr.rel (%p272) target = $region28
        $region27: #{tpu_custom_call.1} parent=11 // pred_region
          _
        $region28: #{tpu_custom_call.1} parent=11 // pred_fallthru
          _
        // Predicated region
        $region29: #{tpu_custom_call.1} parent=11 // pred_check
          %p275 = pneg %p201
        $region30: #{tpu_custom_call.1} parent=11 // pred_check_branch
          %277 = sbr.rel (%p275) target = $region32
        $region31: #{tpu_custom_call.1} parent=11 // pred_region
          _
        $region32: #{tpu_custom_call.1} parent=11 // pred_fallthru
          _
        // Predicated region
        $region33: #{tpu_custom_call.1} parent=11 // pred_check
          %p278 = pneg %p222
        $region34: #{tpu_custom_call.1} parent=11 // pred_check_branch
          %280 = sbr.rel (%p278) target = $region36
        $region35: #{tpu_custom_call.1} parent=11 // pred_region
          _
        $region36: #{tpu_custom_call.1} parent=11 // pred_fallthru
          _
      $region12: #{tpu_custom_call.1} parent=5 // pred_fallthru
        _
      %p281 = scmp.lt.s32.totalorder %s18, 2
      // Predicated region
      $region37: #{tpu_custom_call.1} parent=5 // pred_check
        %p282 = pneg %p281
      $region38: #{tpu_custom_call.1} parent=5 // pred_check_branch
        %284 = sbr.rel (%p282) target = $region40
      $region39: #{tpu_custom_call.1} parent=5 // pred_region
        // Predicated region
        $region41: #{tpu_custom_call.1} parent=39 // pred_check
          %p285 = pneg %p38
        $region42: #{tpu_custom_call.1} parent=39 // pred_check_branch
          %287 = sbr.rel (%p285) target = $region44
        $region43: #{tpu_custom_call.1} parent=39 // pred_region
          %p288 = scmp.lt.s32.totalorder %s18, 1
          %s289 = scalar_select %p288, %s18, 1
          %s290 = smul.addr %s289, 16
          %s291 = smul.addr %s290, 8
          %s292 = scalar_lea.vmem %s0, %s291
        $region44: #{tpu_custom_call.1} parent=39 // pred_fallthru
          _
        // Predicated region
        $region45: #{tpu_custom_call.1} parent=39 // pred_check
          %p293 = pneg %p64
        $region46: #{tpu_custom_call.1} parent=39 // pred_check_branch
          %295 = sbr.rel (%p293) target = $region48
        $region47: #{tpu_custom_call.1} parent=39 // pred_region
          %p296 = scmp.lt.s32.totalorder %s18, 1
          %s297 = scalar_select %p296, %s18, 1
          %s298 = smul.addr %s297, 8
          %s299 = scalar_lea.vmem %s1, %s298
        $region48: #{tpu_custom_call.1} parent=39 // pred_fallthru
          _
        // Predicated region
        $region49: #{tpu_custom_call.1} parent=39 // pred_check
          %p300 = pneg %p90
        $region50: #{tpu_custom_call.1} parent=39 // pred_check_branch
          %302 = sbr.rel (%p300) target = $region52
        $region51: #{tpu_custom_call.1} parent=39 // pred_region
          %p303 = scmp.lt.s32.totalorder %s18, 1
          %s304 = scalar_select %p303, %s18, 1
          %s305 = smul.addr %s304, 8
          %s306 = scalar_lea.vmem %s2, %s305
        $region52: #{tpu_custom_call.1} parent=39 // pred_fallthru
          _
      $region40: #{tpu_custom_call.1} parent=5 // pred_fallthru
        _
      %p307 = scmp.le.s32.totalorder 1, %s18
      %p308 = scmp.lt.s32.totalorder %s18, 3
      %p309 = pnand %p307, %p308
      %p310 = pneg %p309
      // Predicated region
      $region53: #{tpu_custom_call.1} parent=5 // pred_check
        _
      $region54: #{tpu_custom_call.1} parent=5 // pred_check_branch
        %312 = sbr.rel (%p309) target = $region56
      $region55: #{tpu_custom_call.1} parent=5 // pred_region
        %s313 = ssub.s32 %s18, 1
        %p314 = scmp.lt.s32.totalorder %s23, 1
        %s315 = scalar_select %p314, %s23, 1
        %s316 = smul.addr %s315, 16
        %s317 = smul.addr %s316, 8
        %s318 = scalar_lea.vmem %s0, %s317
        %p319 = pneg %p44
        %p320 = pneg %p41
        %p321 = scmp.lt.s32.totalorder %s23, 1
        %s322 = scalar_select %p321, %s23, 1
        %s323 = smul.addr %s322, 8
        %s324 = scalar_lea.vmem %s1, %s323
        %p325 = pneg %p70
        %p326 = pneg %p67
        %p327 = scmp.lt.s32.totalorder %s23, 1
        %s328 = scalar_select %p327, %s23, 1
        %s329 = smul.addr %s328, 8
        %s330 = scalar_lea.vmem %s2, %s329
        %p331 = pneg %p96
        %p332 = pneg %p93
        %p333 = pneg %p117
        %p334 = pneg %p114
        %p335 = pneg %p138
        %p336 = pneg %p135
        %p337 = pneg %p159
        %p338 = pneg %p156
        %p339 = pneg %p180
        %p340 = pneg %p177
        %p341 = pneg %p201
        %p342 = pneg %p198
        %p343 = pneg %p222
        %p344 = pneg %p219
        %p345 = pneg %p248
        %p346 = pneg %p245
        %s347 = sand.u32 %s235, 1
        %s348 = scalar_lea.sflag [#allocation4], %s347
        %s349 = sand.u32 %s235, 1
        %s350 = smul.addr %s349, 8
        %s351 = scalar_lea.vmem [#allocation3], %s350
        %p352 = scmp.lt.s32.totalorder %s23, 1
        %s353 = scalar_select %p352, %s23, 1
        %s354 = smul.addr %s353, 16
        %s355 = smul.addr %s354, 8
        %s356 = scalar_lea.vmem %s0, %s355
        %p357 = scmp.lt.s32.totalorder %s23, 1
        %s358 = scalar_select %p357, %s23, 1
        %s359 = smul.addr %s358, 8
        %s360 = scalar_lea.vmem %s1, %s359
        %p361 = scmp.lt.s32.totalorder %s23, 1
        %s362 = scalar_select %p361, %s23, 1
        %s363 = smul.addr %s362, 8
        %s364 = scalar_lea.vmem %s2, %s363
        %v365 = vld [vmem:[%s356] sm:$0xff]
        %v366 = vld [vmem:[%s356 + $0x8] sm:$0xff]
        %v367 = vld [vmem:[%s356 + $0x10] sm:$0xff]
        %v368 = vld [vmem:[%s356 + $0x18] sm:$0xff]
        %v369 = vld [vmem:[%s356 + $0x20] sm:$0xff]
        %v370 = vld [vmem:[%s356 + $0x28] sm:$0xff]
        %v371 = vld [vmem:[%s356 + $0x30] sm:$0xff]
        %v372 = vld [vmem:[%s356 + $0x38] sm:$0xff]
        %v373 = vld [vmem:[%s356 + $0x40] sm:$0xff]
        %v374 = vld [vmem:[%s356 + $0x48] sm:$0xff]
        %v375 = vld [vmem:[%s356 + $0x50] sm:$0xff]
        %v376 = vld [vmem:[%s356 + $0x58] sm:$0xff]
        %v377 = vld [vmem:[%s356 + $0x60] sm:$0xff]
        %v378 = vld [vmem:[%s356 + $0x68] sm:$0xff]
        %v379 = vld [vmem:[%s356 + $0x70] sm:$0xff]
        %v380 = vld [vmem:[%s356 + $0x78] sm:$0xff]
        %v381 = vld [vmem:[%s364] sm:$0xff]
        %vm382 = vcmask 261120
        %v383 = vsel %vm382, %v365, 0.0
        %v384 = vsel %vm382, %v366, 0.0
        %v385 = vadd.f32 %v383, %v384
        %v386 = vsel %vm382, %v367, 0.0
        %v387 = vadd.f32 %v385, %v386
        %v388 = vsel %vm382, %v368, 0.0
        %v389 = vadd.f32 %v387, %v388
        %v390 = vsel %vm382, %v369, 0.0
        %v391 = vadd.f32 %v389, %v390
        %v392 = vsel %vm382, %v370, 0.0
        %v393 = vadd.f32 %v391, %v392
        %v394 = vsel %vm382, %v371, 0.0
        %v395 = vadd.f32 %v393, %v394
        %v396 = vsel %vm382, %v372, 0.0
        %v397 = vadd.f32 %v395, %v396
        %v398 = vsel %vm382, %v373, 0.0
        %v399 = vadd.f32 %v397, %v398
        %v400 = vsel %vm382, %v374, 0.0
        %v401 = vadd.f32 %v399, %v400
        %v402 = vsel %vm382, %v375, 0.0
        %v403 = vadd.f32 %v401, %v402
        %v404 = vsel %vm382, %v376, 0.0
        %v405 = vadd.f32 %v403, %v404
        %v406 = vsel %vm382, %v377, 0.0
        %v407 = vadd.f32 %v405, %v406
        %v408 = vsel %vm382, %v378, 0.0
        %v409 = vadd.f32 %v407, %v408
        %v410 = vsel %vm382, %v379, 0.0
        %v411 = vadd.f32 %v409, %v410
        %v412 = vsel %vm382, %v380, 0.0
        %v413 = vadd.f32 %v411, %v412
        %v414 = vrot.slane %v413, 4
        %v415 = vadd.f32 %v413, %v414
        %v416 = vrot.slane %v415, 2
        %v417 = vadd.f32 %v415, %v416
        %v418 = vrot.slane %v417, 1
        %v419 = vadd.f32 %v417, %v418
        %v420 = vmul.f32 %v419, 0.0625
        %v421 = vld [vmem:[%s3] sm:$0xff]
        %v422 = vld [vmem:[%s3 + $0x8] sm:$0xff]
        %v423 = vld [vmem:[%s3 + $0x10] sm:$0xff]
        %v424 = vld [vmem:[%s3 + $0x18] sm:$0xff]
        %v426 = vsel %vm382, %v420, 0
        %428 = vmatprep.subr.mxu0 0.0
        %429 = vmatpush1.msra.mxu0 %v421
        %430 = vmatprep.subr.mxu0 0.0
        %431 = vmatpush1.msra.mxu0 %v422
        %432 = vmatprep.subr.mxu0 0.0
        %433 = vmatpush1.msra.mxu0 %v423
        %434 = vmatprep.subr.mxu0 0.0
        %435 = vmatpush1.msra.mxu0 %v424
        %436 = vmatprep.subr.mxu0 0.0
        %437 = vmatpush1.msra.mxu0 0.0
        %438 = vmatprep.subr.mxu0 0.0
        %439 = vmatpush1.msra.mxu0 0.0
        %440 = vmatprep.subr.mxu0 0.0
        %441 = vmatpush1.msra.mxu0 0.0
        %442 = vmatprep.subr.mxu0 0.0
        %443 = vmatpush1.msra.mxu0 0.0
        %444 = vmatprep.subr.mxu0 0.0
        %445 = vmatpush1.msra.mxu0 0.0
        %446 = vmatprep.subr.mxu0 0.0
        %447 = vmatpush1.msra.mxu0 0.0
        %448 = vmatprep.subr.mxu0 0.0
        %449 = vmatpush1.msra.mxu0 0.0
        %450 = vmatprep.subr.mxu0 0.0
        %451 = vmatpush1.msra.mxu0 0.0
        %452 = vmatprep.subr.mxu0 0.0
        %453 = vmatpush1.msra.mxu0 0.0
        %454 = vmatprep.subr.mxu0 0.0
        %455 = vmatpush1.msra.mxu0 0.0
        %456 = vmatprep.subr.mxu0 0.0
        %457 = vmatpush1.msra.mxu0 0.0
        %458 = vmatprep.subr.mxu0 0.0
        %459 = vmatpush1.msra.mxu0 0.0
        %460 = vmatprep.subr.mxu0 0.0
        %461 = vmatpush1.msra.mxu0 0.0
        %462 = vmatprep.subr.mxu0 0.0
        %463 = vmatpush1.msra.mxu0 0.0
        %464 = vmatprep.subr.mxu0 0.0
        %465 = vmatpush1.msra.mxu0 0.0
        %466 = vmatprep.subr.mxu0 0.0
        %467 = vmatpush1.msra.mxu0 0.0
        %468 = vmatprep.subr.mxu0 0.0
        %469 = vmatpush1.msra.mxu0 0.0
        %470 = vmatprep.subr.mxu0 0.0
        %471 = vmatpush1.msra.mxu0 0.0
        %472 = vmatprep.subr.mxu0 0.0
        %473 = vmatpush1.msra.mxu0 0.0
        %474 = vmatprep.subr.mxu0 0.0
        %475 = vmatpush1.msra.mxu0 0.0
        %476 = vmatprep.subr.mxu0 0.0
        %477 = vmatpush1.msra.mxu0 0.0
        %478 = vmatprep.subr.mxu0 0.0
        %479 = vmatpush1.msra.mxu0 0.0
        %480 = vmatprep.subr.mxu0 0.0
        %481 = vmatpush1.msra.mxu0 0.0
        %482 = vmatprep.subr.mxu0 0.0
        %483 = vmatpush1.msra.mxu0 0.0
        %484 = vmatprep.subr.mxu0 0.0
        %485 = vmatpush1.msra.mxu0 0.0
        %486 = vmatprep.subr.mxu0 0.0
        %487 = vmatpush1.msra.mxu0 0.0
        %488 = vmatprep.subr.mxu0 0.0
        %489 = vmatpush1.msra.mxu0 0.0
        %490 = vmatprep.subr.mxu0 0.0
        %491 = vmatpush1.msra.mxu0 0.0
        %492 = vmatprep.mubr.f32.mxu0 0.0
        %493 = vmatmul.mubr.f32.gmra.mrb[0].mxu0 %v426
        %v494 = vpop.f32.mrb[0].mxu0
        %v495 = vadd.f32 0.0, %v494
        %v496 = vpop.f32.mrb[0].mxu0
        %497 = vdwg.mxu0
        %v498 = vlaneseq
        %v499 = vand.u32 %v498, 127
        %v500 = vld [vmem:[%s360] sm:$0xff]
        %501 = vset.pattern.permute.xlu0 0
        %502 = vperm.xlu0 %501, %v500
        %v503 = vpop.permute.xlu0 %502
        %vm504 = vcmp.eq.s32.totalorder %v499, %v503
        %v505 = vsel %vm504, 1, 0
        %v506 = vcvt.s32.f32 %v505
        %507 = vmatprep.subr.mxu0 0.0
        %508 = vmatpush1.msra.mxu0 %v365
        %509 = vmatprep.subr.mxu0 0.0
        %510 = vmatpush1.msra.mxu0 %v366
        %511 = vmatprep.subr.mxu0 0.0
        %512 = vmatpush1.msra.mxu0 %v367
        %513 = vmatprep.subr.mxu0 0.0
        %514 = vmatpush1.msra.mxu0 %v368
        %515 = vmatprep.subr.mxu0 0.0
        %516 = vmatpush1.msra.mxu0 %v369
        %517 = vmatprep.subr.mxu0 0.0
        %518 = vmatpush1.msra.mxu0 %v370
        %519 = vmatprep.subr.mxu0 0.0
        %520 = vmatpush1.msra.mxu0 %v371
        %521 = vmatprep.subr.mxu0 0.0
        %522 = vmatpush1.msra.mxu0 %v372
        %523 = vmatprep.subr.mxu0 0.0
        %524 = vmatpush1.msra.mxu0 %v373
        %525 = vmatprep.subr.mxu0 0.0
        %526 = vmatpush1.msra.mxu0 %v374
        %527 = vmatprep.subr.mxu0 0.0
        %528 = vmatpush1.msra.mxu0 %v375
        %529 = vmatprep.subr.mxu0 0.0
        %530 = vmatpush1.msra.mxu0 %v376
        %531 = vmatprep.subr.mxu0 0.0
        %532 = vmatpush1.msra.mxu0 %v377
        %533 = vmatprep.subr.mxu0 0.0
        %534 = vmatpush1.msra.mxu0 %v378
        %535 = vmatprep.subr.mxu0 0.0
        %536 = vmatpush1.msra.mxu0 %v379
        %537 = vmatprep.subr.mxu0 0.0
        %538 = vmatpush1.msra.mxu0 %v380
        %539 = vmatprep.subr.mxu0 0.0
        %540 = vmatpush1.msra.mxu0 0.0
        %541 = vmatprep.subr.mxu0 0.0
        %542 = vmatpush1.msra.mxu0 0.0
        %543 = vmatprep.subr.mxu0 0.0
        %544 = vmatpush1.msra.mxu0 0.0
        %545 = vmatprep.subr.mxu0 0.0
        %546 = vmatpush1.msra.mxu0 0.0
        %547 = vmatprep.subr.mxu0 0.0
        %548 = vmatpush1.msra.mxu0 0.0
        %549 = vmatprep.subr.mxu0 0.0
        %550 = vmatpush1.msra.mxu0 0.0
        %551 = vmatprep.subr.mxu0 0.0
        %552 = vmatpush1.msra.mxu0 0.0
        %553 = vmatprep.subr.mxu0 0.0
        %554 = vmatpush1.msra.mxu0 0.0
        %555 = vmatprep.subr.mxu0 0.0
        %556 = vmatpush1.msra.mxu0 0.0
        %557 = vmatprep.subr.mxu0 0.0
        %558 = vmatpush1.msra.mxu0 0.0
        %559 = vmatprep.subr.mxu0 0.0
        %560 = vmatpush1.msra.mxu0 0.0
        %561 = vmatprep.subr.mxu0 0.0
        %562 = vmatpush1.msra.mxu0 0.0
        %563 = vmatprep.subr.mxu0 0.0
        %564 = vmatpush1.msra.mxu0 0.0
        %565 = vmatprep.subr.mxu0 0.0
        %566 = vmatpush1.msra.mxu0 0.0
        %567 = vmatprep.subr.mxu0 0.0
        %568 = vmatpush1.msra.mxu0 0.0
        %569 = vmatprep.subr.mxu0 0.0
        %570 = vmatpush1.msra.mxu0 0.0
        %571 = vmatprep.mubr.f32.mxu0 0.0
        %572 = vmatmul.mubr.f32.gmra.mrb[0].mxu0 %v506
        %v573 = vpop.f32.mrb[0].mxu0
        %v574 = vadd.f32 0.0, %v573
        %v575 = vpop.f32.mrb[0].mxu0
        %576 = vdwg.mxu0
        %v577 = vld [vmem:[%s4] sm:$0xff]
        %v578 = vld [vmem:[%s4 + $0x8] sm:$0xff]
        %v579 = vld [vmem:[%s4 + $0x10] sm:$0xff]
        %v580 = vld [vmem:[%s4 + $0x18] sm:$0xff]
        %v582 = vsel %vm382, %v574, 0
        %584 = vmatprep.subr.mxu0 0.0
        %585 = vmatpush1.msra.mxu0 %v577
        %586 = vmatprep.subr.mxu0 0.0
        %587 = vmatpush1.msra.mxu0 %v578
        %588 = vmatprep.subr.mxu0 0.0
        %589 = vmatpush1.msra.mxu0 %v579
        %590 = vmatprep.subr.mxu0 0.0
        %591 = vmatpush1.msra.mxu0 %v580
        %592 = vmatprep.subr.mxu0 0.0
        %593 = vmatpush1.msra.mxu0 0.0
        %594 = vmatprep.subr.mxu0 0.0
        %595 = vmatpush1.msra.mxu0 0.0
        %596 = vmatprep.subr.mxu0 0.0
        %597 = vmatpush1.msra.mxu0 0.0
        %598 = vmatprep.subr.mxu0 0.0
        %599 = vmatpush1.msra.mxu0 0.0
        %600 = vmatprep.subr.mxu0 0.0
        %601 = vmatpush1.msra.mxu0 0.0
        %602 = vmatprep.subr.mxu0 0.0
        %603 = vmatpush1.msra.mxu0 0.0
        %604 = vmatprep.subr.mxu0 0.0
        %605 = vmatpush1.msra.mxu0 0.0
        %606 = vmatprep.subr.mxu0 0.0
        %607 = vmatpush1.msra.mxu0 0.0
        %608 = vmatprep.subr.mxu0 0.0
        %609 = vmatpush1.msra.mxu0 0.0
        %610 = vmatprep.subr.mxu0 0.0
        %611 = vmatpush1.msra.mxu0 0.0
        %612 = vmatprep.subr.mxu0 0.0
        %613 = vmatpush1.msra.mxu0 0.0
        %614 = vmatprep.subr.mxu0 0.0
        %615 = vmatpush1.msra.mxu0 0.0
        %616 = vmatprep.subr.mxu0 0.0
        %617 = vmatpush1.msra.mxu0 0.0
        %618 = vmatprep.subr.mxu0 0.0
        %619 = vmatpush1.msra.mxu0 0.0
        %620 = vmatprep.subr.mxu0 0.0
        %621 = vmatpush1.msra.mxu0 0.0
        %622 = vmatprep.subr.mxu0 0.0
        %623 = vmatpush1.msra.mxu0 0.0
        %624 = vmatprep.subr.mxu0 0.0
        %625 = vmatpush1.msra.mxu0 0.0
        %626 = vmatprep.subr.mxu0 0.0
        %627 = vmatpush1.msra.mxu0 0.0
        %628 = vmatprep.subr.mxu0 0.0
        %629 = vmatpush1.msra.mxu0 0.0
        %630 = vmatprep.subr.mxu0 0.0
        %631 = vmatpush1.msra.mxu0 0.0
        %632 = vmatprep.subr.mxu0 0.0
        %633 = vmatpush1.msra.mxu0 0.0
        %634 = vmatprep.subr.mxu0 0.0
        %635 = vmatpush1.msra.mxu0 0.0
        %636 = vmatprep.subr.mxu0 0.0
        %637 = vmatpush1.msra.mxu0 0.0
        %638 = vmatprep.subr.mxu0 0.0
        %639 = vmatpush1.msra.mxu0 0.0
        %640 = vmatprep.subr.mxu0 0.0
        %641 = vmatpush1.msra.mxu0 0.0
        %642 = vmatprep.subr.mxu0 0.0
        %643 = vmatpush1.msra.mxu0 0.0
        %644 = vmatprep.subr.mxu0 0.0
        %645 = vmatpush1.msra.mxu0 0.0
        %646 = vmatprep.subr.mxu0 0.0
        %647 = vmatpush1.msra.mxu0 0.0
        %648 = vmatprep.mubr.f32.mxu0 0.0
        %649 = vmatmul.mubr.f32.gmra.mrb[0].mxu0 %v582
        %v650 = vpop.f32.mrb[0].mxu0
        %v651 = vadd.f32 0.0, %v650
        %v652 = vpop.f32.mrb[0].mxu0
        %653 = vdwg.mxu0
        %v654 = vlaneseq
        %v655 = vshrl.u32 %v654, 7
        %v656 = vsub.s32 0, %v655
        %v657 = vrot.slane %v495, %v656
        %v658 = vadd.f32 %v651, %v657
        %v659 = vld [vmem:[%s5] sm:$0xff]
        %v660 = vld [vmem:[%s5 + $0x8] sm:$0xff]
        %v661 = vld [vmem:[%s5 + $0x10] sm:$0xff]
        %v662 = vld [vmem:[%s5 + $0x18] sm:$0xff]
        %v664 = vsel %vm382, %v365, 0
        %v667 = vsel %vm382, %v366, 0
        %v670 = vsel %vm382, %v367, 0
        %v673 = vsel %vm382, %v368, 0
        %v676 = vsel %vm382, %v369, 0
        %v679 = vsel %vm382, %v370, 0
        %v682 = vsel %vm382, %v371, 0
        %v685 = vsel %vm382, %v372, 0
        %v688 = vsel %vm382, %v373, 0
        %v691 = vsel %vm382, %v374, 0
        %v694 = vsel %vm382, %v375, 0
        %v697 = vsel %vm382, %v376, 0
        %v700 = vsel %vm382, %v377, 0
        %v703 = vsel %vm382, %v378, 0
        %v706 = vsel %vm382, %v379, 0
        %v709 = vsel %vm382, %v380, 0
        %711 = vmatprep.subr.mxu0 0.0
        %712 = vmatpush1.msra.mxu0 %v659
        %713 = vmatprep.subr.mxu0 0.0
        %714 = vmatpush1.msra.mxu0 %v660
        %715 = vmatprep.subr.mxu0 0.0
        %716 = vmatpush1.msra.mxu0 %v661
        %717 = vmatprep.subr.mxu0 0.0
        %718 = vmatpush1.msra.mxu0 %v662
        %719 = vmatprep.subr.mxu0 0.0
        %720 = vmatpush1.msra.mxu0 0.0
        %721 = vmatprep.subr.mxu0 0.0
        %722 = vmatpush1.msra.mxu0 0.0
        %723 = vmatprep.subr.mxu0 0.0
        %724 = vmatpush1.msra.mxu0 0.0
        %725 = vmatprep.subr.mxu0 0.0
        %726 = vmatpush1.msra.mxu0 0.0
        %727 = vmatprep.subr.mxu0 0.0
        %728 = vmatpush1.msra.mxu0 0.0
        %729 = vmatprep.subr.mxu0 0.0
        %730 = vmatpush1.msra.mxu0 0.0
        %731 = vmatprep.subr.mxu0 0.0
        %732 = vmatpush1.msra.mxu0 0.0
        %733 = vmatprep.subr.mxu0 0.0
        %734 = vmatpush1.msra.mxu0 0.0
        %735 = vmatprep.subr.mxu0 0.0
        %736 = vmatpush1.msra.mxu0 0.0
        %737 = vmatprep.subr.mxu0 0.0
        %738 = vmatpush1.msra.mxu0 0.0
        %739 = vmatprep.subr.mxu0 0.0
        %740 = vmatpush1.msra.mxu0 0.0
        %741 = vmatprep.subr.mxu0 0.0
        %742 = vmatpush1.msra.mxu0 0.0
        %743 = vmatprep.subr.mxu0 0.0
        %744 = vmatpush1.msra.mxu0 0.0
        %745 = vmatprep.subr.mxu0 0.0
        %746 = vmatpush1.msra.mxu0 0.0
        %747 = vmatprep.subr.mxu0 0.0
        %748 = vmatpush1.msra.mxu0 0.0
        %749 = vmatprep.subr.mxu0 0.0
        %750 = vmatpush1.msra.mxu0 0.0
        %751 = vmatprep.subr.mxu0 0.0
        %752 = vmatpush1.msra.mxu0 0.0
        %753 = vmatprep.subr.mxu0 0.0
        %754 = vmatpush1.msra.mxu0 0.0
        %755 = vmatprep.subr.mxu0 0.0
        %756 = vmatpush1.msra.mxu0 0.0
        %757 = vmatprep.subr.mxu0 0.0
        %758 = vmatpush1.msra.mxu0 0.0
        %759 = vmatprep.subr.mxu0 0.0
        %760 = vmatpush1.msra.mxu0 0.0
        %761 = vmatprep.subr.mxu0 0.0
        %762 = vmatpush1.msra.mxu0 0.0
        %763 = vmatprep.subr.mxu0 0.0
        %764 = vmatpush1.msra.mxu0 0.0
        %765 = vmatprep.subr.mxu0 0.0
        %766 = vmatpush1.msra.mxu0 0.0
        %767 = vmatprep.subr.mxu0 0.0
        %768 = vmatpush1.msra.mxu0 0.0
        %769 = vmatprep.subr.mxu0 0.0
        %770 = vmatpush1.msra.mxu0 0.0
        %771 = vmatprep.subr.mxu0 0.0
        %772 = vmatpush1.msra.mxu0 0.0
        %773 = vmatprep.subr.mxu0 0.0
        %774 = vmatpush1.msra.mxu0 0.0
        %775 = vmatprep.mubr.f32.mxu0 0.0
        %776 = vmatmul.mubr.f32.gmra.mrb[0].mxu0 %v664
        %v777 = vpop.f32.mrb[0].mxu0
        %v778 = vadd.f32 0.0, %v777
        %v779 = vpop.f32.mrb[0].mxu0
        %780 = vmatprep.mubr.f32.mxu0 0.0
        %781 = vmatmul.mubr.f32.gmra.mrb[0].mxu0 %v667
        %v782 = vpop.f32.mrb[0].mxu0
        %v783 = vadd.f32 0.0, %v782
        %v784 = vpop.f32.mrb[0].mxu0
        %785 = vmatprep.mubr.f32.mxu0 0.0
        %786 = vmatmul.mubr.f32.gmra.mrb[0].mxu0 %v670
        %v787 = vpop.f32.mrb[0].mxu0
        %v788 = vadd.f32 0.0, %v787
        %v789 = vpop.f32.mrb[0].mxu0
        %790 = vmatprep.mubr.f32.mxu0 0.0
        %791 = vmatmul.mubr.f32.gmra.mrb[0].mxu0 %v673
        %v792 = vpop.f32.mrb[0].mxu0
        %v793 = vadd.f32 0.0, %v792
        %v794 = vpop.f32.mrb[0].mxu0
        %795 = vmatprep.mubr.f32.mxu0 0.0
        %796 = vmatmul.mubr.f32.gmra.mrb[0].mxu0 %v676
        %v797 = vpop.f32.mrb[0].mxu0
        %v798 = vadd.f32 0.0, %v797
        %v799 = vpop.f32.mrb[0].mxu0
        %800 = vmatprep.mubr.f32.mxu0 0.0
        %801 = vmatmul.mubr.f32.gmra.mrb[0].mxu0 %v679
        %v802 = vpop.f32.mrb[0].mxu0
        %v803 = vadd.f32 0.0, %v802
        %v804 = vpop.f32.mrb[0].mxu0
        %805 = vmatprep.mubr.f32.mxu0 0.0
        %806 = vmatmul.mubr.f32.gmra.mrb[0].mxu0 %v682
        %v807 = vpop.f32.mrb[0].mxu0
        %v808 = vadd.f32 0.0, %v807
        %v809 = vpop.f32.mrb[0].mxu0
        %810 = vmatprep.mubr.f32.mxu0 0.0
        %811 = vmatmul.mubr.f32.gmra.mrb[0].mxu0 %v685
        %v812 = vpop.f32.mrb[0].mxu0
        %v813 = vadd.f32 0.0, %v812
        %v814 = vpop.f32.mrb[0].mxu0
        %815 = vmatprep.mubr.f32.mxu0 0.0
        %816 = vmatmul.mubr.f32.gmra.mrb[0].mxu0 %v688
        %v817 = vpop.f32.mrb[0].mxu0
        %v818 = vadd.f32 0.0, %v817
        %v819 = vpop.f32.mrb[0].mxu0
        %820 = vmatprep.mubr.f32.mxu0 0.0
        %821 = vmatmul.mubr.f32.gmra.mrb[0].mxu0 %v691
        %v822 = vpop.f32.mrb[0].mxu0
        %v823 = vadd.f32 0.0, %v822
        %v824 = vpop.f32.mrb[0].mxu0
        %825 = vmatprep.mubr.f32.mxu0 0.0
        %826 = vmatmul.mubr.f32.gmra.mrb[0].mxu0 %v694
        %v827 = vpop.f32.mrb[0].mxu0
        %v828 = vadd.f32 0.0, %v827
        %v829 = vpop.f32.mrb[0].mxu0
        %830 = vmatprep.mubr.f32.mxu0 0.0
        %831 = vmatmul.mubr.f32.gmra.mrb[0].mxu0 %v697
        %v832 = vpop.f32.mrb[0].mxu0
        %v833 = vadd.f32 0.0, %v832
        %v834 = vpop.f32.mrb[0].mxu0
        %835 = vmatprep.mubr.f32.mxu0 0.0
        %836 = vmatmul.mubr.f32.gmra.mrb[0].mxu0 %v700
        %v837 = vpop.f32.mrb[0].mxu0
        %v838 = vadd.f32 0.0, %v837
        %v839 = vpop.f32.mrb[0].mxu0
        %840 = vmatprep.mubr.f32.mxu0 0.0
        %841 = vmatmul.mubr.f32.gmra.mrb[0].mxu0 %v703
        %v842 = vpop.f32.mrb[0].mxu0
        %v843 = vadd.f32 0.0, %v842
        %v844 = vpop.f32.mrb[0].mxu0
        %845 = vmatprep.mubr.f32.mxu0 0.0
        %846 = vmatmul.mubr.f32.gmra.mrb[0].mxu0 %v706
        %v847 = vpop.f32.mrb[0].mxu0
        %v848 = vadd.f32 0.0, %v847
        %v849 = vpop.f32.mrb[0].mxu0
        %850 = vmatprep.mubr.f32.mxu0 0.0
        %851 = vmatmul.mubr.f32.gmra.mrb[0].mxu0 %v709
        %v852 = vpop.f32.mrb[0].mxu0
        %v853 = vadd.f32 0.0, %v852
        %v854 = vpop.f32.mrb[0].mxu0
        %855 = vdwg.mxu0
        %v856 = vld [vmem:[%s6] sm:$0xff]
        %v857 = vld [vmem:[%s6 + $0x8] sm:$0xff]
        %v858 = vld [vmem:[%s6 + $0x10] sm:$0xff]
        %v859 = vld [vmem:[%s6 + $0x18] sm:$0xff]
        %860 = vmatprep.subr.mxu0 0.0
        %861 = vmatpush1.msra.mxu0 %v856
        %862 = vmatprep.subr.mxu0 0.0
        %863 = vmatpush1.msra.mxu0 %v857
        %864 = vmatprep.subr.mxu0 0.0
        %865 = vmatpush1.msra.mxu0 %v858
        %866 = vmatprep.subr.mxu0 0.0
        %867 = vmatpush1.msra.mxu0 %v859
        %868 = vmatprep.subr.mxu0 0.0
        %869 = vmatpush1.msra.mxu0 0.0
        %870 = vmatprep.subr.mxu0 0.0
        %871 = vmatpush1.msra.mxu0 0.0
        %872 = vmatprep.subr.mxu0 0.0
        %873 = vmatpush1.msra.mxu0 0.0
        %874 = vmatprep.subr.mxu0 0.0
        %875 = vmatpush1.msra.mxu0 0.0
        %876 = vmatprep.subr.mxu0 0.0
        %877 = vmatpush1.msra.mxu0 0.0
        %878 = vmatprep.subr.mxu0 0.0
        %879 = vmatpush1.msra.mxu0 0.0
        %880 = vmatprep.subr.mxu0 0.0
        %881 = vmatpush1.msra.mxu0 0.0
        %882 = vmatprep.subr.mxu0 0.0
        %883 = vmatpush1.msra.mxu0 0.0
        %884 = vmatprep.subr.mxu0 0.0
        %885 = vmatpush1.msra.mxu0 0.0
        %886 = vmatprep.subr.mxu0 0.0
        %887 = vmatpush1.msra.mxu0 0.0
        %888 = vmatprep.subr.mxu0 0.0
        %889 = vmatpush1.msra.mxu0 0.0
        %890 = vmatprep.subr.mxu0 0.0
        %891 = vmatpush1.msra.mxu0 0.0
        %892 = vmatprep.subr.mxu0 0.0
        %893 = vmatpush1.msra.mxu0 0.0
        %894 = vmatprep.subr.mxu0 0.0
        %895 = vmatpush1.msra.mxu0 0.0
        %896 = vmatprep.subr.mxu0 0.0
        %897 = vmatpush1.msra.mxu0 0.0
        %898 = vmatprep.subr.mxu0 0.0
        %899 = vmatpush1.msra.mxu0 0.0
        %900 = vmatprep.subr.mxu0 0.0
        %901 = vmatpush1.msra.mxu0 0.0
        %902 = vmatprep.subr.mxu0 0.0
        %903 = vmatpush1.msra.mxu0 0.0
        %904 = vmatprep.subr.mxu0 0.0
        %905 = vmatpush1.msra.mxu0 0.0
        %906 = vmatprep.subr.mxu0 0.0
        %907 = vmatpush1.msra.mxu0 0.0
        %908 = vmatprep.subr.mxu0 0.0
        %909 = vmatpush1.msra.mxu0 0.0
        %910 = vmatprep.subr.mxu0 0.0
        %911 = vmatpush1.msra.mxu0 0.0
        %912 = vmatprep.subr.mxu0 0.0
        %913 = vmatpush1.msra.mxu0 0.0
        %914 = vmatprep.subr.mxu0 0.0
        %915 = vmatpush1.msra.mxu0 0.0
        %916 = vmatprep.subr.mxu0 0.0
        %917 = vmatpush1.msra.mxu0 0.0
        %918 = vmatprep.subr.mxu0 0.0
        %919 = vmatpush1.msra.mxu0 0.0
        %920 = vmatprep.subr.mxu0 0.0
        %921 = vmatpush1.msra.mxu0 0.0
        %922 = vmatprep.subr.mxu0 0.0
        %923 = vmatpush1.msra.mxu0 0.0
        %924 = vmatprep.mubr.f32.mxu0 0.0
        %925 = vmatmul.mubr.f32.gmra.mrb[0].mxu0 %v664
        %v926 = vpop.f32.mrb[0].mxu0
        %v927 = vadd.f32 0.0, %v926
        %v928 = vpop.f32.mrb[0].mxu0
        %929 = vmatprep.mubr.f32.mxu0 0.0
        %930 = vmatmul.mubr.f32.gmra.mrb[0].mxu0 %v667
        %v931 = vpop.f32.mrb[0].mxu0
        %v932 = vadd.f32 0.0, %v931
        %v933 = vpop.f32.mrb[0].mxu0
        %934 = vmatprep.mubr.f32.mxu0 0.0
        %935 = vmatmul.mubr.f32.gmra.mrb[0].mxu0 %v670
        %v936 = vpop.f32.mrb[0].mxu0
        %v937 = vadd.f32 0.0, %v936
        %v938 = vpop.f32.mrb[0].mxu0
        %939 = vmatprep.mubr.f32.mxu0 0.0
        %940 = vmatmul.mubr.f32.gmra.mrb[0].mxu0 %v673
        %v941 = vpop.f32.mrb[0].mxu0
        %v942 = vadd.f32 0.0, %v941
        %v943 = vpop.f32.mrb[0].mxu0
        %944 = vmatprep.mubr.f32.mxu0 0.0
        %945 = vmatmul.mubr.f32.gmra.mrb[0].mxu0 %v676
        %v946 = vpop.f32.mrb[0].mxu0
        %v947 = vadd.f32 0.0, %v946
        %v948 = vpop.f32.mrb[0].mxu0
        %949 = vmatprep.mubr.f32.mxu0 0.0
        %950 = vmatmul.mubr.f32.gmra.mrb[0].mxu0 %v679
        %v951 = vpop.f32.mrb[0].mxu0
        %v952 = vadd.f32 0.0, %v951
        %v953 = vpop.f32.mrb[0].mxu0
        %954 = vmatprep.mubr.f32.mxu0 0.0
        %955 = vmatmul.mubr.f32.gmra.mrb[0].mxu0 %v682
        %v956 = vpop.f32.mrb[0].mxu0
        %v957 = vadd.f32 0.0, %v956
        %v958 = vpop.f32.mrb[0].mxu0
        %959 = vmatprep.mubr.f32.mxu0 0.0
        %960 = vmatmul.mubr.f32.gmra.mrb[0].mxu0 %v685
        %v961 = vpop.f32.mrb[0].mxu0
        %v962 = vadd.f32 0.0, %v961
        %v963 = vpop.f32.mrb[0].mxu0
        %964 = vmatprep.mubr.f32.mxu0 0.0
        %965 = vmatmul.mubr.f32.gmra.mrb[0].mxu0 %v688
        %v966 = vpop.f32.mrb[0].mxu0
        %v967 = vadd.f32 0.0, %v966
        %v968 = vpop.f32.mrb[0].mxu0
        %969 = vmatprep.mubr.f32.mxu0 0.0
        %970 = vmatmul.mubr.f32.gmra.mrb[0].mxu0 %v691
        %v971 = vpop.f32.mrb[0].mxu0
        %v972 = vadd.f32 0.0, %v971
        %v973 = vpop.f32.mrb[0].mxu0
        %974 = vmatprep.mubr.f32.mxu0 0.0
        %975 = vmatmul.mubr.f32.gmra.mrb[0].mxu0 %v694
        %v976 = vpop.f32.mrb[0].mxu0
        %v977 = vadd.f32 0.0, %v976
        %v978 = vpop.f32.mrb[0].mxu0
        %979 = vmatprep.mubr.f32.mxu0 0.0
        %980 = vmatmul.mubr.f32.gmra.mrb[0].mxu0 %v697
        %v981 = vpop.f32.mrb[0].mxu0
        %v982 = vadd.f32 0.0, %v981
        %v983 = vpop.f32.mrb[0].mxu0
        %984 = vmatprep.mubr.f32.mxu0 0.0
        %985 = vmatmul.mubr.f32.gmra.mrb[0].mxu0 %v700
        %v986 = vpop.f32.mrb[0].mxu0
        %v987 = vadd.f32 0.0, %v986
        %v988 = vpop.f32.mrb[0].mxu0
        %989 = vmatprep.mubr.f32.mxu0 0.0
        %990 = vmatmul.mubr.f32.gmra.mrb[0].mxu0 %v703
        %v991 = vpop.f32.mrb[0].mxu0
        %v992 = vadd.f32 0.0, %v991
        %v993 = vpop.f32.mrb[0].mxu0
        %994 = vmatprep.mubr.f32.mxu0 0.0
        %995 = vmatmul.mubr.f32.gmra.mrb[0].mxu0 %v706
        %v996 = vpop.f32.mrb[0].mxu0
        %v997 = vadd.f32 0.0, %v996
        %v998 = vpop.f32.mrb[0].mxu0
        %999 = vmatprep.mubr.f32.mxu0 0.0
        %1000 = vmatmul.mubr.f32.gmra.mrb[0].mxu0 %v709
        %v1001 = vpop.f32.mrb[0].mxu0
        %v1002 = vadd.f32 0.0, %v1001
        %v1003 = vpop.f32.mrb[0].mxu0
        %1004 = vdwg.mxu0
        %vm1005 = vcmask 31744
        %v1007 = vsel %vm1005, %v658, 0
        %v1010 = vsel %vm1005, %v778, 0
        %v1013 = vsel %vm1005, %v783, 0
        %v1016 = vsel %vm1005, %v788, 0
        %v1019 = vsel %vm1005, %v793, 0
        %v1022 = vsel %vm1005, %v798, 0
        %v1025 = vsel %vm1005, %v803, 0
        %v1028 = vsel %vm1005, %v808, 0
        %v1031 = vsel %vm1005, %v813, 0
        %v1034 = vsel %vm1005, %v818, 0
        %v1037 = vsel %vm1005, %v823, 0
        %v1040 = vsel %vm1005, %v828, 0
        %v1043 = vsel %vm1005, %v833, 0
        %v1046 = vsel %vm1005, %v838, 0
        %v1049 = vsel %vm1005, %v843, 0
        %v1052 = vsel %vm1005, %v848, 0
        %v1055 = vsel %vm1005, %v853, 0
        %1057 = vmatprep.subr.mxu0 0.0
        %1058 = vmatpush1.xpose.msra.mxu0 %v1010
        %1059 = vmatprep.subr.mxu0 0.0
        %1060 = vmatpush1.xpose.msra.mxu0 %v1013
        %1061 = vmatprep.subr.mxu0 0.0
        %1062 = vmatpush1.xpose.msra.mxu0 %v1016
        %1063 = vmatprep.subr.mxu0 0.0
        %1064 = vmatpush1.xpose.msra.mxu0 %v1019
        %1065 = vmatprep.subr.mxu0 0.0
        %1066 = vmatpush1.xpose.msra.mxu0 %v1022
        %1067 = vmatprep.subr.mxu0 0.0
        %1068 = vmatpush1.xpose.msra.mxu0 %v1025
        %1069 = vmatprep.subr.mxu0 0.0
        %1070 = vmatpush1.xpose.msra.mxu0 %v1028
        %1071 = vmatprep.subr.mxu0 0.0
        %1072 = vmatpush1.xpose.msra.mxu0 %v1031
        %1073 = vmatprep.subr.mxu0 0.0
        %1074 = vmatpush1.xpose.msra.mxu0 %v1034
        %1075 = vmatprep.subr.mxu0 0.0
        %1076 = vmatpush1.xpose.msra.mxu0 %v1037
        %1077 = vmatprep.subr.mxu0 0.0
        %1078 = vmatpush1.xpose.msra.mxu0 %v1040
        %1079 = vmatprep.subr.mxu0 0.0
        %1080 = vmatpush1.xpose.msra.mxu0 %v1043
        %1081 = vmatprep.subr.mxu0 0.0
        %1082 = vmatpush1.xpose.msra.mxu0 %v1046
        %1083 = vmatprep.subr.mxu0 0.0
        %1084 = vmatpush1.xpose.msra.mxu0 %v1049
        %1085 = vmatprep.subr.mxu0 0.0
        %1086 = vmatpush1.xpose.msra.mxu0 %v1052
        %1087 = vmatprep.subr.mxu0 0.0
        %1088 = vmatpush1.xpose.msra.mxu0 %v1055
        %1089 = vmatprep.subr.mxu0 0.0
        %1090 = vmatpush1.xpose.msra.mxu0 0.0
        %1091 = vmatprep.subr.mxu0 0.0
        %1092 = vmatpush1.xpose.msra.mxu0 0.0
        %1093 = vmatprep.subr.mxu0 0.0
        %1094 = vmatpush1.xpose.msra.mxu0 0.0
        %1095 = vmatprep.subr.mxu0 0.0
        %1096 = vmatpush1.xpose.msra.mxu0 0.0
        %1097 = vmatprep.subr.mxu0 0.0
        %1098 = vmatpush1.xpose.msra.mxu0 0.0
        %1099 = vmatprep.subr.mxu0 0.0
        %1100 = vmatpush1.xpose.msra.mxu0 0.0
        %1101 = vmatprep.subr.mxu0 0.0
        %1102 = vmatpush1.xpose.msra.mxu0 0.0
        %1103 = vmatprep.subr.mxu0 0.0
        %1104 = vmatpush1.xpose.msra.mxu0 0.0
        %1105 = vmatprep.subr.mxu0 0.0
        %1106 = vmatpush1.xpose.msra.mxu0 0.0
        %1107 = vmatprep.subr.mxu0 0.0
        %1108 = vmatpush1.xpose.msra.mxu0 0.0
        %1109 = vmatprep.subr.mxu0 0.0
        %1110 = vmatpush1.xpose.msra.mxu0 0.0
        %1111 = vmatprep.subr.mxu0 0.0
        %1112 = vmatpush1.xpose.msra.mxu0 0.0
        %1113 = vmatprep.subr.mxu0 0.0
        %1114 = vmatpush1.xpose.msra.mxu0 0.0
        %1115 = vmatprep.subr.mxu0 0.0
        %1116 = vmatpush1.xpose.msra.mxu0 0.0
        %1117 = vmatprep.subr.mxu0 0.0
        %1118 = vmatpush1.xpose.msra.mxu0 0.0
        %1119 = vmatprep.subr.mxu0 0.0
        %1120 = vmatpush1.xpose.msra.mxu0 0.0
        %1121 = vmatprep.mubr.f32.mxu0 0.0
        %1122 = vmatmul.mubr.f32.gmra.mrb[0].mxu0 %v1007
        %v1123 = vpop.f32.mrb[0].mxu0
        %v1124 = vadd.f32 0.0, %v1123
        %v1125 = vpop.f32.mrb[0].mxu0
        %1126 = vdwg.mxu0
        %v1127 = vmul.f32 %v1124, 0.5
        %v1128 = vadd.f32 %v1127, %v381
        %1129 = vmax.xlane.f32.xlu0 %v1128
        %v1130 = vpop.xlane.xlu0 %1129
        %v1131 = vsub.f32 %v1128, %v1130
        %v1132 = vmul.f32 %v1131, 1.442695
        %v1133 = vpow.pop %v1132
        %1134 = vadd.xlane.f32.xlu0 %v1133
        %v1135 = vpop.xlane.xlu0 %1134
        %v1136 = vrcp.pop %v1135
        %v1137 = vmul.f32 %v1133, %v1136
        %1138 = vmatprep.subr.mxu0 0.0
        %1139 = vmatpush1.msra.mxu0 %v927
        %1140 = vmatprep.subr.mxu0 0.0
        %1141 = vmatpush1.msra.mxu0 %v932
        %1142 = vmatprep.subr.mxu0 0.0
        %1143 = vmatpush1.msra.mxu0 %v937
        %1144 = vmatprep.subr.mxu0 0.0
        %1145 = vmatpush1.msra.mxu0 %v942
        %1146 = vmatprep.subr.mxu0 0.0
        %1147 = vmatpush1.msra.mxu0 %v947
        %1148 = vmatprep.subr.mxu0 0.0
        %1149 = vmatpush1.msra.mxu0 %v952
        %1150 = vmatprep.subr.mxu0 0.0
        %1151 = vmatpush1.msra.mxu0 %v957
        %1152 = vmatprep.subr.mxu0 0.0
        %1153 = vmatpush1.msra.mxu0 %v962
        %1154 = vmatprep.subr.mxu0 0.0
        %1155 = vmatpush1.msra.mxu0 %v967
        %1156 = vmatprep.subr.mxu0 0.0
        %1157 = vmatpush1.msra.mxu0 %v972
        %1158 = vmatprep.subr.mxu0 0.0
        %1159 = vmatpush1.msra.mxu0 %v977
        %1160 = vmatprep.subr.mxu0 0.0
        %1161 = vmatpush1.msra.mxu0 %v982
        %1162 = vmatprep.subr.mxu0 0.0
        %1163 = vmatpush1.msra.mxu0 %v987
        %1164 = vmatprep.subr.mxu0 0.0
        %1165 = vmatpush1.msra.mxu0 %v992
        %1166 = vmatprep.subr.mxu0 0.0
        %1167 = vmatpush1.msra.mxu0 %v997
        %1168 = vmatprep.subr.mxu0 0.0
        %1169 = vmatpush1.msra.mxu0 %v1002
        %1170 = vmatprep.subr.mxu0 0.0
        %1171 = vmatpush1.msra.mxu0 0.0
        %1172 = vmatprep.subr.mxu0 0.0
        %1173 = vmatpush1.msra.mxu0 0.0
        %1174 = vmatprep.subr.mxu0 0.0
        %1175 = vmatpush1.msra.mxu0 0.0
        %1176 = vmatprep.subr.mxu0 0.0
        %1177 = vmatpush1.msra.mxu0 0.0
        %1178 = vmatprep.subr.mxu0 0.0
        %1179 = vmatpush1.msra.mxu0 0.0
        %1180 = vmatprep.subr.mxu0 0.0
        %1181 = vmatpush1.msra.mxu0 0.0
        %1182 = vmatprep.subr.mxu0 0.0
        %1183 = vmatpush1.msra.mxu0 0.0
        %1184 = vmatprep.subr.mxu0 0.0
        %1185 = vmatpush1.msra.mxu0 0.0
        %1186 = vmatprep.subr.mxu0 0.0
        %1187 = vmatpush1.msra.mxu0 0.0
        %1188 = vmatprep.subr.mxu0 0.0
        %1189 = vmatpush1.msra.mxu0 0.0
        %1190 = vmatprep.subr.mxu0 0.0
        %1191 = vmatpush1.msra.mxu0 0.0
        %1192 = vmatprep.subr.mxu0 0.0
        %1193 = vmatpush1.msra.mxu0 0.0
        %1194 = vmatprep.subr.mxu0 0.0
        %1195 = vmatpush1.msra.mxu0 0.0
        %1196 = vmatprep.subr.mxu0 0.0
        %1197 = vmatpush1.msra.mxu0 0.0
        %1198 = vmatprep.subr.mxu0 0.0
        %1199 = vmatpush1.msra.mxu0 0.0
        %1200 = vmatprep.subr.mxu0 0.0
        %1201 = vmatpush1.msra.mxu0 0.0
        %1202 = vmatprep.mubr.f32.mxu0 0.0
        %1203 = vmatmul.mubr.f32.gmra.mrb[0].mxu0 %v1137
        %v1204 = vpop.f32.mrb[0].mxu0
        %v1205 = vadd.f32 0.0, %v1204
        %v1206 = vpop.f32.mrb[0].mxu0
        %1207 = vdwg.mxu0
        %1208 = vst.msk [vmem:[#allocation2] sm:$0xff] %vm1005, %v1205
        %1209 = vrot.lane.b32.xlu0 %v658, 124
        %v1210 = vpop.permute.xlu0 %1209
        %1211 = vrot.lane.b32.xlu0 %v778, 124
        %v1212 = vpop.permute.xlu0 %1211
        %1213 = vrot.lane.b32.xlu0 %v783, 124
        %v1214 = vpop.permute.xlu0 %1213
        %1215 = vrot.lane.b32.xlu0 %v788, 124
        %v1216 = vpop.permute.xlu0 %1215
        %1217 = vrot.lane.b32.xlu0 %v793, 124
        %v1218 = vpop.permute.xlu0 %1217
        %1219 = vrot.lane.b32.xlu0 %v798, 124
        %v1220 = vpop.permute.xlu0 %1219
        %1221 = vrot.lane.b32.xlu0 %v803, 124
        %v1222 = vpop.permute.xlu0 %1221
        %1223 = vrot.lane.b32.xlu0 %v808, 124
        %v1224 = vpop.permute.xlu0 %1223
        %1225 = vrot.lane.b32.xlu0 %v813, 124
        %v1226 = vpop.permute.xlu0 %1225
        %1227 = vrot.lane.b32.xlu0 %v818, 124
        %v1228 = vpop.permute.xlu0 %1227
        %1229 = vrot.lane.b32.xlu0 %v823, 124
        %v1230 = vpop.permute.xlu0 %1229
        %1231 = vrot.lane.b32.xlu0 %v828, 124
        %v1232 = vpop.permute.xlu0 %1231
        %1233 = vrot.lane.b32.xlu0 %v833, 124
        %v1234 = vpop.permute.xlu0 %1233
        %1235 = vrot.lane.b32.xlu0 %v838, 124
        %v1236 = vpop.permute.xlu0 %1235
        %1237 = vrot.lane.b32.xlu0 %v843, 124
        %v1238 = vpop.permute.xlu0 %1237
        %1239 = vrot.lane.b32.xlu0 %v848, 124
        %v1240 = vpop.permute.xlu0 %1239
        %1241 = vrot.lane.b32.xlu0 %v853, 124
        %v1242 = vpop.permute.xlu0 %1241
        %v1243 = vsel %vm1005, %v1210, 0
        %v1245 = vsel %vm1005, %v1212, 0
        %v1247 = vsel %vm1005, %v1214, 0
        %v1249 = vsel %vm1005, %v1216, 0
        %v1251 = vsel %vm1005, %v1218, 0
        %v1253 = vsel %vm1005, %v1220, 0
        %v1255 = vsel %vm1005, %v1222, 0
        %v1257 = vsel %vm1005, %v1224, 0
        %v1259 = vsel %vm1005, %v1226, 0
        %v1261 = vsel %vm1005, %v1228, 0
        %v1263 = vsel %vm1005, %v1230, 0
        %v1265 = vsel %vm1005, %v1232, 0
        %v1267 = vsel %vm1005, %v1234, 0
        %v1269 = vsel %vm1005, %v1236, 0
        %v1271 = vsel %vm1005, %v1238, 0
        %v1273 = vsel %vm1005, %v1240, 0
        %v1275 = vsel %vm1005, %v1242, 0
        %1277 = vmatprep.subr.mxu0 0.0
        %1278 = vmatpush1.xpose.msra.mxu0 %v1245
        %1279 = vmatprep.subr.mxu0 0.0
        %1280 = vmatpush1.xpose.msra.mxu0 %v1247
        %1281 = vmatprep.subr.mxu0 0.0
        %1282 = vmatpush1.xpose.msra.mxu0 %v1249
        %1283 = vmatprep.subr.mxu0 0.0
        %1284 = vmatpush1.xpose.msra.mxu0 %v1251
        %1285 = vmatprep.subr.mxu0 0.0
        %1286 = vmatpush1.xpose.msra.mxu0 %v1253
        %1287 = vmatprep.subr.mxu0 0.0
        %1288 = vmatpush1.xpose.msra.mxu0 %v1255
        %1289 = vmatprep.subr.mxu0 0.0
        %1290 = vmatpush1.xpose.msra.mxu0 %v1257
        %1291 = vmatprep.subr.mxu0 0.0
        %1292 = vmatpush1.xpose.msra.mxu0 %v1259
        %1293 = vmatprep.subr.mxu0 0.0
        %1294 = vmatpush1.xpose.msra.mxu0 %v1261
        %1295 = vmatprep.subr.mxu0 0.0
        %1296 = vmatpush1.xpose.msra.mxu0 %v1263
        %1297 = vmatprep.subr.mxu0 0.0
        %1298 = vmatpush1.xpose.msra.mxu0 %v1265
        %1299 = vmatprep.subr.mxu0 0.0
        %1300 = vmatpush1.xpose.msra.mxu0 %v1267
        %1301 = vmatprep.subr.mxu0 0.0
        %1302 = vmatpush1.xpose.msra.mxu0 %v1269
        %1303 = vmatprep.subr.mxu0 0.0
        %1304 = vmatpush1.xpose.msra.mxu0 %v1271
        %1305 = vmatprep.subr.mxu0 0.0
        %1306 = vmatpush1.xpose.msra.mxu0 %v1273
        %1307 = vmatprep.subr.mxu0 0.0
        %1308 = vmatpush1.xpose.msra.mxu0 %v1275
        %1309 = vmatprep.subr.mxu0 0.0
        %1310 = vmatpush1.xpose.msra.mxu0 0.0
        %1311 = vmatprep.subr.mxu0 0.0
        %1312 = vmatpush1.xpose.msra.mxu0 0.0
        %1313 = vmatprep.subr.mxu0 0.0
        %1314 = vmatpush1.xpose.msra.mxu0 0.0
        %1315 = vmatprep.subr.mxu0 0.0
        %1316 = vmatpush1.xpose.msra.mxu0 0.0
        %1317 = vmatprep.subr.mxu0 0.0
        %1318 = vmatpush1.xpose.msra.mxu0 0.0
        %1319 = vmatprep.subr.mxu0 0.0
        %1320 = vmatpush1.xpose.msra.mxu0 0.0
        %1321 = vmatprep.subr.mxu0 0.0
        %1322 = vmatpush1.xpose.msra.mxu0 0.0
        %1323 = vmatprep.subr.mxu0 0.0
        %1324 = vmatpush1.xpose.msra.mxu0 0.0
        %1325 = vmatprep.subr.mxu0 0.0
        %1326 = vmatpush1.xpose.msra.mxu0 0.0
        %1327 = vmatprep.subr.mxu0 0.0
        %1328 = vmatpush1.xpose.msra.mxu0 0.0
        %1329 = vmatprep.subr.mxu0 0.0
        %1330 = vmatpush1.xpose.msra.mxu0 0.0
        %1331 = vmatprep.subr.mxu0 0.0
        %1332 = vmatpush1.xpose.msra.mxu0 0.0
        %1333 = vmatprep.subr.mxu0 0.0
        %1334 = vmatpush1.xpose.msra.mxu0 0.0
        %1335 = vmatprep.subr.mxu0 0.0
        %1336 = vmatpush1.xpose.msra.mxu0 0.0
        %1337 = vmatprep.subr.mxu0 0.0
        %1338 = vmatpush1.xpose.msra.mxu0 0.0
        %1339 = vmatprep.subr.mxu0 0.0
        %1340 = vmatpush1.xpose.msra.mxu0 0.0
        %1341 = vmatprep.mubr.f32.mxu0 0.0
        %1342 = vmatmul.mubr.f32.gmra.mrb[0].mxu0 %v1243
        %v1343 = vpop.f32.mrb[0].mxu0
        %v1344 = vadd.f32 0.0, %v1343
        %v1345 = vpop.f32.mrb[0].mxu0
        %1346 = vdwg.mxu0
        %v1347 = vmul.f32 %v1344, 0.5
        %v1348 = vadd.f32 %v1347, %v381
        %1349 = vmax.xlane.f32.xlu0 %v1348
        %v1350 = vpop.xlane.xlu0 %1349
        %v1351 = vsub.f32 %v1348, %v1350
        %v1352 = vmul.f32 %v1351, 1.442695
        %v1353 = vpow.pop %v1352
        %1354 = vadd.xlane.f32.xlu0 %v1353
        %v1355 = vpop.xlane.xlu0 %1354
        %v1356 = vrcp.pop %v1355
        %v1357 = vmul.f32 %v1353, %v1356
        %1374 = vrot.lane.b32.xlu0 %v927, 124
        %v1375 = vpop.permute.xlu0 %1374
        %1376 = vrot.lane.b32.xlu0 %v932, 124
        %v1377 = vpop.permute.xlu0 %1376
        %1378 = vrot.lane.b32.xlu0 %v937, 124
        %v1379 = vpop.permute.xlu0 %1378
        %1380 = vrot.lane.b32.xlu0 %v942, 124
        %v1381 = vpop.permute.xlu0 %1380
        %1382 = vrot.lane.b32.xlu0 %v947, 124
        %v1383 = vpop.permute.xlu0 %1382
        %1384 = vrot.lane.b32.xlu0 %v952, 124
        %v1385 = vpop.permute.xlu0 %1384
        %1386 = vrot.lane.b32.xlu0 %v957, 124
        %v1387 = vpop.permute.xlu0 %1386
        %1388 = vrot.lane.b32.xlu0 %v962, 124
        %v1389 = vpop.permute.xlu0 %1388
        %1390 = vrot.lane.b32.xlu0 %v967, 124
        %v1391 = vpop.permute.xlu0 %1390
        %1392 = vrot.lane.b32.xlu0 %v972, 124
        %v1393 = vpop.permute.xlu0 %1392
        %1394 = vrot.lane.b32.xlu0 %v977, 124
        %v1395 = vpop.permute.xlu0 %1394
        %1396 = vrot.lane.b32.xlu0 %v982, 124
        %v1397 = vpop.permute.xlu0 %1396
        %1398 = vrot.lane.b32.xlu0 %v987, 124
        %v1399 = vpop.permute.xlu0 %1398
        %1400 = vrot.lane.b32.xlu0 %v992, 124
        %v1401 = vpop.permute.xlu0 %1400
        %1402 = vrot.lane.b32.xlu0 %v997, 124
        %v1403 = vpop.permute.xlu0 %1402
        %1404 = vrot.lane.b32.xlu0 %v1002, 124
        %v1405 = vpop.permute.xlu0 %1404
        %1422 = vmatprep.subr.mxu0 0.0
        %1423 = vmatpush1.msra.mxu0 %v1375
        %1424 = vmatprep.subr.mxu0 0.0
        %1425 = vmatpush1.msra.mxu0 %v1377
        %1426 = vmatprep.subr.mxu0 0.0
        %1427 = vmatpush1.msra.mxu0 %v1379
        %1428 = vmatprep.subr.mxu0 0.0
        %1429 = vmatpush1.msra.mxu0 %v1381
        %1430 = vmatprep.subr.mxu0 0.0
        %1431 = vmatpush1.msra.mxu0 %v1383
        %1432 = vmatprep.subr.mxu0 0.0
        %1433 = vmatpush1.msra.mxu0 %v1385
        %1434 = vmatprep.subr.mxu0 0.0
        %1435 = vmatpush1.msra.mxu0 %v1387
        %1436 = vmatprep.subr.mxu0 0.0
        %1437 = vmatpush1.msra.mxu0 %v1389
        %1438 = vmatprep.subr.mxu0 0.0
        %1439 = vmatpush1.msra.mxu0 %v1391
        %1440 = vmatprep.subr.mxu0 0.0
        %1441 = vmatpush1.msra.mxu0 %v1393
        %1442 = vmatprep.subr.mxu0 0.0
        %1443 = vmatpush1.msra.mxu0 %v1395
        %1444 = vmatprep.subr.mxu0 0.0
        %1445 = vmatpush1.msra.mxu0 %v1397
        %1446 = vmatprep.subr.mxu0 0.0
        %1447 = vmatpush1.msra.mxu0 %v1399
        %1448 = vmatprep.subr.mxu0 0.0
        %1449 = vmatpush1.msra.mxu0 %v1401
        %1450 = vmatprep.subr.mxu0 0.0
        %1451 = vmatpush1.msra.mxu0 %v1403
        %1452 = vmatprep.subr.mxu0 0.0
        %1453 = vmatpush1.msra.mxu0 %v1405
        %1454 = vmatprep.subr.mxu0 0.0
        %1455 = vmatpush1.msra.mxu0 0.0
        %1456 = vmatprep.subr.mxu0 0.0
        %1457 = vmatpush1.msra.mxu0 0.0
        %1458 = vmatprep.subr.mxu0 0.0
        %1459 = vmatpush1.msra.mxu0 0.0
        %1460 = vmatprep.subr.mxu0 0.0
        %1461 = vmatpush1.msra.mxu0 0.0
        %1462 = vmatprep.subr.mxu0 0.0
        %1463 = vmatpush1.msra.mxu0 0.0
        %1464 = vmatprep.subr.mxu0 0.0
        %1465 = vmatpush1.msra.mxu0 0.0
        %1466 = vmatprep.subr.mxu0 0.0
        %1467 = vmatpush1.msra.mxu0 0.0
        %1468 = vmatprep.subr.mxu0 0.0
        %1469 = vmatpush1.msra.mxu0 0.0
        %1470 = vmatprep.subr.mxu0 0.0
        %1471 = vmatpush1.msra.mxu0 0.0
        %1472 = vmatprep.subr.mxu0 0.0
        %1473 = vmatpush1.msra.mxu0 0.0
        %1474 = vmatprep.subr.mxu0 0.0
        %1475 = vmatpush1.msra.mxu0 0.0
        %1476 = vmatprep.subr.mxu0 0.0
        %1477 = vmatpush1.msra.mxu0 0.0
        %1478 = vmatprep.subr.mxu0 0.0
        %1479 = vmatpush1.msra.mxu0 0.0
        %1480 = vmatprep.subr.mxu0 0.0
        %1481 = vmatpush1.msra.mxu0 0.0
        %1482 = vmatprep.subr.mxu0 0.0
        %1483 = vmatpush1.msra.mxu0 0.0
        %1484 = vmatprep.subr.mxu0 0.0
        %1485 = vmatpush1.msra.mxu0 0.0
        %1486 = vmatprep.mubr.f32.mxu0 0.0
        %1487 = vmatmul.mubr.f32.gmra.mrb[0].mxu0 %v1357
        %v1488 = vpop.f32.mrb[0].mxu0
        %v1489 = vadd.f32 0.0, %v1488
        %v1490 = vpop.f32.mrb[0].mxu0
        %1491 = vdwg.mxu0
        %1493 = vrot.lane.b32.xlu0 %v1489, 4
        %v1494 = vpop.permute.xlu0 %1493
        %vm1496 = vcmask 64544
        %1497 = vst.msk [vmem:[#allocation2] sm:$0xff] %vm1496, %v1494
        %1498 = vrot.lane.b32.xlu0 %v658, 120
        %v1499 = vpop.permute.xlu0 %1498
        %1500 = vrot.lane.b32.xlu0 %v778, 120
        %v1501 = vpop.permute.xlu0 %1500
        %1502 = vrot.lane.b32.xlu0 %v783, 120
        %v1503 = vpop.permute.xlu0 %1502
        %1504 = vrot.lane.b32.xlu0 %v788, 120
        %v1505 = vpop.permute.xlu0 %1504
        %1506 = vrot.lane.b32.xlu0 %v793, 120
        %v1507 = vpop.permute.xlu0 %1506
        %1508 = vrot.lane.b32.xlu0 %v798, 120
        %v1509 = vpop.permute.xlu0 %1508
        %1510 = vrot.lane.b32.xlu0 %v803, 120
        %v1511 = vpop.permute.xlu0 %1510
        %1512 = vrot.lane.b32.xlu0 %v808, 120
        %v1513 = vpop.permute.xlu0 %1512
        %1514 = vrot.lane.b32.xlu0 %v813, 120
        %v1515 = vpop.permute.xlu0 %1514
        %1516 = vrot.lane.b32.xlu0 %v818, 120
        %v1517 = vpop.permute.xlu0 %1516
        %1518 = vrot.lane.b32.xlu0 %v823, 120
        %v1519 = vpop.permute.xlu0 %1518
        %1520 = vrot.lane.b32.xlu0 %v828, 120
        %v1521 = vpop.permute.xlu0 %1520
        %1522 = vrot.lane.b32.xlu0 %v833, 120
        %v1523 = vpop.permute.xlu0 %1522
        %1524 = vrot.lane.b32.xlu0 %v838, 120
        %v1525 = vpop.permute.xlu0 %1524
        %1526 = vrot.lane.b32.xlu0 %v843, 120
        %v1527 = vpop.permute.xlu0 %1526
        %1528 = vrot.lane.b32.xlu0 %v848, 120
        %v1529 = vpop.permute.xlu0 %1528
        %1530 = vrot.lane.b32.xlu0 %v853, 120
        %v1531 = vpop.permute.xlu0 %1530
        %v1532 = vsel %vm1005, %v1499, 0
        %v1534 = vsel %vm1005, %v1501, 0
        %v1536 = vsel %vm1005, %v1503, 0
        %v1538 = vsel %vm1005, %v1505, 0
        %v1540 = vsel %vm1005, %v1507, 0
        %v1542 = vsel %vm1005, %v1509, 0
        %v1544 = vsel %vm1005, %v1511, 0
        %v1546 = vsel %vm1005, %v1513, 0
        %v1548 = vsel %vm1005, %v1515, 0
        %v1550 = vsel %vm1005, %v1517, 0
        %v1552 = vsel %vm1005, %v1519, 0
        %v1554 = vsel %vm1005, %v1521, 0
        %v1556 = vsel %vm1005, %v1523, 0
        %v1558 = vsel %vm1005, %v1525, 0
        %v1560 = vsel %vm1005, %v1527, 0
        %v1562 = vsel %vm1005, %v1529, 0
        %v1564 = vsel %vm1005, %v1531, 0
        %1566 = vmatprep.subr.mxu0 0.0
        %1567 = vmatpush1.xpose.msra.mxu0 %v1534
        %1568 = vmatprep.subr.mxu0 0.0
        %1569 = vmatpush1.xpose.msra.mxu0 %v1536
        %1570 = vmatprep.subr.mxu0 0.0
        %1571 = vmatpush1.xpose.msra.mxu0 %v1538
        %1572 = vmatprep.subr.mxu0 0.0
        %1573 = vmatpush1.xpose.msra.mxu0 %v1540
        %1574 = vmatprep.subr.mxu0 0.0
        %1575 = vmatpush1.xpose.msra.mxu0 %v1542
        %1576 = vmatprep.subr.mxu0 0.0
        %1577 = vmatpush1.xpose.msra.mxu0 %v1544
        %1578 = vmatprep.subr.mxu0 0.0
        %1579 = vmatpush1.xpose.msra.mxu0 %v1546
        %1580 = vmatprep.subr.mxu0 0.0
        %1581 = vmatpush1.xpose.msra.mxu0 %v1548
        %1582 = vmatprep.subr.mxu0 0.0
        %1583 = vmatpush1.xpose.msra.mxu0 %v1550
        %1584 = vmatprep.subr.mxu0 0.0
        %1585 = vmatpush1.xpose.msra.mxu0 %v1552
        %1586 = vmatprep.subr.mxu0 0.0
        %1587 = vmatpush1.xpose.msra.mxu0 %v1554
        %1588 = vmatprep.subr.mxu0 0.0
        %1589 = vmatpush1.xpose.msra.mxu0 %v1556
        %1590 = vmatprep.subr.mxu0 0.0
        %1591 = vmatpush1.xpose.msra.mxu0 %v1558
        %1592 = vmatprep.subr.mxu0 0.0
        %1593 = vmatpush1.xpose.msra.mxu0 %v1560
        %1594 = vmatprep.subr.mxu0 0.0
        %1595 = vmatpush1.xpose.msra.mxu0 %v1562
        %1596 = vmatprep.subr.mxu0 0.0
        %1597 = vmatpush1.xpose.msra.mxu0 %v1564
        %1598 = vmatprep.subr.mxu0 0.0
        %1599 = vmatpush1.xpose.msra.mxu0 0.0
        %1600 = vmatprep.subr.mxu0 0.0
        %1601 = vmatpush1.xpose.msra.mxu0 0.0
        %1602 = vmatprep.subr.mxu0 0.0
        %1603 = vmatpush1.xpose.msra.mxu0 0.0
        %1604 = vmatprep.subr.mxu0 0.0
        %1605 = vmatpush1.xpose.msra.mxu0 0.0
        %1606 = vmatprep.subr.mxu0 0.0
        %1607 = vmatpush1.xpose.msra.mxu0 0.0
        %1608 = vmatprep.subr.mxu0 0.0
        %1609 = vmatpush1.xpose.msra.mxu0 0.0
        %1610 = vmatprep.subr.mxu0 0.0
        %1611 = vmatpush1.xpose.msra.mxu0 0.0
        %1612 = vmatprep.subr.mxu0 0.0
        %1613 = vmatpush1.xpose.msra.mxu0 0.0
        %1614 = vmatprep.subr.mxu0 0.0
        %1615 = vmatpush1.xpose.msra.mxu0 0.0
        %1616 = vmatprep.subr.mxu0 0.0
        %1617 = vmatpush1.xpose.msra.mxu0 0.0
        %1618 = vmatprep.subr.mxu0 0.0
        %1619 = vmatpush1.xpose.msra.mxu0 0.0
        %1620 = vmatprep.subr.mxu0 0.0
        %1621 = vmatpush1.xpose.msra.mxu0 0.0
        %1622 = vmatprep.subr.mxu0 0.0
        %1623 = vmatpush1.xpose.msra.mxu0 0.0
        %1624 = vmatprep.subr.mxu0 0.0
        %1625 = vmatpush1.xpose.msra.mxu0 0.0
        %1626 = vmatprep.subr.mxu0 0.0
        %1627 = vmatpush1.xpose.msra.mxu0 0.0
        %1628 = vmatprep.subr.mxu0 0.0
        %1629 = vmatpush1.xpose.msra.mxu0 0.0
        %1630 = vmatprep.mubr.f32.mxu0 0.0
        %1631 = vmatmul.mubr.f32.gmra.mrb[0].mxu0 %v1532
        %v1632 = vpop.f32.mrb[0].mxu0
        %v1633 = vadd.f32 0.0, %v1632
        %v1634 = vpop.f32.mrb[0].mxu0
        %1635 = vdwg.mxu0
        %v1636 = vmul.f32 %v1633, 0.5
        %v1637 = vadd.f32 %v1636, %v381
        %1638 = vmax.xlane.f32.xlu0 %v1637
        %v1639 = vpop.xlane.xlu0 %1638
        %v1640 = vsub.f32 %v1637, %v1639
        %v1641 = vmul.f32 %v1640, 1.442695
        %v1642 = vpow.pop %v1641
        %1643 = vadd.xlane.f32.xlu0 %v1642
        %v1644 = vpop.xlane.xlu0 %1643
        %v1645 = vrcp.pop %v1644
        %v1646 = vmul.f32 %v1642, %v1645
        %1647 = vrot.lane.b32.xlu0 %v927, 120
        %v1648 = vpop.permute.xlu0 %1647
        %1649 = vrot.lane.b32.xlu0 %v932, 120
        %v1650 = vpop.permute.xlu0 %1649
        %1651 = vrot.lane.b32.xlu0 %v937, 120
        %v1652 = vpop.permute.xlu0 %1651
        %1653 = vrot.lane.b32.xlu0 %v942, 120
        %v1654 = vpop.permute.xlu0 %1653
        %1655 = vrot.lane.b32.xlu0 %v947, 120
        %v1656 = vpop.permute.xlu0 %1655
        %1657 = vrot.lane.b32.xlu0 %v952, 120
        %v1658 = vpop.permute.xlu0 %1657
        %1659 = vrot.lane.b32.xlu0 %v957, 120
        %v1660 = vpop.permute.xlu0 %1659
        %1661 = vrot.lane.b32.xlu0 %v962, 120
        %v1662 = vpop.permute.xlu0 %1661
        %1663 = vrot.lane.b32.xlu0 %v967, 120
        %v1664 = vpop.permute.xlu0 %1663
        %1665 = vrot.lane.b32.xlu0 %v972, 120
        %v1666 = vpop.permute.xlu0 %1665
        %1667 = vrot.lane.b32.xlu0 %v977, 120
        %v1668 = vpop.permute.xlu0 %1667
        %1669 = vrot.lane.b32.xlu0 %v982, 120
        %v1670 = vpop.permute.xlu0 %1669
        %1671 = vrot.lane.b32.xlu0 %v987, 120
        %v1672 = vpop.permute.xlu0 %1671
        %1673 = vrot.lane.b32.xlu0 %v992, 120
        %v1674 = vpop.permute.xlu0 %1673
        %1675 = vrot.lane.b32.xlu0 %v997, 120
        %v1676 = vpop.permute.xlu0 %1675
        %1677 = vrot.lane.b32.xlu0 %v1002, 120
        %v1678 = vpop.permute.xlu0 %1677
        %1695 = vmatprep.subr.mxu0 0.0
        %1696 = vmatpush1.msra.mxu0 %v1648
        %1697 = vmatprep.subr.mxu0 0.0
        %1698 = vmatpush1.msra.mxu0 %v1650
        %1699 = vmatprep.subr.mxu0 0.0
        %1700 = vmatpush1.msra.mxu0 %v1652
        %1701 = vmatprep.subr.mxu0 0.0
        %1702 = vmatpush1.msra.mxu0 %v1654
        %1703 = vmatprep.subr.mxu0 0.0
        %1704 = vmatpush1.msra.mxu0 %v1656
        %1705 = vmatprep.subr.mxu0 0.0
        %1706 = vmatpush1.msra.mxu0 %v1658
        %1707 = vmatprep.subr.mxu0 0.0
        %1708 = vmatpush1.msra.mxu0 %v1660
        %1709 = vmatprep.subr.mxu0 0.0
        %1710 = vmatpush1.msra.mxu0 %v1662
        %1711 = vmatprep.subr.mxu0 0.0
        %1712 = vmatpush1.msra.mxu0 %v1664
        %1713 = vmatprep.subr.mxu0 0.0
        %1714 = vmatpush1.msra.mxu0 %v1666
        %1715 = vmatprep.subr.mxu0 0.0
        %1716 = vmatpush1.msra.mxu0 %v1668
        %1717 = vmatprep.subr.mxu0 0.0
        %1718 = vmatpush1.msra.mxu0 %v1670
        %1719 = vmatprep.subr.mxu0 0.0
        %1720 = vmatpush1.msra.mxu0 %v1672
        %1721 = vmatprep.subr.mxu0 0.0
        %1722 = vmatpush1.msra.mxu0 %v1674
        %1723 = vmatprep.subr.mxu0 0.0
        %1724 = vmatpush1.msra.mxu0 %v1676
        %1725 = vmatprep.subr.mxu0 0.0
        %1726 = vmatpush1.msra.mxu0 %v1678
        %1727 = vmatprep.subr.mxu0 0.0
        %1728 = vmatpush1.msra.mxu0 0.0
        %1729 = vmatprep.subr.mxu0 0.0
        %1730 = vmatpush1.msra.mxu0 0.0
        %1731 = vmatprep.subr.mxu0 0.0
        %1732 = vmatpush1.msra.mxu0 0.0
        %1733 = vmatprep.subr.mxu0 0.0
        %1734 = vmatpush1.msra.mxu0 0.0
        %1735 = vmatprep.subr.mxu0 0.0
        %1736 = vmatpush1.msra.mxu0 0.0
        %1737 = vmatprep.subr.mxu0 0.0
        %1738 = vmatpush1.msra.mxu0 0.0
        %1739 = vmatprep.subr.mxu0 0.0
        %1740 = vmatpush1.msra.mxu0 0.0
        %1741 = vmatprep.subr.mxu0 0.0
        %1742 = vmatpush1.msra.mxu0 0.0
        %1743 = vmatprep.subr.mxu0 0.0
        %1744 = vmatpush1.msra.mxu0 0.0
        %1745 = vmatprep.subr.mxu0 0.0
        %1746 = vmatpush1.msra.mxu0 0.0
        %1747 = vmatprep.subr.mxu0 0.0
        %1748 = vmatpush1.msra.mxu0 0.0
        %1749 = vmatprep.subr.mxu0 0.0
        %1750 = vmatpush1.msra.mxu0 0.0
        %1751 = vmatprep.subr.mxu0 0.0
        %1752 = vmatpush1.msra.mxu0 0.0
        %1753 = vmatprep.subr.mxu0 0.0
        %1754 = vmatpush1.msra.mxu0 0.0
        %1755 = vmatprep.subr.mxu0 0.0
        %1756 = vmatpush1.msra.mxu0 0.0
        %1757 = vmatprep.subr.mxu0 0.0
        %1758 = vmatpush1.msra.mxu0 0.0
        %1759 = vmatprep.mubr.f32.mxu0 0.0
        %1760 = vmatmul.mubr.f32.gmra.mrb[0].mxu0 %v1646
        %v1761 = vpop.f32.mrb[0].mxu0
        %v1762 = vadd.f32 0.0, %v1761
        %v1763 = vpop.f32.mrb[0].mxu0
        %1764 = vdwg.mxu0
        %1766 = vrot.lane.b32.xlu0 %v1762, 8
        %v1767 = vpop.permute.xlu0 %1766
        %vm1769 = vcmask 97344
        %1770 = vst.msk [vmem:[#allocation2] sm:$0xff] %vm1769, %v1767
        %1771 = vrot.lane.b32.xlu0 %v658, 116
        %v1772 = vpop.permute.xlu0 %1771
        %1773 = vrot.lane.b32.xlu0 %v778, 116
        %v1774 = vpop.permute.xlu0 %1773
        %1775 = vrot.lane.b32.xlu0 %v783, 116
        %v1776 = vpop.permute.xlu0 %1775
        %1777 = vrot.lane.b32.xlu0 %v788, 116
        %v1778 = vpop.permute.xlu0 %1777
        %1779 = vrot.lane.b32.xlu0 %v793, 116
        %v1780 = vpop.permute.xlu0 %1779
        %1781 = vrot.lane.b32.xlu0 %v798, 116
        %v1782 = vpop.permute.xlu0 %1781
        %1783 = vrot.lane.b32.xlu0 %v803, 116
        %v1784 = vpop.permute.xlu0 %1783
        %1785 = vrot.lane.b32.xlu0 %v808, 116
        %v1786 = vpop.permute.xlu0 %1785
        %1787 = vrot.lane.b32.xlu0 %v813, 116
        %v1788 = vpop.permute.xlu0 %1787
        %1789 = vrot.lane.b32.xlu0 %v818, 116
        %v1790 = vpop.permute.xlu0 %1789
        %1791 = vrot.lane.b32.xlu0 %v823, 116
        %v1792 = vpop.permute.xlu0 %1791
        %1793 = vrot.lane.b32.xlu0 %v828, 116
        %v1794 = vpop.permute.xlu0 %1793
        %1795 = vrot.lane.b32.xlu0 %v833, 116
        %v1796 = vpop.permute.xlu0 %1795
        %1797 = vrot.lane.b32.xlu0 %v838, 116
        %v1798 = vpop.permute.xlu0 %1797
        %1799 = vrot.lane.b32.xlu0 %v843, 116
        %v1800 = vpop.permute.xlu0 %1799
        %1801 = vrot.lane.b32.xlu0 %v848, 116
        %v1802 = vpop.permute.xlu0 %1801
        %1803 = vrot.lane.b32.xlu0 %v853, 116
        %v1804 = vpop.permute.xlu0 %1803
        %v1805 = vsel %vm1005, %v1772, 0
        %v1807 = vsel %vm1005, %v1774, 0
        %v1809 = vsel %vm1005, %v1776, 0
        %v1811 = vsel %vm1005, %v1778, 0
        %v1813 = vsel %vm1005, %v1780, 0
        %v1815 = vsel %vm1005, %v1782, 0
        %v1817 = vsel %vm1005, %v1784, 0
        %v1819 = vsel %vm1005, %v1786, 0
        %v1821 = vsel %vm1005, %v1788, 0
        %v1823 = vsel %vm1005, %v1790, 0
        %v1825 = vsel %vm1005, %v1792, 0
        %v1827 = vsel %vm1005, %v1794, 0
        %v1829 = vsel %vm1005, %v1796, 0
        %v1831 = vsel %vm1005, %v1798, 0
        %v1833 = vsel %vm1005, %v1800, 0
        %v1835 = vsel %vm1005, %v1802, 0
        %v1837 = vsel %vm1005, %v1804, 0
        %1839 = vmatprep.subr.mxu0 0.0
        %1840 = vmatpush1.xpose.msra.mxu0 %v1807
        %1841 = vmatprep.subr.mxu0 0.0
        %1842 = vmatpush1.xpose.msra.mxu0 %v1809
        %1843 = vmatprep.subr.mxu0 0.0
        %1844 = vmatpush1.xpose.msra.mxu0 %v1811
        %1845 = vmatprep.subr.mxu0 0.0
        %1846 = vmatpush1.xpose.msra.mxu0 %v1813
        %1847 = vmatprep.subr.mxu0 0.0
        %1848 = vmatpush1.xpose.msra.mxu0 %v1815
        %1849 = vmatprep.subr.mxu0 0.0
        %1850 = vmatpush1.xpose.msra.mxu0 %v1817
        %1851 = vmatprep.subr.mxu0 0.0
        %1852 = vmatpush1.xpose.msra.mxu0 %v1819
        %1853 = vmatprep.subr.mxu0 0.0
        %1854 = vmatpush1.xpose.msra.mxu0 %v1821
        %1855 = vmatprep.subr.mxu0 0.0
        %1856 = vmatpush1.xpose.msra.mxu0 %v1823
        %1857 = vmatprep.subr.mxu0 0.0
        %1858 = vmatpush1.xpose.msra.mxu0 %v1825
        %1859 = vmatprep.subr.mxu0 0.0
        %1860 = vmatpush1.xpose.msra.mxu0 %v1827
        %1861 = vmatprep.subr.mxu0 0.0
        %1862 = vmatpush1.xpose.msra.mxu0 %v1829
        %1863 = vmatprep.subr.mxu0 0.0
        %1864 = vmatpush1.xpose.msra.mxu0 %v1831
        %1865 = vmatprep.subr.mxu0 0.0
        %1866 = vmatpush1.xpose.msra.mxu0 %v1833
        %1867 = vmatprep.subr.mxu0 0.0
        %1868 = vmatpush1.xpose.msra.mxu0 %v1835
        %1869 = vmatprep.subr.mxu0 0.0
        %1870 = vmatpush1.xpose.msra.mxu0 %v1837
        %1871 = vmatprep.subr.mxu0 0.0
        %1872 = vmatpush1.xpose.msra.mxu0 0.0
        %1873 = vmatprep.subr.mxu0 0.0
        %1874 = vmatpush1.xpose.msra.mxu0 0.0
        %1875 = vmatprep.subr.mxu0 0.0
        %1876 = vmatpush1.xpose.msra.mxu0 0.0
        %1877 = vmatprep.subr.mxu0 0.0
        %1878 = vmatpush1.xpose.msra.mxu0 0.0
        %1879 = vmatprep.subr.mxu0 0.0
        %1880 = vmatpush1.xpose.msra.mxu0 0.0
        %1881 = vmatprep.subr.mxu0 0.0
        %1882 = vmatpush1.xpose.msra.mxu0 0.0
        %1883 = vmatprep.subr.mxu0 0.0
        %1884 = vmatpush1.xpose.msra.mxu0 0.0
        %1885 = vmatprep.subr.mxu0 0.0
        %1886 = vmatpush1.xpose.msra.mxu0 0.0
        %1887 = vmatprep.subr.mxu0 0.0
        %1888 = vmatpush1.xpose.msra.mxu0 0.0
        %1889 = vmatprep.subr.mxu0 0.0
        %1890 = vmatpush1.xpose.msra.mxu0 0.0
        %1891 = vmatprep.subr.mxu0 0.0
        %1892 = vmatpush1.xpose.msra.mxu0 0.0
        %1893 = vmatprep.subr.mxu0 0.0
        %1894 = vmatpush1.xpose.msra.mxu0 0.0
        %1895 = vmatprep.subr.mxu0 0.0
        %1896 = vmatpush1.xpose.msra.mxu0 0.0
        %1897 = vmatprep.subr.mxu0 0.0
        %1898 = vmatpush1.xpose.msra.mxu0 0.0
        %1899 = vmatprep.subr.mxu0 0.0
        %1900 = vmatpush1.xpose.msra.mxu0 0.0
        %1901 = vmatprep.subr.mxu0 0.0
        %1902 = vmatpush1.xpose.msra.mxu0 0.0
        %1903 = vmatprep.mubr.f32.mxu0 0.0
        %1904 = vmatmul.mubr.f32.gmra.mrb[0].mxu0 %v1805
        %v1905 = vpop.f32.mrb[0].mxu0
        %v1906 = vadd.f32 0.0, %v1905
        %v1907 = vpop.f32.mrb[0].mxu0
        %1908 = vdwg.mxu0
        %v1909 = vmul.f32 %v1906, 0.5
        %v1910 = vadd.f32 %v1909, %v381
        %1911 = vmax.xlane.f32.xlu0 %v1910
        %v1912 = vpop.xlane.xlu0 %1911
        %v1913 = vsub.f32 %v1910, %v1912
        %v1914 = vmul.f32 %v1913, 1.442695
        %v1915 = vpow.pop %v1914
        %1916 = vadd.xlane.f32.xlu0 %v1915
        %v1917 = vpop.xlane.xlu0 %1916
        %v1918 = vrcp.pop %v1917
        %v1919 = vmul.f32 %v1915, %v1918
        %1920 = vrot.lane.b32.xlu0 %v927, 116
        %v1921 = vpop.permute.xlu0 %1920
        %1922 = vrot.lane.b32.xlu0 %v932, 116
        %v1923 = vpop.permute.xlu0 %1922
        %1924 = vrot.lane.b32.xlu0 %v937, 116
        %v1925 = vpop.permute.xlu0 %1924
        %1926 = vrot.lane.b32.xlu0 %v942, 116
        %v1927 = vpop.permute.xlu0 %1926
        %1928 = vrot.lane.b32.xlu0 %v947, 116
        %v1929 = vpop.permute.xlu0 %1928
        %1930 = vrot.lane.b32.xlu0 %v952, 116
        %v1931 = vpop.permute.xlu0 %1930
        %1932 = vrot.lane.b32.xlu0 %v957, 116
        %v1933 = vpop.permute.xlu0 %1932
        %1934 = vrot.lane.b32.xlu0 %v962, 116
        %v1935 = vpop.permute.xlu0 %1934
        %1936 = vrot.lane.b32.xlu0 %v967, 116
        %v1937 = vpop.permute.xlu0 %1936
        %1938 = vrot.lane.b32.xlu0 %v972, 116
        %v1939 = vpop.permute.xlu0 %1938
        %1940 = vrot.lane.b32.xlu0 %v977, 116
        %v1941 = vpop.permute.xlu0 %1940
        %1942 = vrot.lane.b32.xlu0 %v982, 116
        %v1943 = vpop.permute.xlu0 %1942
        %1944 = vrot.lane.b32.xlu0 %v987, 116
        %v1945 = vpop.permute.xlu0 %1944
        %1946 = vrot.lane.b32.xlu0 %v992, 116
        %v1947 = vpop.permute.xlu0 %1946
        %1948 = vrot.lane.b32.xlu0 %v997, 116
        %v1949 = vpop.permute.xlu0 %1948
        %1950 = vrot.lane.b32.xlu0 %v1002, 116
        %v1951 = vpop.permute.xlu0 %1950
        %1968 = vmatprep.subr.mxu0 0.0
        %1969 = vmatpush1.msra.mxu0 %v1921
        %1970 = vmatprep.subr.mxu0 0.0
        %1971 = vmatpush1.msra.mxu0 %v1923
        %1972 = vmatprep.subr.mxu0 0.0
        %1973 = vmatpush1.msra.mxu0 %v1925
        %1974 = vmatprep.subr.mxu0 0.0
        %1975 = vmatpush1.msra.mxu0 %v1927
        %1976 = vmatprep.subr.mxu0 0.0
        %1977 = vmatpush1.msra.mxu0 %v1929
        %1978 = vmatprep.subr.mxu0 0.0
        %1979 = vmatpush1.msra.mxu0 %v1931
        %1980 = vmatprep.subr.mxu0 0.0
        %1981 = vmatpush1.msra.mxu0 %v1933
        %1982 = vmatprep.subr.mxu0 0.0
        %1983 = vmatpush1.msra.mxu0 %v1935
        %1984 = vmatprep.subr.mxu0 0.0
        %1985 = vmatpush1.msra.mxu0 %v1937
        %1986 = vmatprep.subr.mxu0 0.0
        %1987 = vmatpush1.msra.mxu0 %v1939
        %1988 = vmatprep.subr.mxu0 0.0
        %1989 = vmatpush1.msra.mxu0 %v1941
        %1990 = vmatprep.subr.mxu0 0.0
        %1991 = vmatpush1.msra.mxu0 %v1943
        %1992 = vmatprep.subr.mxu0 0.0
        %1993 = vmatpush1.msra.mxu0 %v1945
        %1994 = vmatprep.subr.mxu0 0.0
        %1995 = vmatpush1.msra.mxu0 %v1947
        %1996 = vmatprep.subr.mxu0 0.0
        %1997 = vmatpush1.msra.mxu0 %v1949
        %1998 = vmatprep.subr.mxu0 0.0
        %1999 = vmatpush1.msra.mxu0 %v1951
        %2000 = vmatprep.subr.mxu0 0.0
        %2001 = vmatpush1.msra.mxu0 0.0
        %2002 = vmatprep.subr.mxu0 0.0
        %2003 = vmatpush1.msra.mxu0 0.0
        %2004 = vmatprep.subr.mxu0 0.0
        %2005 = vmatpush1.msra.mxu0 0.0
        %2006 = vmatprep.subr.mxu0 0.0
        %2007 = vmatpush1.msra.mxu0 0.0
        %2008 = vmatprep.subr.mxu0 0.0
        %2009 = vmatpush1.msra.mxu0 0.0
        %2010 = vmatprep.subr.mxu0 0.0
        %2011 = vmatpush1.msra.mxu0 0.0
        %2012 = vmatprep.subr.mxu0 0.0
        %2013 = vmatpush1.msra.mxu0 0.0
        %2014 = vmatprep.subr.mxu0 0.0
        %2015 = vmatpush1.msra.mxu0 0.0
        %2016 = vmatprep.subr.mxu0 0.0
        %2017 = vmatpush1.msra.mxu0 0.0
        %2018 = vmatprep.subr.mxu0 0.0
        %2019 = vmatpush1.msra.mxu0 0.0
        %2020 = vmatprep.subr.mxu0 0.0
        %2021 = vmatpush1.msra.mxu0 0.0
        %2022 = vmatprep.subr.mxu0 0.0
        %2023 = vmatpush1.msra.mxu0 0.0
        %2024 = vmatprep.subr.mxu0 0.0
        %2025 = vmatpush1.msra.mxu0 0.0
        %2026 = vmatprep.subr.mxu0 0.0
        %2027 = vmatpush1.msra.mxu0 0.0
        %2028 = vmatprep.subr.mxu0 0.0
        %2029 = vmatpush1.msra.mxu0 0.0
        %2030 = vmatprep.subr.mxu0 0.0
        %2031 = vmatpush1.msra.mxu0 0.0
        %2032 = vmatprep.mubr.f32.mxu0 0.0
        %2033 = vmatmul.mubr.f32.gmra.mrb[0].mxu0 %v1919
        %v2034 = vpop.f32.mrb[0].mxu0
        %v2035 = vadd.f32 0.0, %v2034
        %v2036 = vpop.f32.mrb[0].mxu0
        %2037 = vdwg.mxu0
        %2039 = vrot.lane.b32.xlu0 %v2035, 12
        %v2040 = vpop.permute.xlu0 %2039
        %vm2042 = vcmask 130144
        %2043 = vst.msk [vmem:[#allocation2] sm:$0xff] %vm2042, %v2040
        %2044 = vrot.lane.b32.xlu0 %v658, 112
        %v2045 = vpop.permute.xlu0 %2044
        %2046 = vrot.lane.b32.xlu0 %v778, 112
        %v2047 = vpop.permute.xlu0 %2046
        %2048 = vrot.lane.b32.xlu0 %v783, 112
        %v2049 = vpop.permute.xlu0 %2048
        %2050 = vrot.lane.b32.xlu0 %v788, 112
        %v2051 = vpop.permute.xlu0 %2050
        %2052 = vrot.lane.b32.xlu0 %v793, 112
        %v2053 = vpop.permute.xlu0 %2052
        %2054 = vrot.lane.b32.xlu0 %v798, 112
        %v2055 = vpop.permute.xlu0 %2054
        %2056 = vrot.lane.b32.xlu0 %v803, 112
        %v2057 = vpop.permute.xlu0 %2056
        %2058 = vrot.lane.b32.xlu0 %v808, 112
        %v2059 = vpop.permute.xlu0 %2058
        %2060 = vrot.lane.b32.xlu0 %v813, 112
        %v2061 = vpop.permute.xlu0 %2060
        %2062 = vrot.lane.b32.xlu0 %v818, 112
        %v2063 = vpop.permute.xlu0 %2062
        %2064 = vrot.lane.b32.xlu0 %v823, 112
        %v2065 = vpop.permute.xlu0 %2064
        %2066 = vrot.lane.b32.xlu0 %v828, 112
        %v2067 = vpop.permute.xlu0 %2066
        %2068 = vrot.lane.b32.xlu0 %v833, 112
        %v2069 = vpop.permute.xlu0 %2068
        %2070 = vrot.lane.b32.xlu0 %v838, 112
        %v2071 = vpop.permute.xlu0 %2070
        %2072 = vrot.lane.b32.xlu0 %v843, 112
        %v2073 = vpop.permute.xlu0 %2072
        %2074 = vrot.lane.b32.xlu0 %v848, 112
        %v2075 = vpop.permute.xlu0 %2074
        %2076 = vrot.lane.b32.xlu0 %v853, 112
        %v2077 = vpop.permute.xlu0 %2076
        %v2078 = vsel %vm1005, %v2045, 0
        %v2080 = vsel %vm1005, %v2047, 0
        %v2082 = vsel %vm1005, %v2049, 0
        %v2084 = vsel %vm1005, %v2051, 0
        %v2086 = vsel %vm1005, %v2053, 0
        %v2088 = vsel %vm1005, %v2055, 0
        %v2090 = vsel %vm1005, %v2057, 0
        %v2092 = vsel %vm1005, %v2059, 0
        %v2094 = vsel %vm1005, %v2061, 0
        %v2096 = vsel %vm1005, %v2063, 0
        %v2098 = vsel %vm1005, %v2065, 0
        %v2100 = vsel %vm1005, %v2067, 0
        %v2102 = vsel %vm1005, %v2069, 0
        %v2104 = vsel %vm1005, %v2071, 0
        %v2106 = vsel %vm1005, %v2073, 0
        %v2108 = vsel %vm1005, %v2075, 0
        %v2110 = vsel %vm1005, %v2077, 0
        %2112 = vmatprep.subr.mxu0 0.0
        %2113 = vmatpush1.xpose.msra.mxu0 %v2080
        %2114 = vmatprep.subr.mxu0 0.0
        %2115 = vmatpush1.xpose.msra.mxu0 %v2082
        %2116 = vmatprep.subr.mxu0 0.0
        %2117 = vmatpush1.xpose.msra.mxu0 %v2084
        %2118 = vmatprep.subr.mxu0 0.0
        %2119 = vmatpush1.xpose.msra.mxu0 %v2086
        %2120 = vmatprep.subr.mxu0 0.0
        %2121 = vmatpush1.xpose.msra.mxu0 %v2088
        %2122 = vmatprep.subr.mxu0 0.0
        %2123 = vmatpush1.xpose.msra.mxu0 %v2090
        %2124 = vmatprep.subr.mxu0 0.0
        %2125 = vmatpush1.xpose.msra.mxu0 %v2092
        %2126 = vmatprep.subr.mxu0 0.0
        %2127 = vmatpush1.xpose.msra.mxu0 %v2094
        %2128 = vmatprep.subr.mxu0 0.0
        %2129 = vmatpush1.xpose.msra.mxu0 %v2096
        %2130 = vmatprep.subr.mxu0 0.0
        %2131 = vmatpush1.xpose.msra.mxu0 %v2098
        %2132 = vmatprep.subr.mxu0 0.0
        %2133 = vmatpush1.xpose.msra.mxu0 %v2100
        %2134 = vmatprep.subr.mxu0 0.0
        %2135 = vmatpush1.xpose.msra.mxu0 %v2102
        %2136 = vmatprep.subr.mxu0 0.0
        %2137 = vmatpush1.xpose.msra.mxu0 %v2104
        %2138 = vmatprep.subr.mxu0 0.0
        %2139 = vmatpush1.xpose.msra.mxu0 %v2106
        %2140 = vmatprep.subr.mxu0 0.0
        %2141 = vmatpush1.xpose.msra.mxu0 %v2108
        %2142 = vmatprep.subr.mxu0 0.0
        %2143 = vmatpush1.xpose.msra.mxu0 %v2110
        %2144 = vmatprep.subr.mxu0 0.0
        %2145 = vmatpush1.xpose.msra.mxu0 0.0
        %2146 = vmatprep.subr.mxu0 0.0
        %2147 = vmatpush1.xpose.msra.mxu0 0.0
        %2148 = vmatprep.subr.mxu0 0.0
        %2149 = vmatpush1.xpose.msra.mxu0 0.0
        %2150 = vmatprep.subr.mxu0 0.0
        %2151 = vmatpush1.xpose.msra.mxu0 0.0
        %2152 = vmatprep.subr.mxu0 0.0
        %2153 = vmatpush1.xpose.msra.mxu0 0.0
        %2154 = vmatprep.subr.mxu0 0.0
        %2155 = vmatpush1.xpose.msra.mxu0 0.0
        %2156 = vmatprep.subr.mxu0 0.0
        %2157 = vmatpush1.xpose.msra.mxu0 0.0
        %2158 = vmatprep.subr.mxu0 0.0
        %2159 = vmatpush1.xpose.msra.mxu0 0.0
        %2160 = vmatprep.subr.mxu0 0.0
        %2161 = vmatpush1.xpose.msra.mxu0 0.0
        %2162 = vmatprep.subr.mxu0 0.0
        %2163 = vmatpush1.xpose.msra.mxu0 0.0
        %2164 = vmatprep.subr.mxu0 0.0
        %2165 = vmatpush1.xpose.msra.mxu0 0.0
        %2166 = vmatprep.subr.mxu0 0.0
        %2167 = vmatpush1.xpose.msra.mxu0 0.0
        %2168 = vmatprep.subr.mxu0 0.0
        %2169 = vmatpush1.xpose.msra.mxu0 0.0
        %2170 = vmatprep.subr.mxu0 0.0
        %2171 = vmatpush1.xpose.msra.mxu0 0.0
        %2172 = vmatprep.subr.mxu0 0.0
        %2173 = vmatpush1.xpose.msra.mxu0 0.0
        %2174 = vmatprep.subr.mxu0 0.0
        %2175 = vmatpush1.xpose.msra.mxu0 0.0
        %2176 = vmatprep.mubr.f32.mxu0 0.0
        %2177 = vmatmul.mubr.f32.gmra.mrb[0].mxu0 %v2078
        %v2178 = vpop.f32.mrb[0].mxu0
        %v2179 = vadd.f32 0.0, %v2178
        %v2180 = vpop.f32.mrb[0].mxu0
        %2181 = vdwg.mxu0
        %v2182 = vmul.f32 %v2179, 0.5
        %v2183 = vadd.f32 %v2182, %v381
        %2184 = vmax.xlane.f32.xlu0 %v2183
        %v2185 = vpop.xlane.xlu0 %2184
        %v2186 = vsub.f32 %v2183, %v2185
        %v2187 = vmul.f32 %v2186, 1.442695
        %v2188 = vpow.pop %v2187
        %2189 = vadd.xlane.f32.xlu0 %v2188
        %v2190 = vpop.xlane.xlu0 %2189
        %v2191 = vrcp.pop %v2190
        %v2192 = vmul.f32 %v2188, %v2191
        %2193 = vrot.lane.b32.xlu0 %v927, 112
        %v2194 = vpop.permute.xlu0 %2193
        %2195 = vrot.lane.b32.xlu0 %v932, 112
        %v2196 = vpop.permute.xlu0 %2195
        %2197 = vrot.lane.b32.xlu0 %v937, 112
        %v2198 = vpop.permute.xlu0 %2197
        %2199 = vrot.lane.b32.xlu0 %v942, 112
        %v2200 = vpop.permute.xlu0 %2199
        %2201 = vrot.lane.b32.xlu0 %v947, 112
        %v2202 = vpop.permute.xlu0 %2201
        %2203 = vrot.lane.b32.xlu0 %v952, 112
        %v2204 = vpop.permute.xlu0 %2203
        %2205 = vrot.lane.b32.xlu0 %v957, 112
        %v2206 = vpop.permute.xlu0 %2205
        %2207 = vrot.lane.b32.xlu0 %v962, 112
        %v2208 = vpop.permute.xlu0 %2207
        %2209 = vrot.lane.b32.xlu0 %v967, 112
        %v2210 = vpop.permute.xlu0 %2209
        %2211 = vrot.lane.b32.xlu0 %v972, 112
        %v2212 = vpop.permute.xlu0 %2211
        %2213 = vrot.lane.b32.xlu0 %v977, 112
        %v2214 = vpop.permute.xlu0 %2213
        %2215 = vrot.lane.b32.xlu0 %v982, 112
        %v2216 = vpop.permute.xlu0 %2215
        %2217 = vrot.lane.b32.xlu0 %v987, 112
        %v2218 = vpop.permute.xlu0 %2217
        %2219 = vrot.lane.b32.xlu0 %v992, 112
        %v2220 = vpop.permute.xlu0 %2219
        %2221 = vrot.lane.b32.xlu0 %v997, 112
        %v2222 = vpop.permute.xlu0 %2221
        %2223 = vrot.lane.b32.xlu0 %v1002, 112
        %v2224 = vpop.permute.xlu0 %2223
        %2241 = vmatprep.subr.mxu0 0.0
        %2242 = vmatpush1.msra.mxu0 %v2194
        %2243 = vmatprep.subr.mxu0 0.0
        %2244 = vmatpush1.msra.mxu0 %v2196
        %2245 = vmatprep.subr.mxu0 0.0
        %2246 = vmatpush1.msra.mxu0 %v2198
        %2247 = vmatprep.subr.mxu0 0.0
        %2248 = vmatpush1.msra.mxu0 %v2200
        %2249 = vmatprep.subr.mxu0 0.0
        %2250 = vmatpush1.msra.mxu0 %v2202
        %2251 = vmatprep.subr.mxu0 0.0
        %2252 = vmatpush1.msra.mxu0 %v2204
        %2253 = vmatprep.subr.mxu0 0.0
        %2254 = vmatpush1.msra.mxu0 %v2206
        %2255 = vmatprep.subr.mxu0 0.0
        %2256 = vmatpush1.msra.mxu0 %v2208
        %2257 = vmatprep.subr.mxu0 0.0
        %2258 = vmatpush1.msra.mxu0 %v2210
        %2259 = vmatprep.subr.mxu0 0.0
        %2260 = vmatpush1.msra.mxu0 %v2212
        %2261 = vmatprep.subr.mxu0 0.0
        %2262 = vmatpush1.msra.mxu0 %v2214
        %2263 = vmatprep.subr.mxu0 0.0
        %2264 = vmatpush1.msra.mxu0 %v2216
        %2265 = vmatprep.subr.mxu0 0.0
        %2266 = vmatpush1.msra.mxu0 %v2218
        %2267 = vmatprep.subr.mxu0 0.0
        %2268 = vmatpush1.msra.mxu0 %v2220
        %2269 = vmatprep.subr.mxu0 0.0
        %2270 = vmatpush1.msra.mxu0 %v2222
        %2271 = vmatprep.subr.mxu0 0.0
        %2272 = vmatpush1.msra.mxu0 %v2224
        %2273 = vmatprep.subr.mxu0 0.0
        %2274 = vmatpush1.msra.mxu0 0.0
        %2275 = vmatprep.subr.mxu0 0.0
        %2276 = vmatpush1.msra.mxu0 0.0
        %2277 = vmatprep.subr.mxu0 0.0
        %2278 = vmatpush1.msra.mxu0 0.0
        %2279 = vmatprep.subr.mxu0 0.0
        %2280 = vmatpush1.msra.mxu0 0.0
        %2281 = vmatprep.subr.mxu0 0.0
        %2282 = vmatpush1.msra.mxu0 0.0
        %2283 = vmatprep.subr.mxu0 0.0
        %2284 = vmatpush1.msra.mxu0 0.0
        %2285 = vmatprep.subr.mxu0 0.0
        %2286 = vmatpush1.msra.mxu0 0.0
        %2287 = vmatprep.subr.mxu0 0.0
        %2288 = vmatpush1.msra.mxu0 0.0
        %2289 = vmatprep.subr.mxu0 0.0
        %2290 = vmatpush1.msra.mxu0 0.0
        %2291 = vmatprep.subr.mxu0 0.0
        %2292 = vmatpush1.msra.mxu0 0.0
        %2293 = vmatprep.subr.mxu0 0.0
        %2294 = vmatpush1.msra.mxu0 0.0
        %2295 = vmatprep.subr.mxu0 0.0
        %2296 = vmatpush1.msra.mxu0 0.0
        %2297 = vmatprep.subr.mxu0 0.0
        %2298 = vmatpush1.msra.mxu0 0.0
        %2299 = vmatprep.subr.mxu0 0.0
        %2300 = vmatpush1.msra.mxu0 0.0
        %2301 = vmatprep.subr.mxu0 0.0
        %2302 = vmatpush1.msra.mxu0 0.0
        %2303 = vmatprep.subr.mxu0 0.0
        %2304 = vmatpush1.msra.mxu0 0.0
        %2305 = vmatprep.mubr.f32.mxu0 0.0
        %2306 = vmatmul.mubr.f32.gmra.mrb[0].mxu0 %v2192
        %v2307 = vpop.f32.mrb[0].mxu0
        %v2308 = vadd.f32 0.0, %v2307
        %v2309 = vpop.f32.mrb[0].mxu0
        %2310 = vdwg.mxu0
        %2312 = vrot.lane.b32.xlu0 %v2308, 16
        %v2313 = vpop.permute.xlu0 %2312
        %vm2315 = vcmask 162944
        %2316 = vst.msk [vmem:[#allocation2] sm:$0xff] %vm2315, %v2313
        %2317 = vrot.lane.b32.xlu0 %v658, 108
        %v2318 = vpop.permute.xlu0 %2317
        %2319 = vrot.lane.b32.xlu0 %v778, 108
        %v2320 = vpop.permute.xlu0 %2319
        %2321 = vrot.lane.b32.xlu0 %v783, 108
        %v2322 = vpop.permute.xlu0 %2321
        %2323 = vrot.lane.b32.xlu0 %v788, 108
        %v2324 = vpop.permute.xlu0 %2323
        %2325 = vrot.lane.b32.xlu0 %v793, 108
        %v2326 = vpop.permute.xlu0 %2325
        %2327 = vrot.lane.b32.xlu0 %v798, 108
        %v2328 = vpop.permute.xlu0 %2327
        %2329 = vrot.lane.b32.xlu0 %v803, 108
        %v2330 = vpop.permute.xlu0 %2329
        %2331 = vrot.lane.b32.xlu0 %v808, 108
        %v2332 = vpop.permute.xlu0 %2331
        %2333 = vrot.lane.b32.xlu0 %v813, 108
        %v2334 = vpop.permute.xlu0 %2333
        %2335 = vrot.lane.b32.xlu0 %v818, 108
        %v2336 = vpop.permute.xlu0 %2335
        %2337 = vrot.lane.b32.xlu0 %v823, 108
        %v2338 = vpop.permute.xlu0 %2337
        %2339 = vrot.lane.b32.xlu0 %v828, 108
        %v2340 = vpop.permute.xlu0 %2339
        %2341 = vrot.lane.b32.xlu0 %v833, 108
        %v2342 = vpop.permute.xlu0 %2341
        %2343 = vrot.lane.b32.xlu0 %v838, 108
        %v2344 = vpop.permute.xlu0 %2343
        %2345 = vrot.lane.b32.xlu0 %v843, 108
        %v2346 = vpop.permute.xlu0 %2345
        %2347 = vrot.lane.b32.xlu0 %v848, 108
        %v2348 = vpop.permute.xlu0 %2347
        %2349 = vrot.lane.b32.xlu0 %v853, 108
        %v2350 = vpop.permute.xlu0 %2349
        %v2351 = vsel %vm1005, %v2318, 0
        %v2353 = vsel %vm1005, %v2320, 0
        %v2355 = vsel %vm1005, %v2322, 0
        %v2357 = vsel %vm1005, %v2324, 0
        %v2359 = vsel %vm1005, %v2326, 0
        %v2361 = vsel %vm1005, %v2328, 0
        %v2363 = vsel %vm1005, %v2330, 0
        %v2365 = vsel %vm1005, %v2332, 0
        %v2367 = vsel %vm1005, %v2334, 0
        %v2369 = vsel %vm1005, %v2336, 0
        %v2371 = vsel %vm1005, %v2338, 0
        %v2373 = vsel %vm1005, %v2340, 0
        %v2375 = vsel %vm1005, %v2342, 0
        %v2377 = vsel %vm1005, %v2344, 0
        %v2379 = vsel %vm1005, %v2346, 0
        %v2381 = vsel %vm1005, %v2348, 0
        %v2383 = vsel %vm1005, %v2350, 0
        %2385 = vmatprep.subr.mxu0 0.0
        %2386 = vmatpush1.xpose.msra.mxu0 %v2353
        %2387 = vmatprep.subr.mxu0 0.0
        %2388 = vmatpush1.xpose.msra.mxu0 %v2355
        %2389 = vmatprep.subr.mxu0 0.0
        %2390 = vmatpush1.xpose.msra.mxu0 %v2357
        %2391 = vmatprep.subr.mxu0 0.0
        %2392 = vmatpush1.xpose.msra.mxu0 %v2359
        %2393 = vmatprep.subr.mxu0 0.0
        %2394 = vmatpush1.xpose.msra.mxu0 %v2361
        %2395 = vmatprep.subr.mxu0 0.0
        %2396 = vmatpush1.xpose.msra.mxu0 %v2363
        %2397 = vmatprep.subr.mxu0 0.0
        %2398 = vmatpush1.xpose.msra.mxu0 %v2365
        %2399 = vmatprep.subr.mxu0 0.0
        %2400 = vmatpush1.xpose.msra.mxu0 %v2367
        %2401 = vmatprep.subr.mxu0 0.0
        %2402 = vmatpush1.xpose.msra.mxu0 %v2369
        %2403 = vmatprep.subr.mxu0 0.0
        %2404 = vmatpush1.xpose.msra.mxu0 %v2371
        %2405 = vmatprep.subr.mxu0 0.0
        %2406 = vmatpush1.xpose.msra.mxu0 %v2373
        %2407 = vmatprep.subr.mxu0 0.0
        %2408 = vmatpush1.xpose.msra.mxu0 %v2375
        %2409 = vmatprep.subr.mxu0 0.0
        %2410 = vmatpush1.xpose.msra.mxu0 %v2377
        %2411 = vmatprep.subr.mxu0 0.0
        %2412 = vmatpush1.xpose.msra.mxu0 %v2379
        %2413 = vmatprep.subr.mxu0 0.0
        %2414 = vmatpush1.xpose.msra.mxu0 %v2381
        %2415 = vmatprep.subr.mxu0 0.0
        %2416 = vmatpush1.xpose.msra.mxu0 %v2383
        %2417 = vmatprep.subr.mxu0 0.0
        %2418 = vmatpush1.xpose.msra.mxu0 0.0
        %2419 = vmatprep.subr.mxu0 0.0
        %2420 = vmatpush1.xpose.msra.mxu0 0.0
        %2421 = vmatprep.subr.mxu0 0.0
        %2422 = vmatpush1.xpose.msra.mxu0 0.0
        %2423 = vmatprep.subr.mxu0 0.0
        %2424 = vmatpush1.xpose.msra.mxu0 0.0
        %2425 = vmatprep.subr.mxu0 0.0
        %2426 = vmatpush1.xpose.msra.mxu0 0.0
        %2427 = vmatprep.subr.mxu0 0.0
        %2428 = vmatpush1.xpose.msra.mxu0 0.0
        %2429 = vmatprep.subr.mxu0 0.0
        %2430 = vmatpush1.xpose.msra.mxu0 0.0
        %2431 = vmatprep.subr.mxu0 0.0
        %2432 = vmatpush1.xpose.msra.mxu0 0.0
        %2433 = vmatprep.subr.mxu0 0.0
        %2434 = vmatpush1.xpose.msra.mxu0 0.0
        %2435 = vmatprep.subr.mxu0 0.0
        %2436 = vmatpush1.xpose.msra.mxu0 0.0
        %2437 = vmatprep.subr.mxu0 0.0
        %2438 = vmatpush1.xpose.msra.mxu0 0.0
        %2439 = vmatprep.subr.mxu0 0.0
        %2440 = vmatpush1.xpose.msra.mxu0 0.0
        %2441 = vmatprep.subr.mxu0 0.0
        %2442 = vmatpush1.xpose.msra.mxu0 0.0
        %2443 = vmatprep.subr.mxu0 0.0
        %2444 = vmatpush1.xpose.msra.mxu0 0.0
        %2445 = vmatprep.subr.mxu0 0.0
        %2446 = vmatpush1.xpose.msra.mxu0 0.0
        %2447 = vmatprep.subr.mxu0 0.0
        %2448 = vmatpush1.xpose.msra.mxu0 0.0
        %2449 = vmatprep.mubr.f32.mxu0 0.0
        %2450 = vmatmul.mubr.f32.gmra.mrb[0].mxu0 %v2351
        %v2451 = vpop.f32.mrb[0].mxu0
        %v2452 = vadd.f32 0.0, %v2451
        %v2453 = vpop.f32.mrb[0].mxu0
        %2454 = vdwg.mxu0
        %v2455 = vmul.f32 %v2452, 0.5
        %v2456 = vadd.f32 %v2455, %v381
        %2457 = vmax.xlane.f32.xlu0 %v2456
        %v2458 = vpop.xlane.xlu0 %2457
        %v2459 = vsub.f32 %v2456, %v2458
        %v2460 = vmul.f32 %v2459, 1.442695
        %v2461 = vpow.pop %v2460
        %2462 = vadd.xlane.f32.xlu0 %v2461
        %v2463 = vpop.xlane.xlu0 %2462
        %v2464 = vrcp.pop %v2463
        %v2465 = vmul.f32 %v2461, %v2464
        %2466 = vrot.lane.b32.xlu0 %v927, 108
        %v2467 = vpop.permute.xlu0 %2466
        %2468 = vrot.lane.b32.xlu0 %v932, 108
        %v2469 = vpop.permute.xlu0 %2468
        %2470 = vrot.lane.b32.xlu0 %v937, 108
        %v2471 = vpop.permute.xlu0 %2470
        %2472 = vrot.lane.b32.xlu0 %v942, 108
        %v2473 = vpop.permute.xlu0 %2472
        %2474 = vrot.lane.b32.xlu0 %v947, 108
        %v2475 = vpop.permute.xlu0 %2474
        %2476 = vrot.lane.b32.xlu0 %v952, 108
        %v2477 = vpop.permute.xlu0 %2476
        %2478 = vrot.lane.b32.xlu0 %v957, 108
        %v2479 = vpop.permute.xlu0 %2478
        %2480 = vrot.lane.b32.xlu0 %v962, 108
        %v2481 = vpop.permute.xlu0 %2480
        %2482 = vrot.lane.b32.xlu0 %v967, 108
        %v2483 = vpop.permute.xlu0 %2482
        %2484 = vrot.lane.b32.xlu0 %v972, 108
        %v2485 = vpop.permute.xlu0 %2484
        %2486 = vrot.lane.b32.xlu0 %v977, 108
        %v2487 = vpop.permute.xlu0 %2486
        %2488 = vrot.lane.b32.xlu0 %v982, 108
        %v2489 = vpop.permute.xlu0 %2488
        %2490 = vrot.lane.b32.xlu0 %v987, 108
        %v2491 = vpop.permute.xlu0 %2490
        %2492 = vrot.lane.b32.xlu0 %v992, 108
        %v2493 = vpop.permute.xlu0 %2492
        %2494 = vrot.lane.b32.xlu0 %v997, 108
        %v2495 = vpop.permute.xlu0 %2494
        %2496 = vrot.lane.b32.xlu0 %v1002, 108
        %v2497 = vpop.permute.xlu0 %2496
        %2514 = vmatprep.subr.mxu0 0.0
        %2515 = vmatpush1.msra.mxu0 %v2467
        %2516 = vmatprep.subr.mxu0 0.0
        %2517 = vmatpush1.msra.mxu0 %v2469
        %2518 = vmatprep.subr.mxu0 0.0
        %2519 = vmatpush1.msra.mxu0 %v2471
        %2520 = vmatprep.subr.mxu0 0.0
        %2521 = vmatpush1.msra.mxu0 %v2473
        %2522 = vmatprep.subr.mxu0 0.0
        %2523 = vmatpush1.msra.mxu0 %v2475
        %2524 = vmatprep.subr.mxu0 0.0
        %2525 = vmatpush1.msra.mxu0 %v2477
        %2526 = vmatprep.subr.mxu0 0.0
        %2527 = vmatpush1.msra.mxu0 %v2479
        %2528 = vmatprep.subr.mxu0 0.0
        %2529 = vmatpush1.msra.mxu0 %v2481
        %2530 = vmatprep.subr.mxu0 0.0
        %2531 = vmatpush1.msra.mxu0 %v2483
        %2532 = vmatprep.subr.mxu0 0.0
        %2533 = vmatpush1.msra.mxu0 %v2485
        %2534 = vmatprep.subr.mxu0 0.0
        %2535 = vmatpush1.msra.mxu0 %v2487
        %2536 = vmatprep.subr.mxu0 0.0
        %2537 = vmatpush1.msra.mxu0 %v2489
        %2538 = vmatprep.subr.mxu0 0.0
        %2539 = vmatpush1.msra.mxu0 %v2491
        %2540 = vmatprep.subr.mxu0 0.0
        %2541 = vmatpush1.msra.mxu0 %v2493
        %2542 = vmatprep.subr.mxu0 0.0
        %2543 = vmatpush1.msra.mxu0 %v2495
        %2544 = vmatprep.subr.mxu0 0.0
        %2545 = vmatpush1.msra.mxu0 %v2497
        %2546 = vmatprep.subr.mxu0 0.0
        %2547 = vmatpush1.msra.mxu0 0.0
        %2548 = vmatprep.subr.mxu0 0.0
        %2549 = vmatpush1.msra.mxu0 0.0
        %2550 = vmatprep.subr.mxu0 0.0
        %2551 = vmatpush1.msra.mxu0 0.0
        %2552 = vmatprep.subr.mxu0 0.0
        %2553 = vmatpush1.msra.mxu0 0.0
        %2554 = vmatprep.subr.mxu0 0.0
        %2555 = vmatpush1.msra.mxu0 0.0
        %2556 = vmatprep.subr.mxu0 0.0
        %2557 = vmatpush1.msra.mxu0 0.0
        %2558 = vmatprep.subr.mxu0 0.0
        %2559 = vmatpush1.msra.mxu0 0.0
        %2560 = vmatprep.subr.mxu0 0.0
        %2561 = vmatpush1.msra.mxu0 0.0
        %2562 = vmatprep.subr.mxu0 0.0
        %2563 = vmatpush1.msra.mxu0 0.0
        %2564 = vmatprep.subr.mxu0 0.0
        %2565 = vmatpush1.msra.mxu0 0.0
        %2566 = vmatprep.subr.mxu0 0.0
        %2567 = vmatpush1.msra.mxu0 0.0
        %2568 = vmatprep.subr.mxu0 0.0
        %2569 = vmatpush1.msra.mxu0 0.0
        %2570 = vmatprep.subr.mxu0 0.0
        %2571 = vmatpush1.msra.mxu0 0.0
        %2572 = vmatprep.subr.mxu0 0.0
        %2573 = vmatpush1.msra.mxu0 0.0
        %2574 = vmatprep.subr.mxu0 0.0
        %2575 = vmatpush1.msra.mxu0 0.0
        %2576 = vmatprep.subr.mxu0 0.0
        %2577 = vmatpush1.msra.mxu0 0.0
        %2578 = vmatprep.mubr.f32.mxu0 0.0
        %2579 = vmatmul.mubr.f32.gmra.mrb[0].mxu0 %v2465
        %v2580 = vpop.f32.mrb[0].mxu0
        %v2581 = vadd.f32 0.0, %v2580
        %v2582 = vpop.f32.mrb[0].mxu0
        %2583 = vdwg.mxu0
        %2585 = vrot.lane.b32.xlu0 %v2581, 20
        %v2586 = vpop.permute.xlu0 %2585
        %vm2588 = vcmask 195744
        %2589 = vst.msk [vmem:[#allocation2] sm:$0xff] %vm2588, %v2586
        %2590 = vrot.lane.b32.xlu0 %v658, 104
        %v2591 = vpop.permute.xlu0 %2590
        %2592 = vrot.lane.b32.xlu0 %v778, 104
        %v2593 = vpop.permute.xlu0 %2592
        %2594 = vrot.lane.b32.xlu0 %v783, 104
        %v2595 = vpop.permute.xlu0 %2594
        %2596 = vrot.lane.b32.xlu0 %v788, 104
        %v2597 = vpop.permute.xlu0 %2596
        %2598 = vrot.lane.b32.xlu0 %v793, 104
        %v2599 = vpop.permute.xlu0 %2598
        %2600 = vrot.lane.b32.xlu0 %v798, 104
        %v2601 = vpop.permute.xlu0 %2600
        %2602 = vrot.lane.b32.xlu0 %v803, 104
        %v2603 = vpop.permute.xlu0 %2602
        %2604 = vrot.lane.b32.xlu0 %v808, 104
        %v2605 = vpop.permute.xlu0 %2604
        %2606 = vrot.lane.b32.xlu0 %v813, 104
        %v2607 = vpop.permute.xlu0 %2606
        %2608 = vrot.lane.b32.xlu0 %v818, 104
        %v2609 = vpop.permute.xlu0 %2608
        %2610 = vrot.lane.b32.xlu0 %v823, 104
        %v2611 = vpop.permute.xlu0 %2610
        %2612 = vrot.lane.b32.xlu0 %v828, 104
        %v2613 = vpop.permute.xlu0 %2612
        %2614 = vrot.lane.b32.xlu0 %v833, 104
        %v2615 = vpop.permute.xlu0 %2614
        %2616 = vrot.lane.b32.xlu0 %v838, 104
        %v2617 = vpop.permute.xlu0 %2616
        %2618 = vrot.lane.b32.xlu0 %v843, 104
        %v2619 = vpop.permute.xlu0 %2618
        %2620 = vrot.lane.b32.xlu0 %v848, 104
        %v2621 = vpop.permute.xlu0 %2620
        %2622 = vrot.lane.b32.xlu0 %v853, 104
        %v2623 = vpop.permute.xlu0 %2622
        %v2624 = vsel %vm1005, %v2591, 0
        %v2626 = vsel %vm1005, %v2593, 0
        %v2628 = vsel %vm1005, %v2595, 0
        %v2630 = vsel %vm1005, %v2597, 0
        %v2632 = vsel %vm1005, %v2599, 0
        %v2634 = vsel %vm1005, %v2601, 0
        %v2636 = vsel %vm1005, %v2603, 0
        %v2638 = vsel %vm1005, %v2605, 0
        %v2640 = vsel %vm1005, %v2607, 0
        %v2642 = vsel %vm1005, %v2609, 0
        %v2644 = vsel %vm1005, %v2611, 0
        %v2646 = vsel %vm1005, %v2613, 0
        %v2648 = vsel %vm1005, %v2615, 0
        %v2650 = vsel %vm1005, %v2617, 0
        %v2652 = vsel %vm1005, %v2619, 0
        %v2654 = vsel %vm1005, %v2621, 0
        %v2656 = vsel %vm1005, %v2623, 0
        %2658 = vmatprep.subr.mxu0 0.0
        %2659 = vmatpush1.xpose.msra.mxu0 %v2626
        %2660 = vmatprep.subr.mxu0 0.0
        %2661 = vmatpush1.xpose.msra.mxu0 %v2628
        %2662 = vmatprep.subr.mxu0 0.0
        %2663 = vmatpush1.xpose.msra.mxu0 %v2630
        %2664 = vmatprep.subr.mxu0 0.0
        %2665 = vmatpush1.xpose.msra.mxu0 %v2632
        %2666 = vmatprep.subr.mxu0 0.0
        %2667 = vmatpush1.xpose.msra.mxu0 %v2634
        %2668 = vmatprep.subr.mxu0 0.0
        %2669 = vmatpush1.xpose.msra.mxu0 %v2636
        %2670 = vmatprep.subr.mxu0 0.0
        %2671 = vmatpush1.xpose.msra.mxu0 %v2638
        %2672 = vmatprep.subr.mxu0 0.0
        %2673 = vmatpush1.xpose.msra.mxu0 %v2640
        %2674 = vmatprep.subr.mxu0 0.0
        %2675 = vmatpush1.xpose.msra.mxu0 %v2642
        %2676 = vmatprep.subr.mxu0 0.0
        %2677 = vmatpush1.xpose.msra.mxu0 %v2644
        %2678 = vmatprep.subr.mxu0 0.0
        %2679 = vmatpush1.xpose.msra.mxu0 %v2646
        %2680 = vmatprep.subr.mxu0 0.0
        %2681 = vmatpush1.xpose.msra.mxu0 %v2648
        %2682 = vmatprep.subr.mxu0 0.0
        %2683 = vmatpush1.xpose.msra.mxu0 %v2650
        %2684 = vmatprep.subr.mxu0 0.0
        %2685 = vmatpush1.xpose.msra.mxu0 %v2652
        %2686 = vmatprep.subr.mxu0 0.0
        %2687 = vmatpush1.xpose.msra.mxu0 %v2654
        %2688 = vmatprep.subr.mxu0 0.0
        %2689 = vmatpush1.xpose.msra.mxu0 %v2656
        %2690 = vmatprep.subr.mxu0 0.0
        %2691 = vmatpush1.xpose.msra.mxu0 0.0
        %2692 = vmatprep.subr.mxu0 0.0
        %2693 = vmatpush1.xpose.msra.mxu0 0.0
        %2694 = vmatprep.subr.mxu0 0.0
        %2695 = vmatpush1.xpose.msra.mxu0 0.0
        %2696 = vmatprep.subr.mxu0 0.0
        %2697 = vmatpush1.xpose.msra.mxu0 0.0
        %2698 = vmatprep.subr.mxu0 0.0
        %2699 = vmatpush1.xpose.msra.mxu0 0.0
        %2700 = vmatprep.subr.mxu0 0.0
        %2701 = vmatpush1.xpose.msra.mxu0 0.0
        %2702 = vmatprep.subr.mxu0 0.0
        %2703 = vmatpush1.xpose.msra.mxu0 0.0
        %2704 = vmatprep.subr.mxu0 0.0
        %2705 = vmatpush1.xpose.msra.mxu0 0.0
        %2706 = vmatprep.subr.mxu0 0.0
        %2707 = vmatpush1.xpose.msra.mxu0 0.0
        %2708 = vmatprep.subr.mxu0 0.0
        %2709 = vmatpush1.xpose.msra.mxu0 0.0
        %2710 = vmatprep.subr.mxu0 0.0
        %2711 = vmatpush1.xpose.msra.mxu0 0.0
        %2712 = vmatprep.subr.mxu0 0.0
        %2713 = vmatpush1.xpose.msra.mxu0 0.0
        %2714 = vmatprep.subr.mxu0 0.0
        %2715 = vmatpush1.xpose.msra.mxu0 0.0
        %2716 = vmatprep.subr.mxu0 0.0
        %2717 = vmatpush1.xpose.msra.mxu0 0.0
        %2718 = vmatprep.subr.mxu0 0.0
        %2719 = vmatpush1.xpose.msra.mxu0 0.0
        %2720 = vmatprep.subr.mxu0 0.0
        %2721 = vmatpush1.xpose.msra.mxu0 0.0
        %2722 = vmatprep.mubr.f32.mxu0 0.0
        %2723 = vmatmul.mubr.f32.gmra.mrb[0].mxu0 %v2624
        %v2724 = vpop.f32.mrb[0].mxu0
        %v2725 = vadd.f32 0.0, %v2724
        %v2726 = vpop.f32.mrb[0].mxu0
        %2727 = vdwg.mxu0
        %v2728 = vmul.f32 %v2725, 0.5
        %v2729 = vadd.f32 %v2728, %v381
        %2730 = vmax.xlane.f32.xlu0 %v2729
        %v2731 = vpop.xlane.xlu0 %2730
        %v2732 = vsub.f32 %v2729, %v2731
        %v2733 = vmul.f32 %v2732, 1.442695
        %v2734 = vpow.pop %v2733
        %2735 = vadd.xlane.f32.xlu0 %v2734
        %v2736 = vpop.xlane.xlu0 %2735
        %v2737 = vrcp.pop %v2736
        %v2738 = vmul.f32 %v2734, %v2737
        %2739 = vrot.lane.b32.xlu0 %v927, 104
        %v2740 = vpop.permute.xlu0 %2739
        %2741 = vrot.lane.b32.xlu0 %v932, 104
        %v2742 = vpop.permute.xlu0 %2741
        %2743 = vrot.lane.b32.xlu0 %v937, 104
        %v2744 = vpop.permute.xlu0 %2743
        %2745 = vrot.lane.b32.xlu0 %v942, 104
        %v2746 = vpop.permute.xlu0 %2745
        %2747 = vrot.lane.b32.xlu0 %v947, 104
        %v2748 = vpop.permute.xlu0 %2747
        %2749 = vrot.lane.b32.xlu0 %v952, 104
        %v2750 = vpop.permute.xlu0 %2749
        %2751 = vrot.lane.b32.xlu0 %v957, 104
        %v2752 = vpop.permute.xlu0 %2751
        %2753 = vrot.lane.b32.xlu0 %v962, 104
        %v2754 = vpop.permute.xlu0 %2753
        %2755 = vrot.lane.b32.xlu0 %v967, 104
        %v2756 = vpop.permute.xlu0 %2755
        %2757 = vrot.lane.b32.xlu0 %v972, 104
        %v2758 = vpop.permute.xlu0 %2757
        %2759 = vrot.lane.b32.xlu0 %v977, 104
        %v2760 = vpop.permute.xlu0 %2759
        %2761 = vrot.lane.b32.xlu0 %v982, 104
        %v2762 = vpop.permute.xlu0 %2761
        %2763 = vrot.lane.b32.xlu0 %v987, 104
        %v2764 = vpop.permute.xlu0 %2763
        %2765 = vrot.lane.b32.xlu0 %v992, 104
        %v2766 = vpop.permute.xlu0 %2765
        %2767 = vrot.lane.b32.xlu0 %v997, 104
        %v2768 = vpop.permute.xlu0 %2767
        %2769 = vrot.lane.b32.xlu0 %v1002, 104
        %v2770 = vpop.permute.xlu0 %2769
        %2787 = vmatprep.subr.mxu0 0.0
        %2788 = vmatpush1.msra.mxu0 %v2740
        %2789 = vmatprep.subr.mxu0 0.0
        %2790 = vmatpush1.msra.mxu0 %v2742
        %2791 = vmatprep.subr.mxu0 0.0
        %2792 = vmatpush1.msra.mxu0 %v2744
        %2793 = vmatprep.subr.mxu0 0.0
        %2794 = vmatpush1.msra.mxu0 %v2746
        %2795 = vmatprep.subr.mxu0 0.0
        %2796 = vmatpush1.msra.mxu0 %v2748
        %2797 = vmatprep.subr.mxu0 0.0
        %2798 = vmatpush1.msra.mxu0 %v2750
        %2799 = vmatprep.subr.mxu0 0.0
        %2800 = vmatpush1.msra.mxu0 %v2752
        %2801 = vmatprep.subr.mxu0 0.0
        %2802 = vmatpush1.msra.mxu0 %v2754
        %2803 = vmatprep.subr.mxu0 0.0
        %2804 = vmatpush1.msra.mxu0 %v2756
        %2805 = vmatprep.subr.mxu0 0.0
        %2806 = vmatpush1.msra.mxu0 %v2758
        %2807 = vmatprep.subr.mxu0 0.0
        %2808 = vmatpush1.msra.mxu0 %v2760
        %2809 = vmatprep.subr.mxu0 0.0
        %2810 = vmatpush1.msra.mxu0 %v2762
        %2811 = vmatprep.subr.mxu0 0.0
        %2812 = vmatpush1.msra.mxu0 %v2764
        %2813 = vmatprep.subr.mxu0 0.0
        %2814 = vmatpush1.msra.mxu0 %v2766
        %2815 = vmatprep.subr.mxu0 0.0
        %2816 = vmatpush1.msra.mxu0 %v2768
        %2817 = vmatprep.subr.mxu0 0.0
        %2818 = vmatpush1.msra.mxu0 %v2770
        %2819 = vmatprep.subr.mxu0 0.0
        %2820 = vmatpush1.msra.mxu0 0.0
        %2821 = vmatprep.subr.mxu0 0.0
        %2822 = vmatpush1.msra.mxu0 0.0
        %2823 = vmatprep.subr.mxu0 0.0
        %2824 = vmatpush1.msra.mxu0 0.0
        %2825 = vmatprep.subr.mxu0 0.0
        %2826 = vmatpush1.msra.mxu0 0.0
        %2827 = vmatprep.subr.mxu0 0.0
        %2828 = vmatpush1.msra.mxu0 0.0
        %2829 = vmatprep.subr.mxu0 0.0
        %2830 = vmatpush1.msra.mxu0 0.0
        %2831 = vmatprep.subr.mxu0 0.0
        %2832 = vmatpush1.msra.mxu0 0.0
        %2833 = vmatprep.subr.mxu0 0.0
        %2834 = vmatpush1.msra.mxu0 0.0
        %2835 = vmatprep.subr.mxu0 0.0
        %2836 = vmatpush1.msra.mxu0 0.0
        %2837 = vmatprep.subr.mxu0 0.0
        %2838 = vmatpush1.msra.mxu0 0.0
        %2839 = vmatprep.subr.mxu0 0.0
        %2840 = vmatpush1.msra.mxu0 0.0
        %2841 = vmatprep.subr.mxu0 0.0
        %2842 = vmatpush1.msra.mxu0 0.0
        %2843 = vmatprep.subr.mxu0 0.0
        %2844 = vmatpush1.msra.mxu0 0.0
        %2845 = vmatprep.subr.mxu0 0.0
        %2846 = vmatpush1.msra.mxu0 0.0
        %2847 = vmatprep.subr.mxu0 0.0
        %2848 = vmatpush1.msra.mxu0 0.0
        %2849 = vmatprep.subr.mxu0 0.0
        %2850 = vmatpush1.msra.mxu0 0.0
        %2851 = vmatprep.mubr.f32.mxu0 0.0
        %2852 = vmatmul.mubr.f32.gmra.mrb[0].mxu0 %v2738
        %v2853 = vpop.f32.mrb[0].mxu0
        %v2854 = vadd.f32 0.0, %v2853
        %v2855 = vpop.f32.mrb[0].mxu0
        %2856 = vdwg.mxu0
        %2858 = vrot.lane.b32.xlu0 %v2854, 24
        %v2859 = vpop.permute.xlu0 %2858
        %vm2861 = vcmask 228544
        %2862 = vst.msk [vmem:[#allocation2] sm:$0xff] %vm2861, %v2859
        %2863 = vrot.lane.b32.xlu0 %v658, 100
        %v2864 = vpop.permute.xlu0 %2863
        %2865 = vrot.lane.b32.xlu0 %v778, 100
        %v2866 = vpop.permute.xlu0 %2865
        %2867 = vrot.lane.b32.xlu0 %v783, 100
        %v2868 = vpop.permute.xlu0 %2867
        %2869 = vrot.lane.b32.xlu0 %v788, 100
        %v2870 = vpop.permute.xlu0 %2869
        %2871 = vrot.lane.b32.xlu0 %v793, 100
        %v2872 = vpop.permute.xlu0 %2871
        %2873 = vrot.lane.b32.xlu0 %v798, 100
        %v2874 = vpop.permute.xlu0 %2873
        %2875 = vrot.lane.b32.xlu0 %v803, 100
        %v2876 = vpop.permute.xlu0 %2875
        %2877 = vrot.lane.b32.xlu0 %v808, 100
        %v2878 = vpop.permute.xlu0 %2877
        %2879 = vrot.lane.b32.xlu0 %v813, 100
        %v2880 = vpop.permute.xlu0 %2879
        %2881 = vrot.lane.b32.xlu0 %v818, 100
        %v2882 = vpop.permute.xlu0 %2881
        %2883 = vrot.lane.b32.xlu0 %v823, 100
        %v2884 = vpop.permute.xlu0 %2883
        %2885 = vrot.lane.b32.xlu0 %v828, 100
        %v2886 = vpop.permute.xlu0 %2885
        %2887 = vrot.lane.b32.xlu0 %v833, 100
        %v2888 = vpop.permute.xlu0 %2887
        %2889 = vrot.lane.b32.xlu0 %v838, 100
        %v2890 = vpop.permute.xlu0 %2889
        %2891 = vrot.lane.b32.xlu0 %v843, 100
        %v2892 = vpop.permute.xlu0 %2891
        %2893 = vrot.lane.b32.xlu0 %v848, 100
        %v2894 = vpop.permute.xlu0 %2893
        %2895 = vrot.lane.b32.xlu0 %v853, 100
        %v2896 = vpop.permute.xlu0 %2895
        %v2897 = vsel %vm1005, %v2864, 0
        %v2899 = vsel %vm1005, %v2866, 0
        %v2901 = vsel %vm1005, %v2868, 0
        %v2903 = vsel %vm1005, %v2870, 0
        %v2905 = vsel %vm1005, %v2872, 0
        %v2907 = vsel %vm1005, %v2874, 0
        %v2909 = vsel %vm1005, %v2876, 0
        %v2911 = vsel %vm1005, %v2878, 0
        %v2913 = vsel %vm1005, %v2880, 0
        %v2915 = vsel %vm1005, %v2882, 0
        %v2917 = vsel %vm1005, %v2884, 0
        %v2919 = vsel %vm1005, %v2886, 0
        %v2921 = vsel %vm1005, %v2888, 0
        %v2923 = vsel %vm1005, %v2890, 0
        %v2925 = vsel %vm1005, %v2892, 0
        %v2927 = vsel %vm1005, %v2894, 0
        %v2929 = vsel %vm1005, %v2896, 0
        %2931 = vmatprep.subr.mxu0 0.0
        %2932 = vmatpush1.xpose.msra.mxu0 %v2899
        %2933 = vmatprep.subr.mxu0 0.0
        %2934 = vmatpush1.xpose.msra.mxu0 %v2901
        %2935 = vmatprep.subr.mxu0 0.0
        %2936 = vmatpush1.xpose.msra.mxu0 %v2903
        %2937 = vmatprep.subr.mxu0 0.0
        %2938 = vmatpush1.xpose.msra.mxu0 %v2905
        %2939 = vmatprep.subr.mxu0 0.0
        %2940 = vmatpush1.xpose.msra.mxu0 %v2907
        %2941 = vmatprep.subr.mxu0 0.0
        %2942 = vmatpush1.xpose.msra.mxu0 %v2909
        %2943 = vmatprep.subr.mxu0 0.0
        %2944 = vmatpush1.xpose.msra.mxu0 %v2911
        %2945 = vmatprep.subr.mxu0 0.0
        %2946 = vmatpush1.xpose.msra.mxu0 %v2913
        %2947 = vmatprep.subr.mxu0 0.0
        %2948 = vmatpush1.xpose.msra.mxu0 %v2915
        %2949 = vmatprep.subr.mxu0 0.0
        %2950 = vmatpush1.xpose.msra.mxu0 %v2917
        %2951 = vmatprep.subr.mxu0 0.0
        %2952 = vmatpush1.xpose.msra.mxu0 %v2919
        %2953 = vmatprep.subr.mxu0 0.0
        %2954 = vmatpush1.xpose.msra.mxu0 %v2921
        %2955 = vmatprep.subr.mxu0 0.0
        %2956 = vmatpush1.xpose.msra.mxu0 %v2923
        %2957 = vmatprep.subr.mxu0 0.0
        %2958 = vmatpush1.xpose.msra.mxu0 %v2925
        %2959 = vmatprep.subr.mxu0 0.0
        %2960 = vmatpush1.xpose.msra.mxu0 %v2927
        %2961 = vmatprep.subr.mxu0 0.0
        %2962 = vmatpush1.xpose.msra.mxu0 %v2929
        %2963 = vmatprep.subr.mxu0 0.0
        %2964 = vmatpush1.xpose.msra.mxu0 0.0
        %2965 = vmatprep.subr.mxu0 0.0
        %2966 = vmatpush1.xpose.msra.mxu0 0.0
        %2967 = vmatprep.subr.mxu0 0.0
        %2968 = vmatpush1.xpose.msra.mxu0 0.0
        %2969 = vmatprep.subr.mxu0 0.0
        %2970 = vmatpush1.xpose.msra.mxu0 0.0
        %2971 = vmatprep.subr.mxu0 0.0
        %2972 = vmatpush1.xpose.msra.mxu0 0.0
        %2973 = vmatprep.subr.mxu0 0.0
        %2974 = vmatpush1.xpose.msra.mxu0 0.0
        %2975 = vmatprep.subr.mxu0 0.0
        %2976 = vmatpush1.xpose.msra.mxu0 0.0
        %2977 = vmatprep.subr.mxu0 0.0
        %2978 = vmatpush1.xpose.msra.mxu0 0.0
        %2979 = vmatprep.subr.mxu0 0.0
        %2980 = vmatpush1.xpose.msra.mxu0 0.0
        %2981 = vmatprep.subr.mxu0 0.0
        %2982 = vmatpush1.xpose.msra.mxu0 0.0
        %2983 = vmatprep.subr.mxu0 0.0
        %2984 = vmatpush1.xpose.msra.mxu0 0.0
        %2985 = vmatprep.subr.mxu0 0.0
        %2986 = vmatpush1.xpose.msra.mxu0 0.0
        %2987 = vmatprep.subr.mxu0 0.0
        %2988 = vmatpush1.xpose.msra.mxu0 0.0
        %2989 = vmatprep.subr.mxu0 0.0
        %2990 = vmatpush1.xpose.msra.mxu0 0.0
        %2991 = vmatprep.subr.mxu0 0.0
        %2992 = vmatpush1.xpose.msra.mxu0 0.0
        %2993 = vmatprep.subr.mxu0 0.0
        %2994 = vmatpush1.xpose.msra.mxu0 0.0
        %2995 = vmatprep.mubr.f32.mxu0 0.0
        %2996 = vmatmul.mubr.f32.gmra.mrb[0].mxu0 %v2897
        %v2997 = vpop.f32.mrb[0].mxu0
        %v2998 = vadd.f32 0.0, %v2997
        %v2999 = vpop.f32.mrb[0].mxu0
        %3000 = vdwg.mxu0
        %v3001 = vmul.f32 %v2998, 0.5
        %v3002 = vadd.f32 %v3001, %v381
        %3003 = vmax.xlane.f32.xlu0 %v3002
        %v3004 = vpop.xlane.xlu0 %3003
        %v3005 = vsub.f32 %v3002, %v3004
        %v3006 = vmul.f32 %v3005, 1.442695
        %v3007 = vpow.pop %v3006
        %3008 = vadd.xlane.f32.xlu0 %v3007
        %v3009 = vpop.xlane.xlu0 %3008
        %v3010 = vrcp.pop %v3009
        %v3011 = vmul.f32 %v3007, %v3010
        %3012 = vrot.lane.b32.xlu0 %v927, 100
        %v3013 = vpop.permute.xlu0 %3012
        %3014 = vrot.lane.b32.xlu0 %v932, 100
        %v3015 = vpop.permute.xlu0 %3014
        %3016 = vrot.lane.b32.xlu0 %v937, 100
        %v3017 = vpop.permute.xlu0 %3016
        %3018 = vrot.lane.b32.xlu0 %v942, 100
        %v3019 = vpop.permute.xlu0 %3018
        %3020 = vrot.lane.b32.xlu0 %v947, 100
        %v3021 = vpop.permute.xlu0 %3020
        %3022 = vrot.lane.b32.xlu0 %v952, 100
        %v3023 = vpop.permute.xlu0 %3022
        %3024 = vrot.lane.b32.xlu0 %v957, 100
        %v3025 = vpop.permute.xlu0 %3024
        %3026 = vrot.lane.b32.xlu0 %v962, 100
        %v3027 = vpop.permute.xlu0 %3026
        %3028 = vrot.lane.b32.xlu0 %v967, 100
        %v3029 = vpop.permute.xlu0 %3028
        %3030 = vrot.lane.b32.xlu0 %v972, 100
        %v3031 = vpop.permute.xlu0 %3030
        %3032 = vrot.lane.b32.xlu0 %v977, 100
        %v3033 = vpop.permute.xlu0 %3032
        %3034 = vrot.lane.b32.xlu0 %v982, 100
        %v3035 = vpop.permute.xlu0 %3034
        %3036 = vrot.lane.b32.xlu0 %v987, 100
        %v3037 = vpop.permute.xlu0 %3036
        %3038 = vrot.lane.b32.xlu0 %v992, 100
        %v3039 = vpop.permute.xlu0 %3038
        %3040 = vrot.lane.b32.xlu0 %v997, 100
        %v3041 = vpop.permute.xlu0 %3040
        %3042 = vrot.lane.b32.xlu0 %v1002, 100
        %v3043 = vpop.permute.xlu0 %3042
        %3060 = vmatprep.subr.mxu0 0.0
        %3061 = vmatpush1.msra.mxu0 %v3013
        %3062 = vmatprep.subr.mxu0 0.0
        %3063 = vmatpush1.msra.mxu0 %v3015
        %3064 = vmatprep.subr.mxu0 0.0
        %3065 = vmatpush1.msra.mxu0 %v3017
        %3066 = vmatprep.subr.mxu0 0.0
        %3067 = vmatpush1.msra.mxu0 %v3019
        %3068 = vmatprep.subr.mxu0 0.0
        %3069 = vmatpush1.msra.mxu0 %v3021
        %3070 = vmatprep.subr.mxu0 0.0
        %3071 = vmatpush1.msra.mxu0 %v3023
        %3072 = vmatprep.subr.mxu0 0.0
        %3073 = vmatpush1.msra.mxu0 %v3025
        %3074 = vmatprep.subr.mxu0 0.0
        %3075 = vmatpush1.msra.mxu0 %v3027
        %3076 = vmatprep.subr.mxu0 0.0
        %3077 = vmatpush1.msra.mxu0 %v3029
        %3078 = vmatprep.subr.mxu0 0.0
        %3079 = vmatpush1.msra.mxu0 %v3031
        %3080 = vmatprep.subr.mxu0 0.0
        %3081 = vmatpush1.msra.mxu0 %v3033
        %3082 = vmatprep.subr.mxu0 0.0
        %3083 = vmatpush1.msra.mxu0 %v3035
        %3084 = vmatprep.subr.mxu0 0.0
        %3085 = vmatpush1.msra.mxu0 %v3037
        %3086 = vmatprep.subr.mxu0 0.0
        %3087 = vmatpush1.msra.mxu0 %v3039
        %3088 = vmatprep.subr.mxu0 0.0
        %3089 = vmatpush1.msra.mxu0 %v3041
        %3090 = vmatprep.subr.mxu0 0.0
        %3091 = vmatpush1.msra.mxu0 %v3043
        %3092 = vmatprep.subr.mxu0 0.0
        %3093 = vmatpush1.msra.mxu0 0.0
        %3094 = vmatprep.subr.mxu0 0.0
        %3095 = vmatpush1.msra.mxu0 0.0
        %3096 = vmatprep.subr.mxu0 0.0
        %3097 = vmatpush1.msra.mxu0 0.0
        %3098 = vmatprep.subr.mxu0 0.0
        %3099 = vmatpush1.msra.mxu0 0.0
        %3100 = vmatprep.subr.mxu0 0.0
        %3101 = vmatpush1.msra.mxu0 0.0
        %3102 = vmatprep.subr.mxu0 0.0
        %3103 = vmatpush1.msra.mxu0 0.0
        %3104 = vmatprep.subr.mxu0 0.0
        %3105 = vmatpush1.msra.mxu0 0.0
        %3106 = vmatprep.subr.mxu0 0.0
        %3107 = vmatpush1.msra.mxu0 0.0
        %3108 = vmatprep.subr.mxu0 0.0
        %3109 = vmatpush1.msra.mxu0 0.0
        %3110 = vmatprep.subr.mxu0 0.0
        %3111 = vmatpush1.msra.mxu0 0.0
        %3112 = vmatprep.subr.mxu0 0.0
        %3113 = vmatpush1.msra.mxu0 0.0
        %3114 = vmatprep.subr.mxu0 0.0
        %3115 = vmatpush1.msra.mxu0 0.0
        %3116 = vmatprep.subr.mxu0 0.0
        %3117 = vmatpush1.msra.mxu0 0.0
        %3118 = vmatprep.subr.mxu0 0.0
        %3119 = vmatpush1.msra.mxu0 0.0
        %3120 = vmatprep.subr.mxu0 0.0
        %3121 = vmatpush1.msra.mxu0 0.0
        %3122 = vmatprep.subr.mxu0 0.0
        %3123 = vmatpush1.msra.mxu0 0.0
        %3124 = vmatprep.mubr.f32.mxu0 0.0
        %3125 = vmatmul.mubr.f32.gmra.mrb[0].mxu0 %v3011
        %v3126 = vpop.f32.mrb[0].mxu0
        %v3127 = vadd.f32 0.0, %v3126
        %v3128 = vpop.f32.mrb[0].mxu0
        %3129 = vdwg.mxu0
        %3131 = vrot.lane.b32.xlu0 %v3127, 28
        %v3132 = vpop.permute.xlu0 %3131
        %vm3134 = vcmask 261344
        %3135 = vst.msk [vmem:[#allocation2] sm:$0xff] %vm3134, %v3132
        %v3136 = vld [vmem:[#allocation2] sm:$0xff]
        %v3137 = vld [vmem:[%s7] sm:$0xff]
        %v3138 = vld [vmem:[%s7 + $0x8] sm:$0xff]
        %v3139 = vld [vmem:[%s7 + $0x10] sm:$0xff]
        %v3140 = vld [vmem:[%s7 + $0x18] sm:$0xff]
        %v3141 = vld [vmem:[%s8] sm:$0x1]
        %v3143 = vlaneseq
        %v3144 = vshrl.u32 %v3143, 7
        %v3145 = vsub.s32 0, %v3144
        %v3146 = vrot.slane %v3141, %v3145
        %v3149 = vsel %vm382, %v3136, 0
        %3151 = vmatprep.subr.mxu0 0.0
        %3152 = vmatpush1.msra.mxu0 %v3137
        %3153 = vmatprep.subr.mxu0 0.0
        %3154 = vmatpush1.msra.mxu0 %v3138
        %3155 = vmatprep.subr.mxu0 0.0
        %3156 = vmatpush1.msra.mxu0 %v3139
        %3157 = vmatprep.subr.mxu0 0.0
        %3158 = vmatpush1.msra.mxu0 %v3140
        %3159 = vmatprep.subr.mxu0 0.0
        %3160 = vmatpush1.msra.mxu0 0.0
        %3161 = vmatprep.subr.mxu0 0.0
        %3162 = vmatpush1.msra.mxu0 0.0
        %3163 = vmatprep.subr.mxu0 0.0
        %3164 = vmatpush1.msra.mxu0 0.0
        %3165 = vmatprep.subr.mxu0 0.0
        %3166 = vmatpush1.msra.mxu0 0.0
        %3167 = vmatprep.subr.mxu0 0.0
        %3168 = vmatpush1.msra.mxu0 0.0
        %3169 = vmatprep.subr.mxu0 0.0
        %3170 = vmatpush1.msra.mxu0 0.0
        %3171 = vmatprep.subr.mxu0 0.0
        %3172 = vmatpush1.msra.mxu0 0.0
        %3173 = vmatprep.subr.mxu0 0.0
        %3174 = vmatpush1.msra.mxu0 0.0
        %3175 = vmatprep.subr.mxu0 0.0
        %3176 = vmatpush1.msra.mxu0 0.0
        %3177 = vmatprep.subr.mxu0 0.0
        %3178 = vmatpush1.msra.mxu0 0.0
        %3179 = vmatprep.subr.mxu0 0.0
        %3180 = vmatpush1.msra.mxu0 0.0
        %3181 = vmatprep.subr.mxu0 0.0
        %3182 = vmatpush1.msra.mxu0 0.0
        %3183 = vmatprep.subr.mxu0 0.0
        %3184 = vmatpush1.msra.mxu0 0.0
        %3185 = vmatprep.subr.mxu0 0.0
        %3186 = vmatpush1.msra.mxu0 0.0
        %3187 = vmatprep.subr.mxu0 0.0
        %3188 = vmatpush1.msra.mxu0 0.0
        %3189 = vmatprep.subr.mxu0 0.0
        %3190 = vmatpush1.msra.mxu0 0.0
        %3191 = vmatprep.subr.mxu0 0.0
        %3192 = vmatpush1.msra.mxu0 0.0
        %3193 = vmatprep.subr.mxu0 0.0
        %3194 = vmatpush1.msra.mxu0 0.0
        %3195 = vmatprep.subr.mxu0 0.0
        %3196 = vmatpush1.msra.mxu0 0.0
        %3197 = vmatprep.subr.mxu0 0.0
        %3198 = vmatpush1.msra.mxu0 0.0
        %3199 = vmatprep.subr.mxu0 0.0
        %3200 = vmatpush1.msra.mxu0 0.0
        %3201 = vmatprep.subr.mxu0 0.0
        %3202 = vmatpush1.msra.mxu0 0.0
        %3203 = vmatprep.subr.mxu0 0.0
        %3204 = vmatpush1.msra.mxu0 0.0
        %3205 = vmatprep.subr.mxu0 0.0
        %3206 = vmatpush1.msra.mxu0 0.0
        %3207 = vmatprep.subr.mxu0 0.0
        %3208 = vmatpush1.msra.mxu0 0.0
        %3209 = vmatprep.subr.mxu0 0.0
        %3210 = vmatpush1.msra.mxu0 0.0
        %3211 = vmatprep.subr.mxu0 0.0
        %3212 = vmatpush1.msra.mxu0 0.0
        %3213 = vmatprep.subr.mxu0 0.0
        %3214 = vmatpush1.msra.mxu0 0.0
        %3215 = vmatprep.mubr.f32.mxu0 0.0
        %3216 = vmatmul.mubr.f32.gmra.mrb[0].mxu0 %v3149
        %v3217 = vpop.f32.mrb[0].mxu0
        %v3218 = vadd.f32 %v3146, %v3217
        %v3219 = vpop.f32.mrb[0].mxu0
        %3220 = vdwg.mxu0
        %v3222 = vsel %vm382, %v3218, 0
        %3224 = vmatprep.subr.mxu0 0.0
        %3225 = vmatpush1.xpose.msra.mxu0 %v664
        %3226 = vmatprep.subr.mxu0 0.0
        %3227 = vmatpush1.xpose.msra.mxu0 %v667
        %3228 = vmatprep.subr.mxu0 0.0
        %3229 = vmatpush1.xpose.msra.mxu0 %v670
        %3230 = vmatprep.subr.mxu0 0.0
        %3231 = vmatpush1.xpose.msra.mxu0 %v673
        %3232 = vmatprep.subr.mxu0 0.0
        %3233 = vmatpush1.xpose.msra.mxu0 %v676
        %3234 = vmatprep.subr.mxu0 0.0
        %3235 = vmatpush1.xpose.msra.mxu0 %v679
        %3236 = vmatprep.subr.mxu0 0.0
        %3237 = vmatpush1.xpose.msra.mxu0 %v682
        %3238 = vmatprep.subr.mxu0 0.0
        %3239 = vmatpush1.xpose.msra.mxu0 %v685
        %3240 = vmatprep.subr.mxu0 0.0
        %3241 = vmatpush1.xpose.msra.mxu0 %v688
        %3242 = vmatprep.subr.mxu0 0.0
        %3243 = vmatpush1.xpose.msra.mxu0 %v691
        %3244 = vmatprep.subr.mxu0 0.0
        %3245 = vmatpush1.xpose.msra.mxu0 %v694
        %3246 = vmatprep.subr.mxu0 0.0
        %3247 = vmatpush1.xpose.msra.mxu0 %v697
        %3248 = vmatprep.subr.mxu0 0.0
        %3249 = vmatpush1.xpose.msra.mxu0 %v700
        %3250 = vmatprep.subr.mxu0 0.0
        %3251 = vmatpush1.xpose.msra.mxu0 %v703
        %3252 = vmatprep.subr.mxu0 0.0
        %3253 = vmatpush1.xpose.msra.mxu0 %v706
        %3254 = vmatprep.subr.mxu0 0.0
        %3255 = vmatpush1.xpose.msra.mxu0 %v709
        %3256 = vmatprep.subr.mxu0 0.0
        %3257 = vmatpush1.xpose.msra.mxu0 0.0
        %3258 = vmatprep.subr.mxu0 0.0
        %3259 = vmatpush1.xpose.msra.mxu0 0.0
        %3260 = vmatprep.subr.mxu0 0.0
        %3261 = vmatpush1.xpose.msra.mxu0 0.0
        %3262 = vmatprep.subr.mxu0 0.0
        %3263 = vmatpush1.xpose.msra.mxu0 0.0
        %3264 = vmatprep.subr.mxu0 0.0
        %3265 = vmatpush1.xpose.msra.mxu0 0.0
        %3266 = vmatprep.subr.mxu0 0.0
        %3267 = vmatpush1.xpose.msra.mxu0 0.0
        %3268 = vmatprep.subr.mxu0 0.0
        %3269 = vmatpush1.xpose.msra.mxu0 0.0
        %3270 = vmatprep.subr.mxu0 0.0
        %3271 = vmatpush1.xpose.msra.mxu0 0.0
        %3272 = vmatprep.subr.mxu0 0.0
        %3273 = vmatpush1.xpose.msra.mxu0 0.0
        %3274 = vmatprep.subr.mxu0 0.0
        %3275 = vmatpush1.xpose.msra.mxu0 0.0
        %3276 = vmatprep.subr.mxu0 0.0
        %3277 = vmatpush1.xpose.msra.mxu0 0.0
        %3278 = vmatprep.subr.mxu0 0.0
        %3279 = vmatpush1.xpose.msra.mxu0 0.0
        %3280 = vmatprep.subr.mxu0 0.0
        %3281 = vmatpush1.xpose.msra.mxu0 0.0
        %3282 = vmatprep.subr.mxu0 0.0
        %3283 = vmatpush1.xpose.msra.mxu0 0.0
        %3284 = vmatprep.subr.mxu0 0.0
        %3285 = vmatpush1.xpose.msra.mxu0 0.0
        %3286 = vmatprep.subr.mxu0 0.0
        %3287 = vmatpush1.xpose.msra.mxu0 0.0
        %3288 = vmatprep.mubr.f32.mxu0 0.0
        %3289 = vmatmul.mubr.f32.gmra.mrb[0].mxu0 %v3222
        %v3290 = vpop.f32.mrb[0].mxu0
        %v3291 = vadd.f32 0.0, %v3290
        %v3292 = vpop.f32.mrb[0].mxu0
        %3293 = vdwg.mxu0
        %v3294 = vmul.f32 %v3291, 0.17677669
        %v3295 = vtanh.pop %v3294
        %v3296 = vmul.f32 %v3295, 10.0
        %v3297 = vadd.f32 %v3296, %v381
        %3298 = vmax.xlane.f32.xlu0 %v3297
        %v3299 = vpop.xlane.xlu0 %3298
        %v3300 = vsub.f32 %v3297, %v3299
        %v3301 = vmul.f32 %v3300, 1.442695
        %v3302 = vpow.pop %v3301
        %3303 = vadd.xlane.f32.xlu0 %v3302
        %v3304 = vpop.xlane.xlu0 %3303
        %v3305 = vrcp.pop %v3304
        %v3306 = vmul.f32 %v3302, %v3305
        %3307 = vst [vmem:[%s351] sm:$0xff] %v3306
        %s3308 = sand.u32 %s235, 1
        %s3309 = scalar_lea.sflag [#allocation4], %s3308
        %s3310 = sand.u32 %s235, 1
        %s3311 = smul.addr %s3310, 8
        %s3312 = scalar_lea.vmem [#allocation3], %s3311
        // Predicated region
        $region57: #{tpu_custom_call.1} parent=55 // pred_check
          %p3313 = pneg %p245
        $region58: #{tpu_custom_call.1} parent=55 // pred_check_branch
          %3315 = sbr.rel (%p3313) target = $region60
        $region59: #{tpu_custom_call.1} parent=55 // pred_region
          %s3317 = ssub.s32 128, 128
          %3318 = vsyncadd %s3309, %s3317
          %s3319 = smul.addr %s23, 128
          %s3320 = scalar_lea.hbm %s9, %s3319
          %s3322 = sshll.u32 %s3312, 4
          %s3323 = int_to_ptr.vmem [resolvable:$true] %s3322
          %3325 = dma.vmem_to_hbm [thread:$0]  %s3323, 128, %s3320, %s3309
        $region60: #{tpu_custom_call.1} parent=55 // pred_fallthru
          _
      $region56: #{tpu_custom_call.1} parent=5 // pred_fallthru
        _
      %p3326 = scmp.le.s32.totalorder 2, %s18
      // Predicated region
      $region61: #{tpu_custom_call.1} parent=5 // pred_check
        %p3327 = pneg %p3326
      $region62: #{tpu_custom_call.1} parent=5 // pred_check_branch
        %3329 = sbr.rel (%p3327) target = $region64
      $region63: #{tpu_custom_call.1} parent=5 // pred_region
        %s3330 = ssub.s32 %s18, 2
        // Predicated region
        $region65: #{tpu_custom_call.1} parent=63 // pred_check
          %p3331 = pneg %p251
        $region66: #{tpu_custom_call.1} parent=63 // pred_check_branch
          %3333 = sbr.rel (%p3331) target = $region68
        $region67: #{tpu_custom_call.1} parent=63 // pred_region
          %s3334 = sand.u32 %s236, 1
          %s3335 = scalar_lea.sflag [#allocation4], %s3334
          %s3336 = sand.u32 %s236, 1
          %s3337 = smul.addr %s3336, 8
          %s3338 = scalar_lea.vmem [#allocation3], %s3337
          %3339 = dma.done %s3335, 128
        $region68: #{tpu_custom_call.1} parent=63 // pred_fallthru
          _
      $region64: #{tpu_custom_call.1} parent=5 // pred_fallthru
        _
    $region6: #{tpu_custom_call.1} parent=1 // loop_footer
      %s22 = sadd.s32 1, %s18
    $region7: #{tpu_custom_call.1} parent=1 // loop_footer_branch
      %17 = sbr.rel target = $region3
    $region8: #{tpu_custom_call.1} parent=1 // loop_exit
      _
    %3340 = vsyncpa [#allocation4], 1
    %s3341 = scalar_lea.sflag [#allocation4], 1
    %3342 = vsyncpa %s3341, 1

</llo_original>
